<compile_context>
chip_gen: v5e
topology: v5e:2x2
jax: 0.10.0
libtpu: 0.0.40
codegen_flags: <defaults>
</compile_context>

<pallas_src>
import jax
import jax.numpy as jnp
from jax.experimental import pallas as pl
from jax.experimental.pallas import tpu as pltpu

LATENT_DIM = 32            # small stand-in for args.latent_dim
BATCH = 8
DIMS = (LATENT_DIM, 128, 256, 512, 1024, 784)
W5_PAD = 896               # 784 padded up to a multiple of 128 lanes
SLAB_W = 1024              # lane width of the packed small-parameter slab
BN_EPS = 1e-5
LRELU_SLOPE = 0.2


# --------------------------------------------------------------------------
# shared math helpers (used both inside the kernel and in the JAX reference)
# --------------------------------------------------------------------------
def _leaky_relu(x):
    return jnp.where(x > 0, x, LRELU_SLOPE * x)


def _bn_leaky_relu(x, gamma, beta):
    # training-mode BatchNorm1d folded into one scale/shift, then LeakyReLU.
    mean = jnp.mean(x, axis=0, keepdims=True)
    d = x - mean
    var = jnp.mean(d * d, axis=0, keepdims=True)          # biased variance
    s = gamma * jax.lax.rsqrt(var + BN_EPS)
    t = beta - mean * s
    y = x * s + t
    return jnp.where(y > 0, y, LRELU_SLOPE * y)


def _dot_bf16(a_f32, w_bf16):
    # bf16 x bf16 matmul on the MXU, accumulated in f32.
    return jnp.dot(a_f32.astype(jnp.bfloat16), w_bf16,
                   preferred_element_type=jnp.float32)


# --------------------------------------------------------------------------
# kernel
# --------------------------------------------------------------------------
def generator_kernel(z_ref, w1_ref, w2_ref, w3_ref, w4_hbm, w5_hbm, p_ref,
                     out_ref, w4_vmem, w5_vmem, dma_sem):
    # Prefetch the two large weight matrices so their HBM->VMEM DMA overlaps
    # with the layer 1-3 compute.
    cp4 = pltpu.make_async_copy(w4_hbm, w4_vmem, dma_sem.at[0])
    cp5 = pltpu.make_async_copy(w5_hbm, w5_vmem, dma_sem.at[1])
    cp4.start()
    cp5.start()

    # Unpack the small-parameter slab (one DMA for all biases / BN params).
    b1 = p_ref[0:1, 0:DIMS[1]]
    b5 = p_ref[1:2, 0:W5_PAD]
    g2, be2 = p_ref[2:3, 0:DIMS[2]], p_ref[3:4, 0:DIMS[2]]
    g3, be3 = p_ref[4:5, 0:DIMS[3]], p_ref[5:6, 0:DIMS[3]]
    g4, be4 = p_ref[6:7, :], p_ref[7:8, :]

    x = z_ref[...]

    # Layer 1: Linear + bias -> LeakyReLU
    h = _leaky_relu(_dot_bf16(x, w1_ref[...]) + b1)

    # Layers 2-3: Linear (bias cancelled by BN mean-subtraction) -> BN -> LReLU
    h = _bn_leaky_relu(_dot_bf16(h, w2_ref[...]), g2, be2)
    h = _bn_leaky_relu(_dot_bf16(h, w3_ref[...]), g3, be3)

    # Layer 4: needs the prefetched w4
    cp4.wait()
    h = _bn_leaky_relu(_dot_bf16(h, w4_vmem[...]), g4, be4)

    # Layer 5: needs the prefetched (lane-padded) w5; Tanh output
    cp5.wait()
    y = _dot_bf16(h, w5_vmem[...]) + b5
    out_ref[...] = jnp.tanh(y)


# --------------------------------------------------------------------------
# wrapper
# --------------------------------------------------------------------------
@jax.jit
def generator_forward(z, weights_bf16, param_slab):
    w1, w2, w3, w4, w5 = weights_bf16
    b = z.shape[0]

    in_specs = [
        pl.BlockSpec(z.shape, lambda i: (0, 0)),
        pl.BlockSpec(w1.shape, lambda i: (0, 0)),
        pl.BlockSpec(w2.shape, lambda i: (0, 0)),
        pl.BlockSpec(w3.shape, lambda i: (0, 0)),
        pl.BlockSpec(memory_space=pl.ANY),      # w4: manual prefetch from HBM
        pl.BlockSpec(memory_space=pl.ANY),      # w5: manual prefetch from HBM
        pl.BlockSpec(param_slab.shape, lambda i: (0, 0)),
    ]
    out_spec = pl.BlockSpec((b, W5_PAD), lambda i: (0, 0))
    out_shape = jax.ShapeDtypeStruct((b, W5_PAD), jnp.float32)

    y = pl.pallas_call(
        generator_kernel,
        out_shape=out_shape,
        grid=(1,),
        in_specs=in_specs,
        out_specs=out_spec,
        scratch_shapes=[
            pltpu.VMEM((DIMS[3], DIMS[4]), jnp.bfloat16),   # w4 buffer
            pltpu.VMEM((DIMS[4], W5_PAD), jnp.bfloat16),    # w5 buffer (padded)
            pltpu.SemaphoreType.DMA((2,)),
        ],
        compiler_params=pltpu.CompilerParams(
            dimension_semantics=("arbitrary",),
            vmem_limit_bytes=24 << 20,          # tight but ample (<4 MiB used)
        ),
    )(z, w1, w2, w3, w4, w5, param_slab)

    # drop the lane padding (layout plumbing only)
    return y[:, :DIMS[-1]]


# --------------------------------------------------------------------------
# parameter construction / packing
# --------------------------------------------------------------------------
def init_params(key):
    """Synthetic params matching nn.Linear / nn.BatchNorm1d default init."""
    keys = jax.random.split(key, 16)
    kit = iter(keys)
    weights, bn = [], []
    b1 = b5 = None
    for li, (fi, fo) in enumerate(zip(DIMS[:-1], DIMS[1:])):
        scale = 1.0 / float(fi) ** 0.5
        weights.append(jax.random.uniform(next(kit), (fi, fo), jnp.float32,
                                          -scale, scale))
        if li == 0:
            b1 = jax.random.uniform(next(kit), (1, fo), jnp.float32, -scale, scale)
        elif li == 4:
            b5 = jax.random.uniform(next(kit), (1, fo), jnp.float32, -scale, scale)
        # Linear biases of layers 2-4 are exactly cancelled by training-mode BN
        # mean subtraction, so they are not materialized at all.
        if li in (1, 2, 3):
            bn.append((jnp.ones((1, fo), jnp.float32),    # gamma
                       jnp.zeros((1, fo), jnp.float32)))  # beta
    return weights, b1, b5, bn


def pack_params(weights, b1, b5, bn):
    """bf16 weights (w5 lane-padded) + one f32 slab for all tiny params."""
    w1, w2, w3, w4, w5 = weights
    w5p = jnp.pad(w5, ((0, 0), (0, W5_PAD - DIMS[-1])))
    b5p = jnp.pad(b5, ((0, 0), (0, W5_PAD - DIMS[-1])))
    weights_bf16 = tuple(w.astype(jnp.bfloat16) for w in (w1, w2, w3, w4, w5p))

    (g2, be2), (g3, be3), (g4, be4) = bn
    slab = jnp.zeros((8, SLAB_W), jnp.float32)
    slab = slab.at[0, :DIMS[1]].set(b1[0])
    slab = slab.at[1, :W5_PAD].set(b5p[0])
    slab = slab.at[2, :DIMS[2]].set(g2[0])
    slab = slab.at[3, :DIMS[2]].set(be2[0])
    slab = slab.at[4, :DIMS[3]].set(g3[0])
    slab = slab.at[5, :DIMS[3]].set(be3[0])
    slab = slab.at[6, :DIMS[4]].set(g4[0])
    slab = slab.at[7, :DIMS[4]].set(be4[0])
    return weights_bf16, slab


# --------------------------------------------------------------------------
# plain-JAX reference (mirrors the kernel's precision choices)
# --------------------------------------------------------------------------
def reference_forward(z, weights_bf16, slab):
    w1, w2, w3, w4, w5 = weights_bf16
    b1 = slab[0:1, :DIMS[1]]
    b5 = slab[1:2, :W5_PAD]
    g2, be2 = slab[2:3, :DIMS[2]], slab[3:4, :DIMS[2]]
    g3, be3 = slab[4:5, :DIMS[3]], slab[5:6, :DIMS[3]]
    g4, be4 = slab[6:7, :], slab[7:8, :]

    h = _leaky_relu(_dot_bf16(z, w1) + b1)
    h = _bn_leaky_relu(_dot_bf16(h, w2), g2, be2)
    h = _bn_leaky_relu(_dot_bf16(h, w3), g3, be3)
    h = _bn_leaky_relu(_dot_bf16(h, w4), g4, be4)
    y = jnp.tanh(_dot_bf16(h, w5) + b5)
    return y[:, :DIMS[-1]]


if __name__ == "__main__":
    key = jax.random.PRNGKey(0)
    kz, kp = jax.random.split(key)
    z = jax.random.normal(kz, (BATCH, LATENT_DIM), dtype=jnp.float32)

    weights, b1, b5, bn = init_params(kp)
    weights_bf16, slab = pack_params(weights, b1, b5, bn)

    out = generator_forward(z, weights_bf16, slab)
    out = jax.block_until_ready(out)

    ref = reference_forward(z, weights_bf16, slab)
    assert out.shape == (BATCH, DIMS[-1]), out.shape
    max_err = float(jnp.max(jnp.abs(out - ref)))
    assert max_err < 5e-3, max_err
    print("KERNEL_OK")
</pallas_src>

<mosaic_0001>
module attributes {stable_mosaic.version = 11 : i64} {
  func.func @generator_kernel(%arg0: i32, %arg1: memref<8x32xf32, #tpu.memory_space<vmem>>, %arg2: memref<32x128xbf16, #tpu.memory_space<vmem>>, %arg3: memref<128x256xbf16, #tpu.memory_space<vmem>>, %arg4: memref<256x512xbf16, #tpu.memory_space<vmem>>, %arg5: memref<512x1024xbf16, #tpu.memory_space<any>>, %arg6: memref<1024x896xbf16, #tpu.memory_space<any>>, %arg7: memref<8x1024xf32, #tpu.memory_space<vmem>>, %arg8: memref<8x896xf32, #tpu.memory_space<vmem>>, %arg9: memref<512x1024xbf16, #tpu.memory_space<vmem>>, %arg10: memref<1024x896xbf16, #tpu.memory_space<vmem>>, %arg11: memref<2x!tpu.dma_semaphore, #tpu.memory_space<semaphore_mem>>) attributes {dimension_semantics = [#tpu.dimension_semantics<arbitrary>], iteration_bounds = array<i64: 1>, scalar_prefetch = 0 : i64, scratch_operands = 3 : i64, tpu.core_type = #tpu.core_type<tc>, window_params = [{pipeline_mode = #tpu.pipeline_mode<synchronous>, transform_indices = @transform_0, window_bounds = array<i64: 8, 32>}, {pipeline_mode = #tpu.pipeline_mode<synchronous>, transform_indices = @transform_1, window_bounds = array<i64: 32, 128>}, {pipeline_mode = #tpu.pipeline_mode<synchronous>, transform_indices = @transform_2, window_bounds = array<i64: 128, 256>}, {pipeline_mode = #tpu.pipeline_mode<synchronous>, transform_indices = @transform_3, window_bounds = array<i64: 256, 512>}, {}, {}, {pipeline_mode = #tpu.pipeline_mode<synchronous>, transform_indices = @transform_6, window_bounds = array<i64: 8, 1024>}, {pipeline_mode = #tpu.pipeline_mode<synchronous>, transform_indices = @transform_7, window_bounds = array<i64: 8, 896>}]} {
    %c0_i32 = arith.constant 0 : i32
    %0 = tpu.memref_slice %arg11[%c0_i32] : memref<2x!tpu.dma_semaphore, #tpu.memory_space<semaphore_mem>> -> memref<1x!tpu.dma_semaphore, #tpu.memory_space<semaphore_mem>>
    %1 = tpu.memref_squeeze %0 : memref<1x!tpu.dma_semaphore, #tpu.memory_space<semaphore_mem>> -> memref<!tpu.dma_semaphore, #tpu.memory_space<semaphore_mem>>
    tpu.enqueue_dma source(%arg5 : memref<512x1024xbf16, #tpu.memory_space<any>>) target(%arg9 : memref<512x1024xbf16, #tpu.memory_space<vmem>>) target_semaphore(%1 : memref<!tpu.dma_semaphore, #tpu.memory_space<semaphore_mem>>)
    %c1_i32 = arith.constant 1 : i32
    %2 = tpu.memref_slice %arg11[%c1_i32] : memref<2x!tpu.dma_semaphore, #tpu.memory_space<semaphore_mem>> -> memref<1x!tpu.dma_semaphore, #tpu.memory_space<semaphore_mem>>
    %3 = tpu.memref_squeeze %2 : memref<1x!tpu.dma_semaphore, #tpu.memory_space<semaphore_mem>> -> memref<!tpu.dma_semaphore, #tpu.memory_space<semaphore_mem>>
    tpu.enqueue_dma source(%arg6 : memref<1024x896xbf16, #tpu.memory_space<any>>) target(%arg10 : memref<1024x896xbf16, #tpu.memory_space<vmem>>) target_semaphore(%3 : memref<!tpu.dma_semaphore, #tpu.memory_space<semaphore_mem>>)
    %c0 = arith.constant 0 : index
    %c0_0 = arith.constant 0 : index
    %4 = vector.load %arg7[%c0, %c0_0] : memref<8x1024xf32, #tpu.memory_space<vmem>>, vector<1x128xf32>
    %c1 = arith.constant 1 : index
    %c0_1 = arith.constant 0 : index
    %5 = vector.load %arg7[%c1, %c0_1] : memref<8x1024xf32, #tpu.memory_space<vmem>>, vector<1x896xf32>
    %c2 = arith.constant 2 : index
    %c0_2 = arith.constant 0 : index
    %6 = vector.load %arg7[%c2, %c0_2] : memref<8x1024xf32, #tpu.memory_space<vmem>>, vector<1x256xf32>
    %c3 = arith.constant 3 : index
    %c0_3 = arith.constant 0 : index
    %7 = vector.load %arg7[%c3, %c0_3] : memref<8x1024xf32, #tpu.memory_space<vmem>>, vector<1x256xf32>
    %c4 = arith.constant 4 : index
    %c0_4 = arith.constant 0 : index
    %8 = vector.load %arg7[%c4, %c0_4] : memref<8x1024xf32, #tpu.memory_space<vmem>>, vector<1x512xf32>
    %c5 = arith.constant 5 : index
    %c0_5 = arith.constant 0 : index
    %9 = vector.load %arg7[%c5, %c0_5] : memref<8x1024xf32, #tpu.memory_space<vmem>>, vector<1x512xf32>
    %c6 = arith.constant 6 : index
    %c0_6 = arith.constant 0 : index
    %10 = vector.load %arg7[%c6, %c0_6] : memref<8x1024xf32, #tpu.memory_space<vmem>>, vector<1x1024xf32>
    %c7 = arith.constant 7 : index
    %c0_7 = arith.constant 0 : index
    %11 = vector.load %arg7[%c7, %c0_7] : memref<8x1024xf32, #tpu.memory_space<vmem>>, vector<1x1024xf32>
    %c0_8 = arith.constant 0 : index
    %c0_9 = arith.constant 0 : index
    %12 = vector.load %arg1[%c0_8, %c0_9] : memref<8x32xf32, #tpu.memory_space<vmem>>, vector<8x32xf32>
    %c0_10 = arith.constant 0 : index
    %c0_11 = arith.constant 0 : index
    %13 = vector.load %arg2[%c0_10, %c0_11] : memref<32x128xbf16, #tpu.memory_space<vmem>>, vector<32x128xbf16>
    %14 = arith.truncf %12 : vector<8x32xf32> to vector<8x32xbf16>
    %cst = arith.constant dense<0.000000e+00> : vector<8x128xf32>
    %15 = tpu.matmul %14, %13, %cst {dimension_numbers = #tpu.dot_dimension_numbers<[1], [0], [0], [1], [0, 0, 1, 1], [], []>} : vector<8x32xbf16>, vector<32x128xbf16>, vector<8x128xf32> -> vector<8x128xf32>
    %16 = vector.broadcast %4 : vector<1x128xf32> to vector<8x128xf32>
    %17 = arith.addf %15, %16 : vector<8x128xf32>
    %cst_12 = arith.constant 0.000000e+00 : f32
    %18 = vector.broadcast %cst_12 : f32 to vector<8x128xf32>
    %19 = arith.cmpf ogt, %17, %18 : vector<8x128xf32>
    %cst_13 = arith.constant 2.000000e-01 : f32
    %20 = vector.broadcast %cst_13 : f32 to vector<8x128xf32>
    %21 = arith.mulf %20, %17 : vector<8x128xf32>
    %22 = arith.select %19, %17, %21 : vector<8x128xi1>, vector<8x128xf32>
    %c0_14 = arith.constant 0 : index
    %c0_15 = arith.constant 0 : index
    %23 = vector.load %arg3[%c0_14, %c0_15] : memref<128x256xbf16, #tpu.memory_space<vmem>>, vector<128x256xbf16>
    %24 = arith.truncf %22 : vector<8x128xf32> to vector<8x128xbf16>
    %cst_16 = arith.constant dense<0.000000e+00> : vector<8x256xf32>
    %25 = tpu.matmul %24, %23, %cst_16 {dimension_numbers = #tpu.dot_dimension_numbers<[1], [0], [0], [1], [0, 0, 1, 1], [], []>} : vector<8x128xbf16>, vector<128x256xbf16>, vector<8x256xf32> -> vector<8x256xf32>
    %cst_17 = arith.constant dense<0.000000e+00> : vector<256xf32>
    %26 = vector.multi_reduction <add>, %25, %cst_17 [0] : vector<8x256xf32> to vector<256xf32>
    %27 = vector.shape_cast %26 : vector<256xf32> to vector<1x256xf32>
    %cst_18 = arith.constant 8.000000e+00 : f32
    %28 = vector.broadcast %cst_18 : f32 to vector<1x256xf32>
    %29 = arith.divf %27, %28 : vector<1x256xf32>
    %30 = vector.broadcast %29 : vector<1x256xf32> to vector<8x256xf32>
    %31 = arith.subf %25, %30 : vector<8x256xf32>
    %32 = arith.mulf %31, %31 : vector<8x256xf32>
    %cst_19 = arith.constant dense<0.000000e+00> : vector<256xf32>
    %33 = vector.multi_reduction <add>, %32, %cst_19 [0] : vector<8x256xf32> to vector<256xf32>
    %34 = vector.shape_cast %33 : vector<256xf32> to vector<1x256xf32>
    %cst_20 = arith.constant 8.000000e+00 : f32
    %35 = vector.broadcast %cst_20 : f32 to vector<1x256xf32>
    %36 = arith.divf %34, %35 : vector<1x256xf32>
    %cst_21 = arith.constant 9.99999974E-6 : f32
    %37 = vector.broadcast %cst_21 : f32 to vector<1x256xf32>
    %38 = arith.addf %36, %37 : vector<1x256xf32>
    %39 = math.rsqrt %38 : vector<1x256xf32>
    %40 = arith.mulf %6, %39 : vector<1x256xf32>
    %41 = arith.mulf %29, %40 : vector<1x256xf32>
    %42 = arith.subf %7, %41 : vector<1x256xf32>
    %43 = vector.broadcast %40 : vector<1x256xf32> to vector<8x256xf32>
    %44 = arith.mulf %25, %43 : vector<8x256xf32>
    %45 = vector.broadcast %42 : vector<1x256xf32> to vector<8x256xf32>
    %46 = arith.addf %44, %45 : vector<8x256xf32>
    %cst_22 = arith.constant 0.000000e+00 : f32
    %47 = vector.broadcast %cst_22 : f32 to vector<8x256xf32>
    %48 = arith.cmpf ogt, %46, %47 : vector<8x256xf32>
    %cst_23 = arith.constant 2.000000e-01 : f32
    %49 = vector.broadcast %cst_23 : f32 to vector<8x256xf32>
    %50 = arith.mulf %49, %46 : vector<8x256xf32>
    %51 = arith.select %48, %46, %50 : vector<8x256xi1>, vector<8x256xf32>
    %c0_24 = arith.constant 0 : index
    %c0_25 = arith.constant 0 : index
    %52 = vector.load %arg4[%c0_24, %c0_25] : memref<256x512xbf16, #tpu.memory_space<vmem>>, vector<256x512xbf16>
    %53 = arith.truncf %51 : vector<8x256xf32> to vector<8x256xbf16>
    %cst_26 = arith.constant dense<0.000000e+00> : vector<8x512xf32>
    %54 = tpu.matmul %53, %52, %cst_26 {dimension_numbers = #tpu.dot_dimension_numbers<[1], [0], [0], [1], [0, 0, 1, 1], [], []>} : vector<8x256xbf16>, vector<256x512xbf16>, vector<8x512xf32> -> vector<8x512xf32>
    %cst_27 = arith.constant dense<0.000000e+00> : vector<512xf32>
    %55 = vector.multi_reduction <add>, %54, %cst_27 [0] : vector<8x512xf32> to vector<512xf32>
    %56 = vector.shape_cast %55 : vector<512xf32> to vector<1x512xf32>
    %cst_28 = arith.constant 8.000000e+00 : f32
    %57 = vector.broadcast %cst_28 : f32 to vector<1x512xf32>
    %58 = arith.divf %56, %57 : vector<1x512xf32>
    %59 = vector.broadcast %58 : vector<1x512xf32> to vector<8x512xf32>
    %60 = arith.subf %54, %59 : vector<8x512xf32>
    %61 = arith.mulf %60, %60 : vector<8x512xf32>
    %cst_29 = arith.constant dense<0.000000e+00> : vector<512xf32>
    %62 = vector.multi_reduction <add>, %61, %cst_29 [0] : vector<8x512xf32> to vector<512xf32>
    %63 = vector.shape_cast %62 : vector<512xf32> to vector<1x512xf32>
    %cst_30 = arith.constant 8.000000e+00 : f32
    %64 = vector.broadcast %cst_30 : f32 to vector<1x512xf32>
    %65 = arith.divf %63, %64 : vector<1x512xf32>
    %cst_31 = arith.constant 9.99999974E-6 : f32
    %66 = vector.broadcast %cst_31 : f32 to vector<1x512xf32>
    %67 = arith.addf %65, %66 : vector<1x512xf32>
    %68 = math.rsqrt %67 : vector<1x512xf32>
    %69 = arith.mulf %8, %68 : vector<1x512xf32>
    %70 = arith.mulf %58, %69 : vector<1x512xf32>
    %71 = arith.subf %9, %70 : vector<1x512xf32>
    %72 = vector.broadcast %69 : vector<1x512xf32> to vector<8x512xf32>
    %73 = arith.mulf %54, %72 : vector<8x512xf32>
    %74 = vector.broadcast %71 : vector<1x512xf32> to vector<8x512xf32>
    %75 = arith.addf %73, %74 : vector<8x512xf32>
    %cst_32 = arith.constant 0.000000e+00 : f32
    %76 = vector.broadcast %cst_32 : f32 to vector<8x512xf32>
    %77 = arith.cmpf ogt, %75, %76 : vector<8x512xf32>
    %cst_33 = arith.constant 2.000000e-01 : f32
    %78 = vector.broadcast %cst_33 : f32 to vector<8x512xf32>
    %79 = arith.mulf %78, %75 : vector<8x512xf32>
    %80 = arith.select %77, %75, %79 : vector<8x512xi1>, vector<8x512xf32>
    %c0_i32_34 = arith.constant 0 : i32
    %81 = tpu.memref_slice %arg11[%c0_i32_34] : memref<2x!tpu.dma_semaphore, #tpu.memory_space<semaphore_mem>> -> memref<1x!tpu.dma_semaphore, #tpu.memory_space<semaphore_mem>>
    %82 = tpu.memref_squeeze %81 : memref<1x!tpu.dma_semaphore, #tpu.memory_space<semaphore_mem>> -> memref<!tpu.dma_semaphore, #tpu.memory_space<semaphore_mem>>
    tpu.wait_dma2 semaphore(%82 : memref<!tpu.dma_semaphore, #tpu.memory_space<semaphore_mem>>) src(%arg5 : memref<512x1024xbf16, #tpu.memory_space<any>>) dst(%arg9 : memref<512x1024xbf16, #tpu.memory_space<vmem>>)
    %c0_35 = arith.constant 0 : index
    %c0_36 = arith.constant 0 : index
    %83 = vector.load %arg9[%c0_35, %c0_36] : memref<512x1024xbf16, #tpu.memory_space<vmem>>, vector<512x1024xbf16>
    %84 = arith.truncf %80 : vector<8x512xf32> to vector<8x512xbf16>
    %cst_37 = arith.constant dense<0.000000e+00> : vector<8x1024xf32>
    %85 = tpu.matmul %84, %83, %cst_37 {dimension_numbers = #tpu.dot_dimension_numbers<[1], [0], [0], [1], [0, 0, 1, 1], [], []>} : vector<8x512xbf16>, vector<512x1024xbf16>, vector<8x1024xf32> -> vector<8x1024xf32>
    %cst_38 = arith.constant dense<0.000000e+00> : vector<1024xf32>
    %86 = vector.multi_reduction <add>, %85, %cst_38 [0] : vector<8x1024xf32> to vector<1024xf32>
    %87 = vector.shape_cast %86 : vector<1024xf32> to vector<1x1024xf32>
    %cst_39 = arith.constant 8.000000e+00 : f32
    %88 = vector.broadcast %cst_39 : f32 to vector<1x1024xf32>
    %89 = arith.divf %87, %88 : vector<1x1024xf32>
    %90 = vector.broadcast %89 : vector<1x1024xf32> to vector<8x1024xf32>
    %91 = arith.subf %85, %90 : vector<8x1024xf32>
    %92 = arith.mulf %91, %91 : vector<8x1024xf32>
    %cst_40 = arith.constant dense<0.000000e+00> : vector<1024xf32>
    %93 = vector.multi_reduction <add>, %92, %cst_40 [0] : vector<8x1024xf32> to vector<1024xf32>
    %94 = vector.shape_cast %93 : vector<1024xf32> to vector<1x1024xf32>
    %cst_41 = arith.constant 8.000000e+00 : f32
    %95 = vector.broadcast %cst_41 : f32 to vector<1x1024xf32>
    %96 = arith.divf %94, %95 : vector<1x1024xf32>
    %cst_42 = arith.constant 9.99999974E-6 : f32
    %97 = vector.broadcast %cst_42 : f32 to vector<1x1024xf32>
    %98 = arith.addf %96, %97 : vector<1x1024xf32>
    %99 = math.rsqrt %98 : vector<1x1024xf32>
    %100 = arith.mulf %10, %99 : vector<1x1024xf32>
    %101 = arith.mulf %89, %100 : vector<1x1024xf32>
    %102 = arith.subf %11, %101 : vector<1x1024xf32>
    %103 = vector.broadcast %100 : vector<1x1024xf32> to vector<8x1024xf32>
    %104 = arith.mulf %85, %103 : vector<8x1024xf32>
    %105 = vector.broadcast %102 : vector<1x1024xf32> to vector<8x1024xf32>
    %106 = arith.addf %104, %105 : vector<8x1024xf32>
    %cst_43 = arith.constant 0.000000e+00 : f32
    %107 = vector.broadcast %cst_43 : f32 to vector<8x1024xf32>
    %108 = arith.cmpf ogt, %106, %107 : vector<8x1024xf32>
    %cst_44 = arith.constant 2.000000e-01 : f32
    %109 = vector.broadcast %cst_44 : f32 to vector<8x1024xf32>
    %110 = arith.mulf %109, %106 : vector<8x1024xf32>
    %111 = arith.select %108, %106, %110 : vector<8x1024xi1>, vector<8x1024xf32>
    %c1_i32_45 = arith.constant 1 : i32
    %112 = tpu.memref_slice %arg11[%c1_i32_45] : memref<2x!tpu.dma_semaphore, #tpu.memory_space<semaphore_mem>> -> memref<1x!tpu.dma_semaphore, #tpu.memory_space<semaphore_mem>>
    %113 = tpu.memref_squeeze %112 : memref<1x!tpu.dma_semaphore, #tpu.memory_space<semaphore_mem>> -> memref<!tpu.dma_semaphore, #tpu.memory_space<semaphore_mem>>
    tpu.wait_dma2 semaphore(%113 : memref<!tpu.dma_semaphore, #tpu.memory_space<semaphore_mem>>) src(%arg6 : memref<1024x896xbf16, #tpu.memory_space<any>>) dst(%arg10 : memref<1024x896xbf16, #tpu.memory_space<vmem>>)
    %c0_46 = arith.constant 0 : index
    %c0_47 = arith.constant 0 : index
    %114 = vector.load %arg10[%c0_46, %c0_47] : memref<1024x896xbf16, #tpu.memory_space<vmem>>, vector<1024x896xbf16>
    %115 = arith.truncf %111 : vector<8x1024xf32> to vector<8x1024xbf16>
    %cst_48 = arith.constant dense<0.000000e+00> : vector<8x896xf32>
    %116 = tpu.matmul %115, %114, %cst_48 {dimension_numbers = #tpu.dot_dimension_numbers<[1], [0], [0], [1], [0, 0, 1, 1], [], []>} : vector<8x1024xbf16>, vector<1024x896xbf16>, vector<8x896xf32> -> vector<8x896xf32>
    %117 = vector.broadcast %5 : vector<1x896xf32> to vector<8x896xf32>
    %118 = arith.addf %116, %117 : vector<8x896xf32>
    %119 = math.tanh %118 : vector<8x896xf32>
    %c0_49 = arith.constant 0 : index
    %c0_50 = arith.constant 0 : index
    %120 = vector.load %arg8[%c0_49, %c0_50] : memref<8x896xf32, #tpu.memory_space<vmem>>, vector<8x896xf32>
    tpu.vector_store %arg8[%c0_49, %c0_50], %119 {strides = array<i32>} : memref<8x896xf32, #tpu.memory_space<vmem>>, vector<8x896xf32>,
    return
  }
  func.func @transform_0(%arg0: i32) -> (i32, i32) {
    %c0_i32 = arith.constant 0 : i32
    %c0_i32_0 = arith.constant 0 : i32
    %c0_i32_1 = arith.constant 0 : i32
    return %c0_i32, %c0_i32_0 : i32, i32
  }
  func.func @transform_1(%arg0: i32) -> (i32, i32) {
    %c0_i32 = arith.constant 0 : i32
    %c0_i32_0 = arith.constant 0 : i32
    %c0_i32_1 = arith.constant 0 : i32
    return %c0_i32, %c0_i32_0 : i32, i32
  }
  func.func @transform_2(%arg0: i32) -> (i32, i32) {
    %c0_i32 = arith.constant 0 : i32
    %c0_i32_0 = arith.constant 0 : i32
    %c0_i32_1 = arith.constant 0 : i32
    return %c0_i32, %c0_i32_0 : i32, i32
  }
  func.func @transform_3(%arg0: i32) -> (i32, i32) {
    %c0_i32 = arith.constant 0 : i32
    %c0_i32_0 = arith.constant 0 : i32
    %c0_i32_1 = arith.constant 0 : i32
    return %c0_i32, %c0_i32_0 : i32, i32
  }
  func.func @transform_6(%arg0: i32) -> (i32, i32) {
    %c0_i32 = arith.constant 0 : i32
    %c0_i32_0 = arith.constant 0 : i32
    %c0_i32_1 = arith.constant 0 : i32
    return %c0_i32, %c0_i32_0 : i32, i32
  }
  func.func @transform_7(%arg0: i32) -> (i32, i32) {
    %c0_i32 = arith.constant 0 : i32
    %c0_i32_0 = arith.constant 0 : i32
    %c0_i32_1 = arith.constant 0 : i32
    return %c0_i32, %c0_i32_0 : i32, i32
  }
}

</mosaic_0001>

<llo_original>
// kernel: generator_forward.1
$region0: #{generator_forward.1}
  #allocation0 [shape = 'u32[]', space=smem, size = 0x4, offset = 0x4, fixed_abs, tag = 'smem constant byte address 0x4 - core index']
  #allocation1 [shape = 'u32[72,128]{1,0:T(1,128)}', space=vmem, size = 0x9000, scoped, tag = 'internal scratch']
  #allocation2 [shape = 'bf16[512,1024]{1,0:T(8,128)(2,1)}', space=vmem, size = 0x100000, scoped, tag = 'scratch operand']
  #allocation3 [shape = 'bf16[1024,896]{1,0:T(8,128)(2,1)}', space=vmem, size = 0x1c0000, scoped, tag = 'scratch operand']
  #allocation4 [shape = 's32[2]{0}', space=sflag, size = 0x8, scoped, tag = 'scratch operand']
  #allocation15 [shape = 's32[]', space=sflag, size = 0x4, offset = 0, fixed_abs, tag = 'sflag constant byte address 0x0 - dummy sync flag']
  #allocation16 [shape = 's32[]', space=sflag, size = 0x4, offset = 0, fixed_abs, tag = 'sflag constant byte address 0x0 - dummy sync flag']
  #allocation17 [shape = 'u32[]', space=smem, size = 0x4, offset = 0x44, fixed_abs, tag = 'smem constant byte address 0x44 - assertion arg 0']
  #allocation18 [shape = 'u32[]', space=smem, size = 0x4, offset = 0x48, fixed_abs, tag = 'smem constant byte address 0x48 - assertion arg 1']
  #allocation19 [shape = 's32[]', space=sflag, size = 0x4, offset = 0, fixed_abs, tag = 'sflag constant byte address 0x0 - dummy sync flag']
  #allocation20 [shape = 's32[]', space=sflag, size = 0x4, offset = 0, fixed_abs, tag = 'sflag constant byte address 0x0 - dummy sync flag']
  %s0 = inlined_call_operand.hbm [shape: f32[8,32], index: 0, kind: input, shape index: {}]
  %s1 = inlined_call_operand.hbm [shape: bf16[32,128], index: 1, kind: input, shape index: {}]
  %s2 = inlined_call_operand.hbm [shape: bf16[128,256], index: 2, kind: input, shape index: {}]
  %s3 = inlined_call_operand.hbm [shape: bf16[256,512], index: 3, kind: input, shape index: {}]
  %s4 = inlined_call_operand.hbm [shape: bf16[512,1024], index: 4, kind: input, shape index: {}]
  %s5 = inlined_call_operand.hbm [shape: bf16[1024,896], index: 5, kind: input, shape index: {}]
  %s6 = inlined_call_operand.hbm [shape: f32[8,1024], index: 6, kind: input, shape index: {}]
  %s7 = inlined_call_operand.hbm [shape: f32[8,896], index: 7, kind: output, shape index: {}]
  %s8 = sld [smem:[#allocation0]]
  $region58: #{generator_forward.1} parent=0
    _
  %s10 = ssub.s32 1, %s8
  %s11 = scalar_select 0, %s10, %s8
  $region1: #{generator_forward.1} parent=0
    #allocation5 [shape = 'u8[4096]{0}', space=vmem, size = 0x1000, scoped, tag = 'input window, operand 0, single buffered']
    #allocation6 [shape = 's32[1]{0}', space=sflag, size = 0x4, scoped, tag = 'scoped memory for generator_forward.1']
    #allocation7 [shape = 's32[1]{0}', space=sflag, size = 0x4, scoped, tag = 'scoped memory for generator_forward.1']
    #allocation8 [shape = 'u8[8192]{0}', space=vmem, size = 0x2000, scoped, tag = 'input window, operand 1, single buffered']
    #allocation9 [shape = 's32[1]{0}', space=sflag, size = 0x4, scoped, tag = 'scoped memory for generator_forward.1']
    #allocation10 [shape = 'u8[65536]{0}', space=vmem, size = 0x10000, scoped, tag = 'input window, operand 2, single buffered']
    #allocation11 [shape = 'u8[262144]{0}', space=vmem, size = 0x40000, scoped, tag = 'input window, operand 3, single buffered']
    #allocation12 [shape = 's32[1]{0}', space=sflag, size = 0x4, scoped, tag = 'scoped memory for generator_forward.1']
    #allocation13 [shape = 'u8[32768]{0}', space=vmem, size = 0x8000, scoped, tag = 'input window, operand 6, single buffered']
    #allocation14 [shape = 'u8[28672]{0}', space=vmem, size = 0x7000, scoped, tag = 'output window, operand 0, single buffered']
    %12 = vsyncpa [#allocation6], 0
    %13 = vsyncpa [#allocation9], 0
    %14 = vsyncpa [#allocation12], 0
    %15 = vsyncpa [#allocation7], 0
    // Predicated region
    $region2: #{generator_forward.1} parent=1 // pred_check
      _
    $region3: #{generator_forward.1} parent=1 // pred_check_branch
      %17 = sbr.rel (0) target = $region5
    $region4: #{generator_forward.1} parent=1 // pred_region
      %19 = vsyncadd [#allocation6], 0
      %s21 = sshll.u32 %s0, 4
      %s22 = int_to_ptr.hbm [resolvable:$true] %s21
      %s23 = sshll.u32 [#allocation5], 4
      %s24 = int_to_ptr.vmem [resolvable:$true] %s23
      %26 = dma.hbm_to_vmem [thread:$0]  %s22, 128, %s24, [#allocation6]
    $region5: #{generator_forward.1} parent=1 // pred_fallthru
      _
    // Predicated region
    $region6: #{generator_forward.1} parent=1 // pred_check
      _
    $region7: #{generator_forward.1} parent=1 // pred_check_branch
      %28 = sbr.rel (0) target = $region9
    $region8: #{generator_forward.1} parent=1 // pred_region
      %30 = vsyncadd [#allocation9], 0
      %s31 = sshll.u32 %s1, 4
      %s32 = int_to_ptr.hbm [resolvable:$true] %s31
      %s33 = sshll.u32 [#allocation8], 4
      %s34 = int_to_ptr.vmem [resolvable:$true] %s33
      %39 = dma.hbm_to_vmem [thread:$0]  %s32, 256, %s34, [#allocation9], 64, 64, 4
    $region9: #{generator_forward.1} parent=1 // pred_fallthru
      _
    // Predicated region
    $region10: #{generator_forward.1} parent=1 // pred_check
      _
    $region11: #{generator_forward.1} parent=1 // pred_check_branch
      %41 = sbr.rel (0) target = $region13
    $region12: #{generator_forward.1} parent=1 // pred_region
      %43 = vsyncadd [#allocation9], 0
      %s44 = sshll.u32 %s2, 4
      %s45 = int_to_ptr.hbm [resolvable:$true] %s44
      %s46 = sshll.u32 [#allocation10], 4
      %s47 = int_to_ptr.vmem [resolvable:$true] %s46
      %52 = dma.hbm_to_vmem [thread:$0]  %s45, 2048, %s47, [#allocation9], 128, 128, 8
    $region13: #{generator_forward.1} parent=1 // pred_fallthru
      _
    // Predicated region
    $region14: #{generator_forward.1} parent=1 // pred_check
      _
    $region15: #{generator_forward.1} parent=1 // pred_check_branch
      %54 = sbr.rel (0) target = $region17
    $region16: #{generator_forward.1} parent=1 // pred_region
      %56 = vsyncadd [#allocation12], 0
      %s57 = sshll.u32 %s3, 4
      %s58 = int_to_ptr.hbm [resolvable:$true] %s57
      %s59 = sshll.u32 [#allocation11], 4
      %s60 = int_to_ptr.vmem [resolvable:$true] %s59
      %65 = dma.hbm_to_vmem [thread:$0]  %s58, 8192, %s60, [#allocation12], 256, 256, 16
    $region17: #{generator_forward.1} parent=1 // pred_fallthru
      _
    // Predicated region
    $region18: #{generator_forward.1} parent=1 // pred_check
      _
    $region19: #{generator_forward.1} parent=1 // pred_check_branch
      %67 = sbr.rel (0) target = $region21
    $region20: #{generator_forward.1} parent=1 // pred_region
      %69 = vsyncadd [#allocation12], 0
      %s71 = sshll.u32 %s6, 4
      %s72 = int_to_ptr.hbm [resolvable:$true] %s71
      %s73 = sshll.u32 [#allocation13], 4
      %s74 = int_to_ptr.vmem [resolvable:$true] %s73
      %76 = dma.hbm_to_vmem [thread:$0]  %s72, 1024, %s74, [#allocation12]
    $region21: #{generator_forward.1} parent=1 // pred_fallthru
      _
    // Predicated region
    $region22: #{generator_forward.1} parent=1 // pred_check
      _
    $region23: #{generator_forward.1} parent=1 // pred_check_branch
      %78 = sbr.rel (0) target = $region25
    $region24: #{generator_forward.1} parent=1 // pred_region
      %80 = dma.done [#allocation6], 128
    $region25: #{generator_forward.1} parent=1 // pred_fallthru
      _
    // Predicated region
    $region26: #{generator_forward.1} parent=1 // pred_check
      _
    $region27: #{generator_forward.1} parent=1 // pred_check_branch
      %82 = sbr.rel (0) target = $region29
    $region28: #{generator_forward.1} parent=1 // pred_region
      %84 = dma.done [#allocation9], 256
    $region29: #{generator_forward.1} parent=1 // pred_fallthru
      _
    // Predicated region
    $region30: #{generator_forward.1} parent=1 // pred_check
      _
    $region31: #{generator_forward.1} parent=1 // pred_check_branch
      %86 = sbr.rel (0) target = $region33
    $region32: #{generator_forward.1} parent=1 // pred_region
      %88 = dma.done [#allocation9], 2048
    $region33: #{generator_forward.1} parent=1 // pred_fallthru
      _
    // Predicated region
    $region34: #{generator_forward.1} parent=1 // pred_check
      _
    $region35: #{generator_forward.1} parent=1 // pred_check_branch
      %90 = sbr.rel (0) target = $region37
    $region36: #{generator_forward.1} parent=1 // pred_region
      %92 = dma.done [#allocation12], 8192
    $region37: #{generator_forward.1} parent=1 // pred_fallthru
      _
    // Predicated region
    $region38: #{generator_forward.1} parent=1 // pred_check
      _
    $region39: #{generator_forward.1} parent=1 // pred_check_branch
      %94 = sbr.rel (0) target = $region41
    $region40: #{generator_forward.1} parent=1 // pred_region
      %96 = dma.done [#allocation12], 1024
    $region41: #{generator_forward.1} parent=1 // pred_fallthru
      _
    // Predicated region
    $region42: #{generator_forward.1} parent=1 // pred_check
      _
    $region43: #{generator_forward.1} parent=1 // pred_check_branch
      %99 = sbr.rel target = $region45
    $region44: #{generator_forward.1} parent=1 // pred_region
      %100 = sst [smem:[#allocation17]] [#allocation16]
      %101 = sst [smem:[#allocation18]] [#allocation15]
    $region45: #{generator_forward.1} parent=1 // pred_fallthru
      _
    %103 = shalt.err (0)
    %s105 = sshll.u32 %s4, 4
    %s106 = int_to_ptr.hbm [resolvable:$true] %s105
    %s107 = sshll.u32 [#allocation2], 4
    %s108 = int_to_ptr.vmem [resolvable:$true] %s107
    %110 = dma.hbm_to_vmem [thread:$0]  %s106, 32768, %s108, [#allocation4]
    %s111 = scalar_lea.sflag [#allocation4], 1
    // Predicated region
    $region46: #{generator_forward.1} parent=1 // pred_check
      _
    $region47: #{generator_forward.1} parent=1 // pred_check_branch
      %113 = sbr.rel target = $region49
    $region48: #{generator_forward.1} parent=1 // pred_region
      %114 = sst [smem:[#allocation17]] [#allocation20]
      %115 = sst [smem:[#allocation18]] [#allocation19]
    $region49: #{generator_forward.1} parent=1 // pred_fallthru
      _
    %117 = shalt.err (0)
    %s119 = sshll.u32 %s5, 4
    %s120 = int_to_ptr.hbm [resolvable:$true] %s119
    %s121 = sshll.u32 [#allocation3], 4
    %s122 = int_to_ptr.vmem [resolvable:$true] %s121
    %124 = dma.hbm_to_vmem [thread:$0]  %s120, 57344, %s122, %s111
    %v125 = vld [vmem:[#allocation13] ss:$0 sm:$0xff]
    %s126 = scalar_lea.vmem [#allocation13], 1
    %v127 = vld [vmem:[%s126] ss:$8 sm:$0xf]
    %v128 = vld [vmem:[%s126] ss:$8 sm:$0xf0]
    %v129 = vor.u32 %v127, %v128
    %s130 = scalar_lea.vmem [#allocation13], 2
    %v131 = vld [vmem:[%s130] ss:$8 sm:$0x3]
    %s132 = scalar_lea.vmem [#allocation13], 3
    %v133 = vld [vmem:[%s132] ss:$8 sm:$0x3]
    %s134 = scalar_lea.vmem [#allocation13], 4
    %v135 = vld [vmem:[%s134] ss:$8 sm:$0xf]
    %s136 = scalar_lea.vmem [#allocation13], 5
    %v137 = vld [vmem:[%s136] ss:$8 sm:$0xf]
    %s138 = scalar_lea.vmem [#allocation13], 6
    %v139 = vld [vmem:[%s138] ss:$8 sm:$0xf]
    %v140 = vld [vmem:[%s138] ss:$8 sm:$0xf0]
    %v141 = vor.u32 %v139, %v140
    %s142 = scalar_lea.vmem [#allocation13], 7
    %v143 = vld [vmem:[%s142] ss:$8 sm:$0xf]
    %v144 = vld [vmem:[%s142] ss:$8 sm:$0xf0]
    %v145 = vor.u32 %v143, %v144
    %v146 = vld [vmem:[#allocation5] sm:$0xff]
    %v147 = vld [vmem:[#allocation8] sm:$0xf]
    %v148 = vld [vmem:[#allocation8 + $0x4] sm:$0xf]
    %v149 = vld [vmem:[#allocation8 + $0x8] sm:$0xf]
    %v150 = vld [vmem:[#allocation8 + $0xc] sm:$0xf]
    %v151 = vpack.c.bf16 %v146, %v146
    %v156 = vunpack.c.l.b16 %v147
    %v157 = vunpack.c.l.b16 %v148
    %v158 = vunpack.c.l.b16 %v149
    %v159 = vunpack.c.l.b16 %v150
    %v160 = vpack.c.b16 %v157, %v156
    %v161 = vpack.c.b16 %v159, %v158
    %vm164 = vcmask 261120
    %v166 = vsel %vm164, %v151, 0
    %168 = vmatpush.bf16.msra.mxu0 0
    %169 = vmatpush.bf16.msra.mxu0 0
    %170 = vmatpush.bf16.msra.mxu0 0
    %171 = vmatpush.bf16.msra.mxu0 0
    %172 = vmatpush.bf16.msra.mxu0 0
    %173 = vmatpush.bf16.msra.mxu0 0
    %174 = vmatpush.bf16.msra.mxu0 %v161
    %175 = vmatpush.bf16.msra.mxu0 %v160
    %176 = vmatmul.bf16.gmra.mxu0 %v166
    %v177 = vpop.f32.mrf.mxu0
    %v178 = vadd.f32 %v125, %v177
    %v179 = vpop.f32.mrf.mxu0
    %180 = vdwg.mxu0
    %vm181 = vcmp.gt.f32.partialorder %v178, 0.0
    %v182 = vmul.f32 %v178, 0.2
    %v183 = vsel %vm181, %v178, %v182
    %v184 = vld [vmem:[#allocation10] sm:$0xff]
    %v185 = vld [vmem:[#allocation10 + $0x8] sm:$0xff]
    %v186 = vld [vmem:[#allocation10 + $0x10] sm:$0xff]
    %v187 = vld [vmem:[#allocation10 + $0x18] sm:$0xff]
    %v188 = vld [vmem:[#allocation10 + $0x20] sm:$0xff]
    %v189 = vld [vmem:[#allocation10 + $0x28] sm:$0xff]
    %v190 = vld [vmem:[#allocation10 + $0x30] sm:$0xff]
    %v191 = vld [vmem:[#allocation10 + $0x38] sm:$0xff]
    %v192 = vld [vmem:[#allocation10 + $0x40] sm:$0xff]
    %v193 = vld [vmem:[#allocation10 + $0x48] sm:$0xff]
    %v194 = vld [vmem:[#allocation10 + $0x50] sm:$0xff]
    %v195 = vld [vmem:[#allocation10 + $0x58] sm:$0xff]
    %v196 = vld [vmem:[#allocation10 + $0x60] sm:$0xff]
    %v197 = vld [vmem:[#allocation10 + $0x68] sm:$0xff]
    %v198 = vld [vmem:[#allocation10 + $0x70] sm:$0xff]
    %v199 = vld [vmem:[#allocation10 + $0x78] sm:$0xff]
    %v200 = vpack.c.bf16 %v183, %v183
    %v217 = vunpack.c.l.b16 %v184
    %v218 = vunpack.c.h.b16 %v184
    %v219 = vunpack.c.l.b16 %v185
    %v220 = vunpack.c.h.b16 %v185
    %v221 = vunpack.c.l.b16 %v186
    %v222 = vunpack.c.h.b16 %v186
    %v223 = vunpack.c.l.b16 %v187
    %v224 = vunpack.c.h.b16 %v187
    %v225 = vunpack.c.l.b16 %v188
    %v226 = vunpack.c.h.b16 %v188
    %v227 = vunpack.c.l.b16 %v189
    %v228 = vunpack.c.h.b16 %v189
    %v229 = vunpack.c.l.b16 %v190
    %v230 = vunpack.c.h.b16 %v190
    %v231 = vunpack.c.l.b16 %v191
    %v232 = vunpack.c.h.b16 %v191
    %v233 = vunpack.c.l.b16 %v192
    %v234 = vunpack.c.h.b16 %v192
    %v235 = vunpack.c.l.b16 %v193
    %v236 = vunpack.c.h.b16 %v193
    %v237 = vunpack.c.l.b16 %v194
    %v238 = vunpack.c.h.b16 %v194
    %v239 = vunpack.c.l.b16 %v195
    %v240 = vunpack.c.h.b16 %v195
    %v241 = vunpack.c.l.b16 %v196
    %v242 = vunpack.c.h.b16 %v196
    %v243 = vunpack.c.l.b16 %v197
    %v244 = vunpack.c.h.b16 %v197
    %v245 = vunpack.c.l.b16 %v198
    %v246 = vunpack.c.h.b16 %v198
    %v247 = vunpack.c.l.b16 %v199
    %v248 = vunpack.c.h.b16 %v199
    %v249 = vpack.c.b16 %v219, %v217
    %v250 = vpack.c.b16 %v220, %v218
    %v251 = vpack.c.b16 %v223, %v221
    %v252 = vpack.c.b16 %v224, %v222
    %v253 = vpack.c.b16 %v227, %v225
    %v254 = vpack.c.b16 %v228, %v226
    %v255 = vpack.c.b16 %v231, %v229
    %v256 = vpack.c.b16 %v232, %v230
    %v257 = vpack.c.b16 %v235, %v233
    %v258 = vpack.c.b16 %v236, %v234
    %v259 = vpack.c.b16 %v239, %v237
    %v260 = vpack.c.b16 %v240, %v238
    %v261 = vpack.c.b16 %v243, %v241
    %v262 = vpack.c.b16 %v244, %v242
    %v263 = vpack.c.b16 %v247, %v245
    %v264 = vpack.c.b16 %v248, %v246
    %281 = vmatpush.bf16.msra.mxu0 %v263
    %282 = vmatpush.bf16.msra.mxu0 %v261
    %283 = vmatpush.bf16.msra.mxu0 %v259
    %284 = vmatpush.bf16.msra.mxu0 %v257
    %285 = vmatpush.bf16.msra.mxu0 %v255
    %286 = vmatpush.bf16.msra.mxu0 %v253
    %287 = vmatpush.bf16.msra.mxu0 %v251
    %288 = vmatpush.bf16.msra.mxu0 %v249
    %289 = vmatmul.bf16.gmra.mxu0 %v200
    %v290 = vpop.f32.mrf.mxu0
    %v291 = vadd.f32 0.0, %v290
    %v292 = vpop.f32.mrf.mxu0
    %293 = vdwg.mxu0
    %294 = vmatpush.bf16.msra.mxu0 %v264
    %295 = vmatpush.bf16.msra.mxu0 %v262
    %296 = vmatpush.bf16.msra.mxu0 %v260
    %297 = vmatpush.bf16.msra.mxu0 %v258
    %298 = vmatpush.bf16.msra.mxu0 %v256
    %299 = vmatpush.bf16.msra.mxu0 %v254
    %300 = vmatpush.bf16.msra.mxu0 %v252
    %301 = vmatpush.bf16.msra.mxu0 %v250
    %302 = vmatmul.bf16.gmra.mxu0 %v200
    %v303 = vpop.f32.mrf.mxu0
    %v304 = vadd.f32 0.0, %v303
    %v305 = vpop.f32.mrf.mxu0
    %306 = vdwg.mxu0
    %v307 = vrot.slane %v291, 4
    %v308 = vadd.f32 %v291, %v307
    %v309 = vrot.slane %v308, 2
    %v310 = vadd.f32 %v308, %v309
    %v311 = vrot.slane %v310, 1
    %v312 = vadd.f32 %v310, %v311
    %v313 = vrot.slane %v304, 4
    %v314 = vadd.f32 %v304, %v313
    %v315 = vrot.slane %v314, 2
    %v316 = vadd.f32 %v314, %v315
    %v317 = vrot.slane %v316, 1
    %v318 = vadd.f32 %v316, %v317
    %v319 = vrcp.pop 8.0
    %v320 = vmul.f32 8.0, %v319
    %v321 = vsub.f32 1.0, %v320
    %v322 = vmul.f32 %v319, %v321
    %v323 = vadd.f32 %v319, %v322
    %vm324 = vweird.f32 %v319
    %v325 = vsel %vm324, %v319, %v323
    %v326 = vmul.f32 %v312, %v325
    %v327 = vmul.f32 %v318, %v325
    %v328 = vsub.f32 %v291, %v326
    %v329 = vsub.f32 %v304, %v327
    %v330 = vmul.f32 %v328, %v328
    %v331 = vmul.f32 %v329, %v329
    %v332 = vrot.slane %v330, 4
    %v333 = vadd.f32 %v330, %v332
    %v334 = vrot.slane %v333, 2
    %v335 = vadd.f32 %v333, %v334
    %v336 = vrot.slane %v335, 1
    %v337 = vadd.f32 %v335, %v336
    %v338 = vrot.slane %v331, 4
    %v339 = vadd.f32 %v331, %v338
    %v340 = vrot.slane %v339, 2
    %v341 = vadd.f32 %v339, %v340
    %v342 = vrot.slane %v341, 1
    %v343 = vadd.f32 %v341, %v342
    %v344 = vmul.f32 %v337, %v325
    %v345 = vmul.f32 %v343, %v325
    %v346 = vadd.f32 %v344, 1e-05
    %v347 = vadd.f32 %v345, 1e-05
    %v348 = vrsqrt.pop %v346
    %v349 = vmul.f32 %v348, %v346
    %v350 = vmul.f32 %v349, %v348
    %v351 = vmul.f32 0.5, %v350
    %v352 = vsub.f32 1.5, %v351
    %v353 = vmul.f32 %v348, %v352
    %vm354 = vweird.f32 %v346
    %vm355 = vweird.f32 %v348
    %vm356 = vmor %vm354, %vm355
    %v357 = vsel %vm356, %v348, %v353
    %v358 = vrsqrt.pop %v347
    %v359 = vmul.f32 %v358, %v347
    %v360 = vmul.f32 %v359, %v358
    %v361 = vmul.f32 0.5, %v360
    %v362 = vsub.f32 1.5, %v361
    %v363 = vmul.f32 %v358, %v362
    %vm364 = vweird.f32 %v347
    %vm365 = vweird.f32 %v358
    %vm366 = vmor %vm364, %vm365
    %v367 = vsel %vm366, %v358, %v363
    %v370 = vrot.slane %v367, 7
    %vm371 = vcmask 1040384
    %v372 = vsel %vm371, %v357, %v370
    %v374 = vmul.f32 %v131, %v372
    %v376 = vperm.slane %v374, 0
    %v377 = vperm.slane %v374, 1
    %v380 = vmul.f32 %v326, %v376
    %v381 = vmul.f32 %v327, %v377
    %v384 = vrot.slane %v381, 7
    %v385 = vsel %vm371, %v380, %v384
    %v387 = vsub.f32 %v133, %v385
    %v388 = vmul.f32 %v291, %v376
    %v389 = vmul.f32 %v304, %v377
    %v391 = vperm.slane %v387, 0
    %v392 = vperm.slane %v387, 1
    %v395 = vadd.f32 %v388, %v391
    %v396 = vadd.f32 %v389, %v392
    %vm397 = vcmp.gt.f32.partialorder %v395, 0.0
    %vm398 = vcmp.gt.f32.partialorder %v396, 0.0
    %v399 = vmul.f32 %v395, 0.2
    %v400 = vmul.f32 %v396, 0.2
    %v401 = vsel %vm397, %v395, %v399
    %v402 = vsel %vm398, %v396, %v400
    %v403 = vld [vmem:[#allocation11] sm:$0xff]
    %v404 = vld [vmem:[#allocation11 + $0x8] sm:$0xff]
    %v405 = vld [vmem:[#allocation11 + $0x10] sm:$0xff]
    %v406 = vld [vmem:[#allocation11 + $0x18] sm:$0xff]
    %v407 = vld [vmem:[#allocation11 + $0x20] sm:$0xff]
    %v408 = vld [vmem:[#allocation11 + $0x28] sm:$0xff]
    %v409 = vld [vmem:[#allocation11 + $0x30] sm:$0xff]
    %v410 = vld [vmem:[#allocation11 + $0x38] sm:$0xff]
    %v411 = vld [vmem:[#allocation11 + $0x40] sm:$0xff]
    %v412 = vld [vmem:[#allocation11 + $0x48] sm:$0xff]
    %v413 = vld [vmem:[#allocation11 + $0x50] sm:$0xff]
    %v414 = vld [vmem:[#allocation11 + $0x58] sm:$0xff]
    %v415 = vld [vmem:[#allocation11 + $0x60] sm:$0xff]
    %v416 = vld [vmem:[#allocation11 + $0x68] sm:$0xff]
    %v417 = vld [vmem:[#allocation11 + $0x70] sm:$0xff]
    %v418 = vld [vmem:[#allocation11 + $0x78] sm:$0xff]
    %v419 = vld [vmem:[#allocation11 + $0x80] sm:$0xff]
    %v420 = vld [vmem:[#allocation11 + $0x88] sm:$0xff]
    %v421 = vld [vmem:[#allocation11 + $0x90] sm:$0xff]
    %v422 = vld [vmem:[#allocation11 + $0x98] sm:$0xff]
    %v423 = vld [vmem:[#allocation11 + $0xa0] sm:$0xff]
    %v424 = vld [vmem:[#allocation11 + $0xa8] sm:$0xff]
    %v425 = vld [vmem:[#allocation11 + $0xb0] sm:$0xff]
    %v426 = vld [vmem:[#allocation11 + $0xb8] sm:$0xff]
    %v427 = vld [vmem:[#allocation11 + $0xc0] sm:$0xff]
    %v428 = vld [vmem:[#allocation11 + $0xc8] sm:$0xff]
    %v429 = vld [vmem:[#allocation11 + $0xd0] sm:$0xff]
    %v430 = vld [vmem:[#allocation11 + $0xd8] sm:$0xff]
    %v431 = vld [vmem:[#allocation11 + $0xe0] sm:$0xff]
    %v432 = vld [vmem:[#allocation11 + $0xe8] sm:$0xff]
    %v433 = vld [vmem:[#allocation11 + $0xf0] sm:$0xff]
    %v434 = vld [vmem:[#allocation11 + $0xf8] sm:$0xff]
    %v435 = vld [vmem:[#allocation11 + $0x100] sm:$0xff]
    %v436 = vld [vmem:[#allocation11 + $0x108] sm:$0xff]
    %v437 = vld [vmem:[#allocation11 + $0x110] sm:$0xff]
    %v438 = vld [vmem:[#allocation11 + $0x118] sm:$0xff]
    %v439 = vld [vmem:[#allocation11 + $0x120] sm:$0xff]
    %v440 = vld [vmem:[#allocation11 + $0x128] sm:$0xff]
    %v441 = vld [vmem:[#allocation11 + $0x130] sm:$0xff]
    %v442 = vld [vmem:[#allocation11 + $0x138] sm:$0xff]
    %v443 = vld [vmem:[#allocation11 + $0x140] sm:$0xff]
    %v444 = vld [vmem:[#allocation11 + $0x148] sm:$0xff]
    %v445 = vld [vmem:[#allocation11 + $0x150] sm:$0xff]
    %v446 = vld [vmem:[#allocation11 + $0x158] sm:$0xff]
    %v447 = vld [vmem:[#allocation11 + $0x160] sm:$0xff]
    %v448 = vld [vmem:[#allocation11 + $0x168] sm:$0xff]
    %v449 = vld [vmem:[#allocation11 + $0x170] sm:$0xff]
    %v450 = vld [vmem:[#allocation11 + $0x178] sm:$0xff]
    %v451 = vld [vmem:[#allocation11 + $0x180] sm:$0xff]
    %v452 = vld [vmem:[#allocation11 + $0x188] sm:$0xff]
    %v453 = vld [vmem:[#allocation11 + $0x190] sm:$0xff]
    %v454 = vld [vmem:[#allocation11 + $0x198] sm:$0xff]
    %v455 = vld [vmem:[#allocation11 + $0x1a0] sm:$0xff]
    %v456 = vld [vmem:[#allocation11 + $0x1a8] sm:$0xff]
    %v457 = vld [vmem:[#allocation11 + $0x1b0] sm:$0xff]
    %v458 = vld [vmem:[#allocation11 + $0x1b8] sm:$0xff]
    %v459 = vld [vmem:[#allocation11 + $0x1c0] sm:$0xff]
    %v460 = vld [vmem:[#allocation11 + $0x1c8] sm:$0xff]
    %v461 = vld [vmem:[#allocation11 + $0x1d0] sm:$0xff]
    %v462 = vld [vmem:[#allocation11 + $0x1d8] sm:$0xff]
    %v463 = vld [vmem:[#allocation11 + $0x1e0] sm:$0xff]
    %v464 = vld [vmem:[#allocation11 + $0x1e8] sm:$0xff]
    %v465 = vld [vmem:[#allocation11 + $0x1f0] sm:$0xff]
    %v466 = vld [vmem:[#allocation11 + $0x1f8] sm:$0xff]
    %v467 = vpack.c.bf16 %v401, %v401
    %v468 = vpack.c.bf16 %v402, %v402
    %v533 = vunpack.c.l.b16 %v403
    %v534 = vunpack.c.h.b16 %v403
    %v535 = vunpack.c.l.b16 %v404
    %v536 = vunpack.c.h.b16 %v404
    %v537 = vunpack.c.l.b16 %v405
    %v538 = vunpack.c.h.b16 %v405
    %v539 = vunpack.c.l.b16 %v406
    %v540 = vunpack.c.h.b16 %v406
    %v541 = vunpack.c.l.b16 %v407
    %v542 = vunpack.c.h.b16 %v407
    %v543 = vunpack.c.l.b16 %v408
    %v544 = vunpack.c.h.b16 %v408
    %v545 = vunpack.c.l.b16 %v409
    %v546 = vunpack.c.h.b16 %v409
    %v547 = vunpack.c.l.b16 %v410
    %v548 = vunpack.c.h.b16 %v410
    %v549 = vunpack.c.l.b16 %v411
    %v550 = vunpack.c.h.b16 %v411
    %v551 = vunpack.c.l.b16 %v412
    %v552 = vunpack.c.h.b16 %v412
    %v553 = vunpack.c.l.b16 %v413
    %v554 = vunpack.c.h.b16 %v413
    %v555 = vunpack.c.l.b16 %v414
    %v556 = vunpack.c.h.b16 %v414
    %v557 = vunpack.c.l.b16 %v415
    %v558 = vunpack.c.h.b16 %v415
    %v559 = vunpack.c.l.b16 %v416
    %v560 = vunpack.c.h.b16 %v416
    %v561 = vunpack.c.l.b16 %v417
    %v562 = vunpack.c.h.b16 %v417
    %v563 = vunpack.c.l.b16 %v418
    %v564 = vunpack.c.h.b16 %v418
    %v565 = vunpack.c.l.b16 %v419
    %v566 = vunpack.c.h.b16 %v419
    %v567 = vunpack.c.l.b16 %v420
    %v568 = vunpack.c.h.b16 %v420
    %v569 = vunpack.c.l.b16 %v421
    %v570 = vunpack.c.h.b16 %v421
    %v571 = vunpack.c.l.b16 %v422
    %v572 = vunpack.c.h.b16 %v422
    %v573 = vunpack.c.l.b16 %v423
    %v574 = vunpack.c.h.b16 %v423
    %v575 = vunpack.c.l.b16 %v424
    %v576 = vunpack.c.h.b16 %v424
    %v577 = vunpack.c.l.b16 %v425
    %v578 = vunpack.c.h.b16 %v425
    %v579 = vunpack.c.l.b16 %v426
    %v580 = vunpack.c.h.b16 %v426
    %v581 = vunpack.c.l.b16 %v427
    %v582 = vunpack.c.h.b16 %v427
    %v583 = vunpack.c.l.b16 %v428
    %v584 = vunpack.c.h.b16 %v428
    %v585 = vunpack.c.l.b16 %v429
    %v586 = vunpack.c.h.b16 %v429
    %v587 = vunpack.c.l.b16 %v430
    %v588 = vunpack.c.h.b16 %v430
    %v589 = vunpack.c.l.b16 %v431
    %v590 = vunpack.c.h.b16 %v431
    %v591 = vunpack.c.l.b16 %v432
    %v592 = vunpack.c.h.b16 %v432
    %v593 = vunpack.c.l.b16 %v433
    %v594 = vunpack.c.h.b16 %v433
    %v595 = vunpack.c.l.b16 %v434
    %v596 = vunpack.c.h.b16 %v434
    %v597 = vunpack.c.l.b16 %v435
    %v598 = vunpack.c.h.b16 %v435
    %v599 = vunpack.c.l.b16 %v436
    %v600 = vunpack.c.h.b16 %v436
    %v601 = vunpack.c.l.b16 %v437
    %v602 = vunpack.c.h.b16 %v437
    %v603 = vunpack.c.l.b16 %v438
    %v604 = vunpack.c.h.b16 %v438
    %v605 = vunpack.c.l.b16 %v439
    %v606 = vunpack.c.h.b16 %v439
    %v607 = vunpack.c.l.b16 %v440
    %v608 = vunpack.c.h.b16 %v440
    %v609 = vunpack.c.l.b16 %v441
    %v610 = vunpack.c.h.b16 %v441
    %v611 = vunpack.c.l.b16 %v442
    %v612 = vunpack.c.h.b16 %v442
    %v613 = vunpack.c.l.b16 %v443
    %v614 = vunpack.c.h.b16 %v443
    %v615 = vunpack.c.l.b16 %v444
    %v616 = vunpack.c.h.b16 %v444
    %v617 = vunpack.c.l.b16 %v445
    %v618 = vunpack.c.h.b16 %v445
    %v619 = vunpack.c.l.b16 %v446
    %v620 = vunpack.c.h.b16 %v446
    %v621 = vunpack.c.l.b16 %v447
    %v622 = vunpack.c.h.b16 %v447
    %v623 = vunpack.c.l.b16 %v448
    %v624 = vunpack.c.h.b16 %v448
    %v625 = vunpack.c.l.b16 %v449
    %v626 = vunpack.c.h.b16 %v449
    %v627 = vunpack.c.l.b16 %v450
    %v628 = vunpack.c.h.b16 %v450
    %v629 = vunpack.c.l.b16 %v451
    %v630 = vunpack.c.h.b16 %v451
    %v631 = vunpack.c.l.b16 %v452
    %v632 = vunpack.c.h.b16 %v452
    %v633 = vunpack.c.l.b16 %v453
    %v634 = vunpack.c.h.b16 %v453
    %v635 = vunpack.c.l.b16 %v454
    %v636 = vunpack.c.h.b16 %v454
    %v637 = vunpack.c.l.b16 %v455
    %v638 = vunpack.c.h.b16 %v455
    %v639 = vunpack.c.l.b16 %v456
    %v640 = vunpack.c.h.b16 %v456
    %v641 = vunpack.c.l.b16 %v457
    %v642 = vunpack.c.h.b16 %v457
    %v643 = vunpack.c.l.b16 %v458
    %v644 = vunpack.c.h.b16 %v458
    %v645 = vunpack.c.l.b16 %v459
    %v646 = vunpack.c.h.b16 %v459
    %v647 = vunpack.c.l.b16 %v460
    %v648 = vunpack.c.h.b16 %v460
    %v649 = vunpack.c.l.b16 %v461
    %v650 = vunpack.c.h.b16 %v461
    %v651 = vunpack.c.l.b16 %v462
    %v652 = vunpack.c.h.b16 %v462
    %v653 = vunpack.c.l.b16 %v463
    %v654 = vunpack.c.h.b16 %v463
    %v655 = vunpack.c.l.b16 %v464
    %v656 = vunpack.c.h.b16 %v464
    %v657 = vunpack.c.l.b16 %v465
    %v658 = vunpack.c.h.b16 %v465
    %v659 = vunpack.c.l.b16 %v466
    %v660 = vunpack.c.h.b16 %v466
    %v661 = vpack.c.b16 %v537, %v533
    %v662 = vpack.c.b16 %v538, %v534
    %v663 = vpack.c.b16 %v539, %v535
    %v664 = vpack.c.b16 %v540, %v536
    %v665 = vpack.c.b16 %v545, %v541
    %v666 = vpack.c.b16 %v546, %v542
    %v667 = vpack.c.b16 %v547, %v543
    %v668 = vpack.c.b16 %v548, %v544
    %v669 = vpack.c.b16 %v553, %v549
    %v670 = vpack.c.b16 %v554, %v550
    %v671 = vpack.c.b16 %v555, %v551
    %v672 = vpack.c.b16 %v556, %v552
    %v673 = vpack.c.b16 %v561, %v557
    %v674 = vpack.c.b16 %v562, %v558
    %v675 = vpack.c.b16 %v563, %v559
    %v676 = vpack.c.b16 %v564, %v560
    %v677 = vpack.c.b16 %v569, %v565
    %v678 = vpack.c.b16 %v570, %v566
    %v679 = vpack.c.b16 %v571, %v567
    %v680 = vpack.c.b16 %v572, %v568
    %v681 = vpack.c.b16 %v577, %v573
    %v682 = vpack.c.b16 %v578, %v574
    %v683 = vpack.c.b16 %v579, %v575
    %v684 = vpack.c.b16 %v580, %v576
    %v685 = vpack.c.b16 %v585, %v581
    %v686 = vpack.c.b16 %v586, %v582
    %v687 = vpack.c.b16 %v587, %v583
    %v688 = vpack.c.b16 %v588, %v584
    %v689 = vpack.c.b16 %v593, %v589
    %v690 = vpack.c.b16 %v594, %v590
    %v691 = vpack.c.b16 %v595, %v591
    %v692 = vpack.c.b16 %v596, %v592
    %v693 = vpack.c.b16 %v601, %v597
    %v694 = vpack.c.b16 %v602, %v598
    %v695 = vpack.c.b16 %v603, %v599
    %v696 = vpack.c.b16 %v604, %v600
    %v697 = vpack.c.b16 %v609, %v605
    %v698 = vpack.c.b16 %v610, %v606
    %v699 = vpack.c.b16 %v611, %v607
    %v700 = vpack.c.b16 %v612, %v608
    %v701 = vpack.c.b16 %v617, %v613
    %v702 = vpack.c.b16 %v618, %v614
    %v703 = vpack.c.b16 %v619, %v615
    %v704 = vpack.c.b16 %v620, %v616
    %v705 = vpack.c.b16 %v625, %v621
    %v706 = vpack.c.b16 %v626, %v622
    %v707 = vpack.c.b16 %v627, %v623
    %v708 = vpack.c.b16 %v628, %v624
    %v709 = vpack.c.b16 %v633, %v629
    %v710 = vpack.c.b16 %v634, %v630
    %v711 = vpack.c.b16 %v635, %v631
    %v712 = vpack.c.b16 %v636, %v632
    %v713 = vpack.c.b16 %v641, %v637
    %v714 = vpack.c.b16 %v642, %v638
    %v715 = vpack.c.b16 %v643, %v639
    %v716 = vpack.c.b16 %v644, %v640
    %v717 = vpack.c.b16 %v649, %v645
    %v718 = vpack.c.b16 %v650, %v646
    %v719 = vpack.c.b16 %v651, %v647
    %v720 = vpack.c.b16 %v652, %v648
    %v721 = vpack.c.b16 %v657, %v653
    %v722 = vpack.c.b16 %v658, %v654
    %v723 = vpack.c.b16 %v659, %v655
    %v724 = vpack.c.b16 %v660, %v656
    %789 = vmatpush.bf16.msra.mxu0 %v689
    %790 = vmatpush.bf16.msra.mxu0 %v685
    %791 = vmatpush.bf16.msra.mxu0 %v681
    %792 = vmatpush.bf16.msra.mxu0 %v677
    %793 = vmatpush.bf16.msra.mxu0 %v673
    %794 = vmatpush.bf16.msra.mxu0 %v669
    %795 = vmatpush.bf16.msra.mxu0 %v665
    %796 = vmatpush.bf16.msra.mxu0 %v661
    %797 = vmatmul.bf16.gmra.mxu0 %v467
    %v798 = vpop.f32.mrf.mxu0
    %v799 = vadd.f32 0.0, %v798
    %v800 = vpop.f32.mrf.mxu0
    %801 = vdwg.mxu0
    %802 = vmatpush.bf16.msra.mxu0 %v721
    %803 = vmatpush.bf16.msra.mxu0 %v717
    %804 = vmatpush.bf16.msra.mxu0 %v713
    %805 = vmatpush.bf16.msra.mxu0 %v709
    %806 = vmatpush.bf16.msra.mxu0 %v705
    %807 = vmatpush.bf16.msra.mxu0 %v701
    %808 = vmatpush.bf16.msra.mxu0 %v697
    %809 = vmatpush.bf16.msra.mxu0 %v693
    %810 = vmatmul.bf16.gmra.mxu0 %v468
    %v811 = vpop.f32.mrf.mxu0
    %v812 = vadd.f32 %v799, %v811
    %v813 = vpop.f32.mrf.mxu0
    %814 = vdwg.mxu0
    %815 = vmatpush.bf16.msra.mxu0 %v690
    %816 = vmatpush.bf16.msra.mxu0 %v686
    %817 = vmatpush.bf16.msra.mxu0 %v682
    %818 = vmatpush.bf16.msra.mxu0 %v678
    %819 = vmatpush.bf16.msra.mxu0 %v674
    %820 = vmatpush.bf16.msra.mxu0 %v670
    %821 = vmatpush.bf16.msra.mxu0 %v666
    %822 = vmatpush.bf16.msra.mxu0 %v662
    %823 = vmatmul.bf16.gmra.mxu0 %v467
    %v824 = vpop.f32.mrf.mxu0
    %v825 = vadd.f32 0.0, %v824
    %v826 = vpop.f32.mrf.mxu0
    %827 = vdwg.mxu0
    %828 = vmatpush.bf16.msra.mxu0 %v722
    %829 = vmatpush.bf16.msra.mxu0 %v718
    %830 = vmatpush.bf16.msra.mxu0 %v714
    %831 = vmatpush.bf16.msra.mxu0 %v710
    %832 = vmatpush.bf16.msra.mxu0 %v706
    %833 = vmatpush.bf16.msra.mxu0 %v702
    %834 = vmatpush.bf16.msra.mxu0 %v698
    %835 = vmatpush.bf16.msra.mxu0 %v694
    %836 = vmatmul.bf16.gmra.mxu0 %v468
    %v837 = vpop.f32.mrf.mxu0
    %v838 = vadd.f32 %v825, %v837
    %v839 = vpop.f32.mrf.mxu0
    %840 = vdwg.mxu0
    %841 = vmatpush.bf16.msra.mxu0 %v691
    %842 = vmatpush.bf16.msra.mxu0 %v687
    %843 = vmatpush.bf16.msra.mxu0 %v683
    %844 = vmatpush.bf16.msra.mxu0 %v679
    %845 = vmatpush.bf16.msra.mxu0 %v675
    %846 = vmatpush.bf16.msra.mxu0 %v671
    %847 = vmatpush.bf16.msra.mxu0 %v667
    %848 = vmatpush.bf16.msra.mxu0 %v663
    %849 = vmatmul.bf16.gmra.mxu0 %v467
    %v850 = vpop.f32.mrf.mxu0
    %v851 = vadd.f32 0.0, %v850
    %v852 = vpop.f32.mrf.mxu0
    %853 = vdwg.mxu0
    %854 = vmatpush.bf16.msra.mxu0 %v723
    %855 = vmatpush.bf16.msra.mxu0 %v719
    %856 = vmatpush.bf16.msra.mxu0 %v715
    %857 = vmatpush.bf16.msra.mxu0 %v711
    %858 = vmatpush.bf16.msra.mxu0 %v707
    %859 = vmatpush.bf16.msra.mxu0 %v703
    %860 = vmatpush.bf16.msra.mxu0 %v699
    %861 = vmatpush.bf16.msra.mxu0 %v695
    %862 = vmatmul.bf16.gmra.mxu0 %v468
    %v863 = vpop.f32.mrf.mxu0
    %v864 = vadd.f32 %v851, %v863
    %v865 = vpop.f32.mrf.mxu0
    %866 = vdwg.mxu0
    %867 = vmatpush.bf16.msra.mxu0 %v692
    %868 = vmatpush.bf16.msra.mxu0 %v688
    %869 = vmatpush.bf16.msra.mxu0 %v684
    %870 = vmatpush.bf16.msra.mxu0 %v680
    %871 = vmatpush.bf16.msra.mxu0 %v676
    %872 = vmatpush.bf16.msra.mxu0 %v672
    %873 = vmatpush.bf16.msra.mxu0 %v668
    %874 = vmatpush.bf16.msra.mxu0 %v664
    %875 = vmatmul.bf16.gmra.mxu0 %v467
    %v876 = vpop.f32.mrf.mxu0
    %v877 = vadd.f32 0.0, %v876
    %v878 = vpop.f32.mrf.mxu0
    %879 = vdwg.mxu0
    %880 = vmatpush.bf16.msra.mxu0 %v724
    %881 = vmatpush.bf16.msra.mxu0 %v720
    %882 = vmatpush.bf16.msra.mxu0 %v716
    %883 = vmatpush.bf16.msra.mxu0 %v712
    %884 = vmatpush.bf16.msra.mxu0 %v708
    %885 = vmatpush.bf16.msra.mxu0 %v704
    %886 = vmatpush.bf16.msra.mxu0 %v700
    %887 = vmatpush.bf16.msra.mxu0 %v696
    %888 = vmatmul.bf16.gmra.mxu0 %v468
    %v889 = vpop.f32.mrf.mxu0
    %v890 = vadd.f32 %v877, %v889
    %v891 = vpop.f32.mrf.mxu0
    %892 = vdwg.mxu0
    %v893 = vrot.slane %v812, 4
    %v894 = vadd.f32 %v812, %v893
    %v895 = vrot.slane %v894, 2
    %v896 = vadd.f32 %v894, %v895
    %v897 = vrot.slane %v896, 1
    %v898 = vadd.f32 %v896, %v897
    %v899 = vrot.slane %v838, 4
    %v900 = vadd.f32 %v838, %v899
    %v901 = vrot.slane %v900, 2
    %v902 = vadd.f32 %v900, %v901
    %v903 = vrot.slane %v902, 1
    %v904 = vadd.f32 %v902, %v903
    %v905 = vrot.slane %v864, 4
    %v906 = vadd.f32 %v864, %v905
    %v907 = vrot.slane %v906, 2
    %v908 = vadd.f32 %v906, %v907
    %v909 = vrot.slane %v908, 1
    %v910 = vadd.f32 %v908, %v909
    %v911 = vrot.slane %v890, 4
    %v912 = vadd.f32 %v890, %v911
    %v913 = vrot.slane %v912, 2
    %v914 = vadd.f32 %v912, %v913
    %v915 = vrot.slane %v914, 1
    %v916 = vadd.f32 %v914, %v915
    %v917 = vmul.f32 %v898, %v325
    %v918 = vmul.f32 %v904, %v325
    %v919 = vmul.f32 %v910, %v325
    %v920 = vmul.f32 %v916, %v325
    %v921 = vsub.f32 %v812, %v917
    %v922 = vsub.f32 %v838, %v918
    %v923 = vsub.f32 %v864, %v919
    %v924 = vsub.f32 %v890, %v920
    %v925 = vmul.f32 %v921, %v921
    %v926 = vmul.f32 %v922, %v922
    %v927 = vmul.f32 %v923, %v923
    %v928 = vmul.f32 %v924, %v924
    %v929 = vrot.slane %v925, 4
    %v930 = vadd.f32 %v925, %v929
    %v931 = vrot.slane %v930, 2
    %v932 = vadd.f32 %v930, %v931
    %v933 = vrot.slane %v932, 1
    %v934 = vadd.f32 %v932, %v933
    %v935 = vrot.slane %v926, 4
    %v936 = vadd.f32 %v926, %v935
    %v937 = vrot.slane %v936, 2
    %v938 = vadd.f32 %v936, %v937
    %v939 = vrot.slane %v938, 1
    %v940 = vadd.f32 %v938, %v939
    %v941 = vrot.slane %v927, 4
    %v942 = vadd.f32 %v927, %v941
    %v943 = vrot.slane %v942, 2
    %v944 = vadd.f32 %v942, %v943
    %v945 = vrot.slane %v944, 1
    %v946 = vadd.f32 %v944, %v945
    %v947 = vrot.slane %v928, 4
    %v948 = vadd.f32 %v928, %v947
    %v949 = vrot.slane %v948, 2
    %v950 = vadd.f32 %v948, %v949
    %v951 = vrot.slane %v950, 1
    %v952 = vadd.f32 %v950, %v951
    %v953 = vmul.f32 %v934, %v325
    %v954 = vmul.f32 %v940, %v325
    %v955 = vmul.f32 %v946, %v325
    %v956 = vmul.f32 %v952, %v325
    %v957 = vadd.f32 %v953, 1e-05
    %v958 = vadd.f32 %v954, 1e-05
    %v959 = vadd.f32 %v955, 1e-05
    %v960 = vadd.f32 %v956, 1e-05
    %v961 = vrsqrt.pop %v957
    %v962 = vmul.f32 %v961, %v957
    %v963 = vmul.f32 %v962, %v961
    %v964 = vmul.f32 0.5, %v963
    %v965 = vsub.f32 1.5, %v964
    %v966 = vmul.f32 %v961, %v965
    %vm967 = vweird.f32 %v957
    %vm968 = vweird.f32 %v961
    %vm969 = vmor %vm967, %vm968
    %v970 = vsel %vm969, %v961, %v966
    %v971 = vrsqrt.pop %v958
    %v972 = vmul.f32 %v971, %v958
    %v973 = vmul.f32 %v972, %v971
    %v974 = vmul.f32 0.5, %v973
    %v975 = vsub.f32 1.5, %v974
    %v976 = vmul.f32 %v971, %v975
    %vm977 = vweird.f32 %v958
    %vm978 = vweird.f32 %v971
    %vm979 = vmor %vm977, %vm978
    %v980 = vsel %vm979, %v971, %v976
    %v981 = vrsqrt.pop %v959
    %v982 = vmul.f32 %v981, %v959
    %v983 = vmul.f32 %v982, %v981
    %v984 = vmul.f32 0.5, %v983
    %v985 = vsub.f32 1.5, %v984
    %v986 = vmul.f32 %v981, %v985
    %vm987 = vweird.f32 %v959
    %vm988 = vweird.f32 %v981
    %vm989 = vmor %vm987, %vm988
    %v990 = vsel %vm989, %v981, %v986
    %v991 = vrsqrt.pop %v960
    %v992 = vmul.f32 %v991, %v960
    %v993 = vmul.f32 %v992, %v991
    %v994 = vmul.f32 0.5, %v993
    %v995 = vsub.f32 1.5, %v994
    %v996 = vmul.f32 %v991, %v995
    %vm997 = vweird.f32 %v960
    %vm998 = vweird.f32 %v991
    %vm999 = vmor %vm997, %vm998
    %v1000 = vsel %vm999, %v991, %v996
    %v1005 = vrot.slane %v980, 7
    %v1006 = vrot.slane %v990, 6
    %v1007 = vrot.slane %v1000, 5
    %v1008 = vsel %vm371, %v970, %v1005
    %vm1009 = vcmask 1042434
    %v1010 = vsel %vm1009, %v1006, %v1007
    %vm1011 = vcmask 1041408
    %v1012 = vsel %vm1011, %v1008, %v1010
    %v1014 = vmul.f32 %v135, %v1012
    %v1016 = vperm.slane %v1014, 0
    %v1017 = vperm.slane %v1014, 1
    %v1018 = vperm.slane %v1014, 2
    %v1019 = vperm.slane %v1014, 3
    %v1024 = vmul.f32 %v917, %v1016
    %v1025 = vmul.f32 %v918, %v1017
    %v1026 = vmul.f32 %v919, %v1018
    %v1027 = vmul.f32 %v920, %v1019
    %v1032 = vrot.slane %v1025, 7
    %v1033 = vrot.slane %v1026, 6
    %v1034 = vrot.slane %v1027, 5
    %v1035 = vsel %vm371, %v1024, %v1032
    %v1036 = vsel %vm1009, %v1033, %v1034
    %v1037 = vsel %vm1011, %v1035, %v1036
    %v1039 = vsub.f32 %v137, %v1037
    %v1040 = vmul.f32 %v812, %v1016
    %v1041 = vmul.f32 %v838, %v1017
    %v1042 = vmul.f32 %v864, %v1018
    %v1043 = vmul.f32 %v890, %v1019
    %v1045 = vperm.slane %v1039, 0
    %v1046 = vperm.slane %v1039, 1
    %v1047 = vperm.slane %v1039, 2
    %v1048 = vperm.slane %v1039, 3
    %v1053 = vadd.f32 %v1040, %v1045
    %v1054 = vadd.f32 %v1041, %v1046
    %v1055 = vadd.f32 %v1042, %v1047
    %v1056 = vadd.f32 %v1043, %v1048
    %vm1057 = vcmp.gt.f32.partialorder %v1053, 0.0
    %vm1058 = vcmp.gt.f32.partialorder %v1054, 0.0
    %vm1059 = vcmp.gt.f32.partialorder %v1055, 0.0
    %vm1060 = vcmp.gt.f32.partialorder %v1056, 0.0
    %v1061 = vmul.f32 %v1053, 0.2
    %v1062 = vmul.f32 %v1054, 0.2
    %v1063 = vmul.f32 %v1055, 0.2
    %v1064 = vmul.f32 %v1056, 0.2
    %v1065 = vsel %vm1057, %v1053, %v1061
    %v1066 = vsel %vm1058, %v1054, %v1062
    %v1067 = vsel %vm1059, %v1055, %v1063
    %v1068 = vsel %vm1060, %v1056, %v1064
    %s1069 = smul.u32 4, 64
    %s1070 = smul.u32 %s1069, 8
    %s1071 = sshll.u32 %s1070, 4
    %1072 = dma.done [#allocation4], %s1071
    %v1073 = vld [vmem:[#allocation2] sm:$0xff]
    %v1074 = vld [vmem:[#allocation2 + $0x8] sm:$0xff]
    %v1075 = vld [vmem:[#allocation2 + $0x10] sm:$0xff]
    %v1076 = vld [vmem:[#allocation2 + $0x18] sm:$0xff]
    %v1077 = vld [vmem:[#allocation2 + $0x20] sm:$0xff]
    %v1078 = vld [vmem:[#allocation2 + $0x28] sm:$0xff]
    %v1079 = vld [vmem:[#allocation2 + $0x30] sm:$0xff]
    %v1080 = vld [vmem:[#allocation2 + $0x38] sm:$0xff]
    %v1081 = vld [vmem:[#allocation2 + $0x40] sm:$0xff]
    %v1082 = vld [vmem:[#allocation2 + $0x48] sm:$0xff]
    %v1083 = vld [vmem:[#allocation2 + $0x50] sm:$0xff]
    %v1084 = vld [vmem:[#allocation2 + $0x58] sm:$0xff]
    %v1085 = vld [vmem:[#allocation2 + $0x60] sm:$0xff]
    %v1086 = vld [vmem:[#allocation2 + $0x68] sm:$0xff]
    %v1087 = vld [vmem:[#allocation2 + $0x70] sm:$0xff]
    %v1088 = vld [vmem:[#allocation2 + $0x78] sm:$0xff]
    %v1089 = vld [vmem:[#allocation2 + $0x80] sm:$0xff]
    %v1090 = vld [vmem:[#allocation2 + $0x88] sm:$0xff]
    %v1091 = vld [vmem:[#allocation2 + $0x90] sm:$0xff]
    %v1092 = vld [vmem:[#allocation2 + $0x98] sm:$0xff]
    %v1093 = vld [vmem:[#allocation2 + $0xa0] sm:$0xff]
    %v1094 = vld [vmem:[#allocation2 + $0xa8] sm:$0xff]
    %v1095 = vld [vmem:[#allocation2 + $0xb0] sm:$0xff]
    %v1096 = vld [vmem:[#allocation2 + $0xb8] sm:$0xff]
    %v1097 = vld [vmem:[#allocation2 + $0xc0] sm:$0xff]
    %v1098 = vld [vmem:[#allocation2 + $0xc8] sm:$0xff]
    %v1099 = vld [vmem:[#allocation2 + $0xd0] sm:$0xff]
    %v1100 = vld [vmem:[#allocation2 + $0xd8] sm:$0xff]
    %v1101 = vld [vmem:[#allocation2 + $0xe0] sm:$0xff]
    %v1102 = vld [vmem:[#allocation2 + $0xe8] sm:$0xff]
    %v1103 = vld [vmem:[#allocation2 + $0xf0] sm:$0xff]
    %v1104 = vld [vmem:[#allocation2 + $0xf8] sm:$0xff]
    %v1105 = vld [vmem:[#allocation2 + $0x100] sm:$0xff]
    %v1106 = vld [vmem:[#allocation2 + $0x108] sm:$0xff]
    %v1107 = vld [vmem:[#allocation2 + $0x110] sm:$0xff]
    %v1108 = vld [vmem:[#allocation2 + $0x118] sm:$0xff]
    %v1109 = vld [vmem:[#allocation2 + $0x120] sm:$0xff]
    %v1110 = vld [vmem:[#allocation2 + $0x128] sm:$0xff]
    %v1111 = vld [vmem:[#allocation2 + $0x130] sm:$0xff]
    %v1112 = vld [vmem:[#allocation2 + $0x138] sm:$0xff]
    %v1113 = vld [vmem:[#allocation2 + $0x140] sm:$0xff]
    %v1114 = vld [vmem:[#allocation2 + $0x148] sm:$0xff]
    %v1115 = vld [vmem:[#allocation2 + $0x150] sm:$0xff]
    %v1116 = vld [vmem:[#allocation2 + $0x158] sm:$0xff]
    %v1117 = vld [vmem:[#allocation2 + $0x160] sm:$0xff]
    %v1118 = vld [vmem:[#allocation2 + $0x168] sm:$0xff]
    %v1119 = vld [vmem:[#allocation2 + $0x170] sm:$0xff]
    %v1120 = vld [vmem:[#allocation2 + $0x178] sm:$0xff]
    %v1121 = vld [vmem:[#allocation2 + $0x180] sm:$0xff]
    %v1122 = vld [vmem:[#allocation2 + $0x188] sm:$0xff]
    %v1123 = vld [vmem:[#allocation2 + $0x190] sm:$0xff]
    %v1124 = vld [vmem:[#allocation2 + $0x198] sm:$0xff]
    %v1125 = vld [vmem:[#allocation2 + $0x1a0] sm:$0xff]
    %v1126 = vld [vmem:[#allocation2 + $0x1a8] sm:$0xff]
    %v1127 = vld [vmem:[#allocation2 + $0x1b0] sm:$0xff]
    %v1128 = vld [vmem:[#allocation2 + $0x1b8] sm:$0xff]
    %v1129 = vld [vmem:[#allocation2 + $0x1c0] sm:$0xff]
    %v1130 = vld [vmem:[#allocation2 + $0x1c8] sm:$0xff]
    %v1131 = vld [vmem:[#allocation2 + $0x1d0] sm:$0xff]
    %v1132 = vld [vmem:[#allocation2 + $0x1d8] sm:$0xff]
    %v1133 = vld [vmem:[#allocation2 + $0x1e0] sm:$0xff]
    %v1134 = vld [vmem:[#allocation2 + $0x1e8] sm:$0xff]
    %v1135 = vld [vmem:[#allocation2 + $0x1f0] sm:$0xff]
    %v1136 = vld [vmem:[#allocation2 + $0x1f8] sm:$0xff]
    %v1137 = vld [vmem:[#allocation2 + $0x200] sm:$0xff]
    %v1138 = vld [vmem:[#allocation2 + $0x208] sm:$0xff]
    %v1139 = vld [vmem:[#allocation2 + $0x210] sm:$0xff]
    %v1140 = vld [vmem:[#allocation2 + $0x218] sm:$0xff]
    %v1141 = vld [vmem:[#allocation2 + $0x220] sm:$0xff]
    %v1142 = vld [vmem:[#allocation2 + $0x228] sm:$0xff]
    %v1143 = vld [vmem:[#allocation2 + $0x230] sm:$0xff]
    %v1144 = vld [vmem:[#allocation2 + $0x238] sm:$0xff]
    %v1145 = vld [vmem:[#allocation2 + $0x240] sm:$0xff]
    %v1146 = vld [vmem:[#allocation2 + $0x248] sm:$0xff]
    %v1147 = vld [vmem:[#allocation2 + $0x250] sm:$0xff]
    %v1148 = vld [vmem:[#allocation2 + $0x258] sm:$0xff]
    %v1149 = vld [vmem:[#allocation2 + $0x260] sm:$0xff]
    %v1150 = vld [vmem:[#allocation2 + $0x268] sm:$0xff]
    %v1151 = vld [vmem:[#allocation2 + $0x270] sm:$0xff]
    %v1152 = vld [vmem:[#allocation2 + $0x278] sm:$0xff]
    %v1153 = vld [vmem:[#allocation2 + $0x280] sm:$0xff]
    %v1154 = vld [vmem:[#allocation2 + $0x288] sm:$0xff]
    %v1155 = vld [vmem:[#allocation2 + $0x290] sm:$0xff]
    %v1156 = vld [vmem:[#allocation2 + $0x298] sm:$0xff]
    %v1157 = vld [vmem:[#allocation2 + $0x2a0] sm:$0xff]
    %v1158 = vld [vmem:[#allocation2 + $0x2a8] sm:$0xff]
    %v1159 = vld [vmem:[#allocation2 + $0x2b0] sm:$0xff]
    %v1160 = vld [vmem:[#allocation2 + $0x2b8] sm:$0xff]
    %v1161 = vld [vmem:[#allocation2 + $0x2c0] sm:$0xff]
    %v1162 = vld [vmem:[#allocation2 + $0x2c8] sm:$0xff]
    %v1163 = vld [vmem:[#allocation2 + $0x2d0] sm:$0xff]
    %v1164 = vld [vmem:[#allocation2 + $0x2d8] sm:$0xff]
    %v1165 = vld [vmem:[#allocation2 + $0x2e0] sm:$0xff]
    %v1166 = vld [vmem:[#allocation2 + $0x2e8] sm:$0xff]
    %v1167 = vld [vmem:[#allocation2 + $0x2f0] sm:$0xff]
    %v1168 = vld [vmem:[#allocation2 + $0x2f8] sm:$0xff]
    %v1169 = vld [vmem:[#allocation2 + $0x300] sm:$0xff]
    %v1170 = vld [vmem:[#allocation2 + $0x308] sm:$0xff]
    %v1171 = vld [vmem:[#allocation2 + $0x310] sm:$0xff]
    %v1172 = vld [vmem:[#allocation2 + $0x318] sm:$0xff]
    %v1173 = vld [vmem:[#allocation2 + $0x320] sm:$0xff]
    %v1174 = vld [vmem:[#allocation2 + $0x328] sm:$0xff]
    %v1175 = vld [vmem:[#allocation2 + $0x330] sm:$0xff]
    %v1176 = vld [vmem:[#allocation2 + $0x338] sm:$0xff]
    %v1177 = vld [vmem:[#allocation2 + $0x340] sm:$0xff]
    %v1178 = vld [vmem:[#allocation2 + $0x348] sm:$0xff]
    %v1179 = vld [vmem:[#allocation2 + $0x350] sm:$0xff]
    %v1180 = vld [vmem:[#allocation2 + $0x358] sm:$0xff]
    %v1181 = vld [vmem:[#allocation2 + $0x360] sm:$0xff]
    %v1182 = vld [vmem:[#allocation2 + $0x368] sm:$0xff]
    %v1183 = vld [vmem:[#allocation2 + $0x370] sm:$0xff]
    %v1184 = vld [vmem:[#allocation2 + $0x378] sm:$0xff]
    %v1185 = vld [vmem:[#allocation2 + $0x380] sm:$0xff]
    %v1186 = vld [vmem:[#allocation2 + $0x388] sm:$0xff]
    %v1187 = vld [vmem:[#allocation2 + $0x390] sm:$0xff]
    %v1188 = vld [vmem:[#allocation2 + $0x398] sm:$0xff]
    %v1189 = vld [vmem:[#allocation2 + $0x3a0] sm:$0xff]
    %v1190 = vld [vmem:[#allocation2 + $0x3a8] sm:$0xff]
    %v1191 = vld [vmem:[#allocation2 + $0x3b0] sm:$0xff]
    %v1192 = vld [vmem:[#allocation2 + $0x3b8] sm:$0xff]
    %v1193 = vld [vmem:[#allocation2 + $0x3c0] sm:$0xff]
    %v1194 = vld [vmem:[#allocation2 + $0x3c8] sm:$0xff]
    %v1195 = vld [vmem:[#allocation2 + $0x3d0] sm:$0xff]
    %v1196 = vld [vmem:[#allocation2 + $0x3d8] sm:$0xff]
    %v1197 = vld [vmem:[#allocation2 + $0x3e0] sm:$0xff]
    %v1198 = vld [vmem:[#allocation2 + $0x3e8] sm:$0xff]
    %v1199 = vld [vmem:[#allocation2 + $0x3f0] sm:$0xff]
    %v1200 = vld [vmem:[#allocation2 + $0x3f8] sm:$0xff]
    %v1201 = vld [vmem:[#allocation2 + $0x400] sm:$0xff]
    %v1202 = vld [vmem:[#allocation2 + $0x408] sm:$0xff]
    %v1203 = vld [vmem:[#allocation2 + $0x410] sm:$0xff]
    %v1204 = vld [vmem:[#allocation2 + $0x418] sm:$0xff]
    %v1205 = vld [vmem:[#allocation2 + $0x420] sm:$0xff]
    %v1206 = vld [vmem:[#allocation2 + $0x428] sm:$0xff]
    %v1207 = vld [vmem:[#allocation2 + $0x430] sm:$0xff]
    %v1208 = vld [vmem:[#allocation2 + $0x438] sm:$0xff]
    %v1209 = vld [vmem:[#allocation2 + $0x440] sm:$0xff]
    %v1210 = vld [vmem:[#allocation2 + $0x448] sm:$0xff]
    %v1211 = vld [vmem:[#allocation2 + $0x450] sm:$0xff]
    %v1212 = vld [vmem:[#allocation2 + $0x458] sm:$0xff]
    %v1213 = vld [vmem:[#allocation2 + $0x460] sm:$0xff]
    %v1214 = vld [vmem:[#allocation2 + $0x468] sm:$0xff]
    %v1215 = vld [vmem:[#allocation2 + $0x470] sm:$0xff]
    %v1216 = vld [vmem:[#allocation2 + $0x478] sm:$0xff]
    %v1217 = vld [vmem:[#allocation2 + $0x480] sm:$0xff]
    %v1218 = vld [vmem:[#allocation2 + $0x488] sm:$0xff]
    %v1219 = vld [vmem:[#allocation2 + $0x490] sm:$0xff]
    %v1220 = vld [vmem:[#allocation2 + $0x498] sm:$0xff]
    %v1221 = vld [vmem:[#allocation2 + $0x4a0] sm:$0xff]
    %v1222 = vld [vmem:[#allocation2 + $0x4a8] sm:$0xff]
    %v1223 = vld [vmem:[#allocation2 + $0x4b0] sm:$0xff]
    %v1224 = vld [vmem:[#allocation2 + $0x4b8] sm:$0xff]
    %v1225 = vld [vmem:[#allocation2 + $0x4c0] sm:$0xff]
    %v1226 = vld [vmem:[#allocation2 + $0x4c8] sm:$0xff]
    %v1227 = vld [vmem:[#allocation2 + $0x4d0] sm:$0xff]
    %v1228 = vld [vmem:[#allocation2 + $0x4d8] sm:$0xff]
    %v1229 = vld [vmem:[#allocation2 + $0x4e0] sm:$0xff]
    %v1230 = vld [vmem:[#allocation2 + $0x4e8] sm:$0xff]
    %v1231 = vld [vmem:[#allocation2 + $0x4f0] sm:$0xff]
    %v1232 = vld [vmem:[#allocation2 + $0x4f8] sm:$0xff]
    %v1233 = vld [vmem:[#allocation2 + $0x500] sm:$0xff]
    %v1234 = vld [vmem:[#allocation2 + $0x508] sm:$0xff]
    %v1235 = vld [vmem:[#allocation2 + $0x510] sm:$0xff]
    %v1236 = vld [vmem:[#allocation2 + $0x518] sm:$0xff]
    %v1237 = vld [vmem:[#allocation2 + $0x520] sm:$0xff]
    %v1238 = vld [vmem:[#allocation2 + $0x528] sm:$0xff]
    %v1239 = vld [vmem:[#allocation2 + $0x530] sm:$0xff]
    %v1240 = vld [vmem:[#allocation2 + $0x538] sm:$0xff]
    %v1241 = vld [vmem:[#allocation2 + $0x540] sm:$0xff]
    %v1242 = vld [vmem:[#allocation2 + $0x548] sm:$0xff]
    %v1243 = vld [vmem:[#allocation2 + $0x550] sm:$0xff]
    %v1244 = vld [vmem:[#allocation2 + $0x558] sm:$0xff]
    %v1245 = vld [vmem:[#allocation2 + $0x560] sm:$0xff]
    %v1246 = vld [vmem:[#allocation2 + $0x568] sm:$0xff]
    %v1247 = vld [vmem:[#allocation2 + $0x570] sm:$0xff]
    %v1248 = vld [vmem:[#allocation2 + $0x578] sm:$0xff]
    %v1249 = vld [vmem:[#allocation2 + $0x580] sm:$0xff]
    %v1250 = vld [vmem:[#allocation2 + $0x588] sm:$0xff]
    %v1251 = vld [vmem:[#allocation2 + $0x590] sm:$0xff]
    %v1252 = vld [vmem:[#allocation2 + $0x598] sm:$0xff]
    %v1253 = vld [vmem:[#allocation2 + $0x5a0] sm:$0xff]
    %v1254 = vld [vmem:[#allocation2 + $0x5a8] sm:$0xff]
    %v1255 = vld [vmem:[#allocation2 + $0x5b0] sm:$0xff]
    %v1256 = vld [vmem:[#allocation2 + $0x5b8] sm:$0xff]
    %v1257 = vld [vmem:[#allocation2 + $0x5c0] sm:$0xff]
    %v1258 = vld [vmem:[#allocation2 + $0x5c8] sm:$0xff]
    %v1259 = vld [vmem:[#allocation2 + $0x5d0] sm:$0xff]
    %v1260 = vld [vmem:[#allocation2 + $0x5d8] sm:$0xff]
    %v1261 = vld [vmem:[#allocation2 + $0x5e0] sm:$0xff]
    %v1262 = vld [vmem:[#allocation2 + $0x5e8] sm:$0xff]
    %v1263 = vld [vmem:[#allocation2 + $0x5f0] sm:$0xff]
    %v1264 = vld [vmem:[#allocation2 + $0x5f8] sm:$0xff]
    %v1265 = vld [vmem:[#allocation2 + $0x600] sm:$0xff]
    %v1266 = vld [vmem:[#allocation2 + $0x608] sm:$0xff]
    %v1267 = vld [vmem:[#allocation2 + $0x610] sm:$0xff]
    %v1268 = vld [vmem:[#allocation2 + $0x618] sm:$0xff]
    %v1269 = vld [vmem:[#allocation2 + $0x620] sm:$0xff]
    %v1270 = vld [vmem:[#allocation2 + $0x628] sm:$0xff]
    %v1271 = vld [vmem:[#allocation2 + $0x630] sm:$0xff]
    %v1272 = vld [vmem:[#allocation2 + $0x638] sm:$0xff]
    %v1273 = vld [vmem:[#allocation2 + $0x640] sm:$0xff]
    %v1274 = vld [vmem:[#allocation2 + $0x648] sm:$0xff]
    %v1275 = vld [vmem:[#allocation2 + $0x650] sm:$0xff]
    %v1276 = vld [vmem:[#allocation2 + $0x658] sm:$0xff]
    %v1277 = vld [vmem:[#allocation2 + $0x660] sm:$0xff]
    %v1278 = vld [vmem:[#allocation2 + $0x668] sm:$0xff]
    %v1279 = vld [vmem:[#allocation2 + $0x670] sm:$0xff]
    %v1280 = vld [vmem:[#allocation2 + $0x678] sm:$0xff]
    %v1281 = vld [vmem:[#allocation2 + $0x680] sm:$0xff]
    %v1282 = vld [vmem:[#allocation2 + $0x688] sm:$0xff]
    %v1283 = vld [vmem:[#allocation2 + $0x690] sm:$0xff]
    %v1284 = vld [vmem:[#allocation2 + $0x698] sm:$0xff]
    %v1285 = vld [vmem:[#allocation2 + $0x6a0] sm:$0xff]
    %v1286 = vld [vmem:[#allocation2 + $0x6a8] sm:$0xff]
    %v1287 = vld [vmem:[#allocation2 + $0x6b0] sm:$0xff]
    %v1288 = vld [vmem:[#allocation2 + $0x6b8] sm:$0xff]
    %v1289 = vld [vmem:[#allocation2 + $0x6c0] sm:$0xff]
    %v1290 = vld [vmem:[#allocation2 + $0x6c8] sm:$0xff]
    %v1291 = vld [vmem:[#allocation2 + $0x6d0] sm:$0xff]
    %v1292 = vld [vmem:[#allocation2 + $0x6d8] sm:$0xff]
    %v1293 = vld [vmem:[#allocation2 + $0x6e0] sm:$0xff]
    %v1294 = vld [vmem:[#allocation2 + $0x6e8] sm:$0xff]
    %v1295 = vld [vmem:[#allocation2 + $0x6f0] sm:$0xff]
    %v1296 = vld [vmem:[#allocation2 + $0x6f8] sm:$0xff]
    %v1297 = vld [vmem:[#allocation2 + $0x700] sm:$0xff]
    %v1298 = vld [vmem:[#allocation2 + $0x708] sm:$0xff]
    %v1299 = vld [vmem:[#allocation2 + $0x710] sm:$0xff]
    %v1300 = vld [vmem:[#allocation2 + $0x718] sm:$0xff]
    %v1301 = vld [vmem:[#allocation2 + $0x720] sm:$0xff]
    %v1302 = vld [vmem:[#allocation2 + $0x728] sm:$0xff]
    %v1303 = vld [vmem:[#allocation2 + $0x730] sm:$0xff]
    %v1304 = vld [vmem:[#allocation2 + $0x738] sm:$0xff]
    %v1305 = vld [vmem:[#allocation2 + $0x740] sm:$0xff]
    %v1306 = vld [vmem:[#allocation2 + $0x748] sm:$0xff]
    %v1307 = vld [vmem:[#allocation2 + $0x750] sm:$0xff]
    %v1308 = vld [vmem:[#allocation2 + $0x758] sm:$0xff]
    %v1309 = vld [vmem:[#allocation2 + $0x760] sm:$0xff]
    %v1310 = vld [vmem:[#allocation2 + $0x768] sm:$0xff]
    %v1311 = vld [vmem:[#allocation2 + $0x770] sm:$0xff]
    %v1312 = vld [vmem:[#allocation2 + $0x778] sm:$0xff]
    %v1313 = vld [vmem:[#allocation2 + $0x780] sm:$0xff]
    %v1314 = vld [vmem:[#allocation2 + $0x788] sm:$0xff]
    %v1315 = vld [vmem:[#allocation2 + $0x790] sm:$0xff]
    %v1316 = vld [vmem:[#allocation2 + $0x798] sm:$0xff]
    %v1317 = vld [vmem:[#allocation2 + $0x7a0] sm:$0xff]
    %v1318 = vld [vmem:[#allocation2 + $0x7a8] sm:$0xff]
    %v1319 = vld [vmem:[#allocation2 + $0x7b0] sm:$0xff]
    %v1320 = vld [vmem:[#allocation2 + $0x7b8] sm:$0xff]
    %v1321 = vld [vmem:[#allocation2 + $0x7c0] sm:$0xff]
    %v1322 = vld [vmem:[#allocation2 + $0x7c8] sm:$0xff]
    %v1323 = vld [vmem:[#allocation2 + $0x7d0] sm:$0xff]
    %v1324 = vld [vmem:[#allocation2 + $0x7d8] sm:$0xff]
    %v1325 = vld [vmem:[#allocation2 + $0x7e0] sm:$0xff]
    %v1326 = vld [vmem:[#allocation2 + $0x7e8] sm:$0xff]
    %v1327 = vld [vmem:[#allocation2 + $0x7f0] sm:$0xff]
    %v1328 = vld [vmem:[#allocation2 + $0x7f8] sm:$0xff]
    %v1329 = vpack.c.bf16 %v1065, %v1065
    %v1330 = vpack.c.bf16 %v1066, %v1066
    %v1331 = vpack.c.bf16 %v1067, %v1067
    %v1332 = vpack.c.bf16 %v1068, %v1068
    %v1589 = vunpack.c.l.b16 %v1073
    %v1590 = vunpack.c.h.b16 %v1073
    %v1591 = vunpack.c.l.b16 %v1074
    %v1592 = vunpack.c.h.b16 %v1074
    %v1593 = vunpack.c.l.b16 %v1075
    %v1594 = vunpack.c.h.b16 %v1075
    %v1595 = vunpack.c.l.b16 %v1076
    %v1596 = vunpack.c.h.b16 %v1076
    %v1597 = vunpack.c.l.b16 %v1077
    %v1598 = vunpack.c.h.b16 %v1077
    %v1599 = vunpack.c.l.b16 %v1078
    %v1600 = vunpack.c.h.b16 %v1078
    %v1601 = vunpack.c.l.b16 %v1079
    %v1602 = vunpack.c.h.b16 %v1079
    %v1603 = vunpack.c.l.b16 %v1080
    %v1604 = vunpack.c.h.b16 %v1080
    %v1605 = vunpack.c.l.b16 %v1081
    %v1606 = vunpack.c.h.b16 %v1081
    %v1607 = vunpack.c.l.b16 %v1082
    %v1608 = vunpack.c.h.b16 %v1082
    %v1609 = vunpack.c.l.b16 %v1083
    %v1610 = vunpack.c.h.b16 %v1083
    %v1611 = vunpack.c.l.b16 %v1084
    %v1612 = vunpack.c.h.b16 %v1084
    %v1613 = vunpack.c.l.b16 %v1085
    %v1614 = vunpack.c.h.b16 %v1085
    %v1615 = vunpack.c.l.b16 %v1086
    %v1616 = vunpack.c.h.b16 %v1086
    %v1617 = vunpack.c.l.b16 %v1087
    %v1618 = vunpack.c.h.b16 %v1087
    %v1619 = vunpack.c.l.b16 %v1088
    %v1620 = vunpack.c.h.b16 %v1088
    %v1621 = vunpack.c.l.b16 %v1089
    %v1622 = vunpack.c.h.b16 %v1089
    %v1623 = vunpack.c.l.b16 %v1090
    %v1624 = vunpack.c.h.b16 %v1090
    %v1625 = vunpack.c.l.b16 %v1091
    %v1626 = vunpack.c.h.b16 %v1091
    %v1627 = vunpack.c.l.b16 %v1092
    %v1628 = vunpack.c.h.b16 %v1092
    %v1629 = vunpack.c.l.b16 %v1093
    %v1630 = vunpack.c.h.b16 %v1093
    %v1631 = vunpack.c.l.b16 %v1094
    %v1632 = vunpack.c.h.b16 %v1094
    %v1633 = vunpack.c.l.b16 %v1095
    %v1634 = vunpack.c.h.b16 %v1095
    %v1635 = vunpack.c.l.b16 %v1096
    %v1636 = vunpack.c.h.b16 %v1096
    %v1637 = vunpack.c.l.b16 %v1097
    %v1638 = vunpack.c.h.b16 %v1097
    %v1639 = vunpack.c.l.b16 %v1098
    %v1640 = vunpack.c.h.b16 %v1098
    %v1641 = vunpack.c.l.b16 %v1099
    %v1642 = vunpack.c.h.b16 %v1099
    %v1643 = vunpack.c.l.b16 %v1100
    %v1644 = vunpack.c.h.b16 %v1100
    %v1645 = vunpack.c.l.b16 %v1101
    %v1646 = vunpack.c.h.b16 %v1101
    %v1647 = vunpack.c.l.b16 %v1102
    %v1648 = vunpack.c.h.b16 %v1102
    %v1649 = vunpack.c.l.b16 %v1103
    %v1650 = vunpack.c.h.b16 %v1103
    %v1651 = vunpack.c.l.b16 %v1104
    %v1652 = vunpack.c.h.b16 %v1104
    %v1653 = vunpack.c.l.b16 %v1105
    %v1654 = vunpack.c.h.b16 %v1105
    %v1655 = vunpack.c.l.b16 %v1106
    %v1656 = vunpack.c.h.b16 %v1106
    %v1657 = vunpack.c.l.b16 %v1107
    %v1658 = vunpack.c.h.b16 %v1107
    %v1659 = vunpack.c.l.b16 %v1108
    %v1660 = vunpack.c.h.b16 %v1108
    %v1661 = vunpack.c.l.b16 %v1109
    %v1662 = vunpack.c.h.b16 %v1109
    %v1663 = vunpack.c.l.b16 %v1110
    %v1664 = vunpack.c.h.b16 %v1110
    %v1665 = vunpack.c.l.b16 %v1111
    %v1666 = vunpack.c.h.b16 %v1111
    %v1667 = vunpack.c.l.b16 %v1112
    %v1668 = vunpack.c.h.b16 %v1112
    %v1669 = vunpack.c.l.b16 %v1113
    %v1670 = vunpack.c.h.b16 %v1113
    %v1671 = vunpack.c.l.b16 %v1114
    %v1672 = vunpack.c.h.b16 %v1114
    %v1673 = vunpack.c.l.b16 %v1115
    %v1674 = vunpack.c.h.b16 %v1115
    %v1675 = vunpack.c.l.b16 %v1116
    %v1676 = vunpack.c.h.b16 %v1116
    %v1677 = vunpack.c.l.b16 %v1117
    %v1678 = vunpack.c.h.b16 %v1117
    %v1679 = vunpack.c.l.b16 %v1118
    %v1680 = vunpack.c.h.b16 %v1118
    %v1681 = vunpack.c.l.b16 %v1119
    %v1682 = vunpack.c.h.b16 %v1119
    %v1683 = vunpack.c.l.b16 %v1120
    %v1684 = vunpack.c.h.b16 %v1120
    %v1685 = vunpack.c.l.b16 %v1121
    %v1686 = vunpack.c.h.b16 %v1121
    %v1687 = vunpack.c.l.b16 %v1122
    %v1688 = vunpack.c.h.b16 %v1122
    %v1689 = vunpack.c.l.b16 %v1123
    %v1690 = vunpack.c.h.b16 %v1123
    %v1691 = vunpack.c.l.b16 %v1124
    %v1692 = vunpack.c.h.b16 %v1124
    %v1693 = vunpack.c.l.b16 %v1125
    %v1694 = vunpack.c.h.b16 %v1125
    %v1695 = vunpack.c.l.b16 %v1126
    %v1696 = vunpack.c.h.b16 %v1126
    %v1697 = vunpack.c.l.b16 %v1127
    %v1698 = vunpack.c.h.b16 %v1127
    %v1699 = vunpack.c.l.b16 %v1128
    %v1700 = vunpack.c.h.b16 %v1128
    %v1701 = vunpack.c.l.b16 %v1129
    %v1702 = vunpack.c.h.b16 %v1129
    %v1703 = vunpack.c.l.b16 %v1130
    %v1704 = vunpack.c.h.b16 %v1130
    %v1705 = vunpack.c.l.b16 %v1131
    %v1706 = vunpack.c.h.b16 %v1131
    %v1707 = vunpack.c.l.b16 %v1132
    %v1708 = vunpack.c.h.b16 %v1132
    %v1709 = vunpack.c.l.b16 %v1133
    %v1710 = vunpack.c.h.b16 %v1133
    %v1711 = vunpack.c.l.b16 %v1134
    %v1712 = vunpack.c.h.b16 %v1134
    %v1713 = vunpack.c.l.b16 %v1135
    %v1714 = vunpack.c.h.b16 %v1135
    %v1715 = vunpack.c.l.b16 %v1136
    %v1716 = vunpack.c.h.b16 %v1136
    %v1717 = vunpack.c.l.b16 %v1137
    %v1718 = vunpack.c.h.b16 %v1137
    %v1719 = vunpack.c.l.b16 %v1138
    %v1720 = vunpack.c.h.b16 %v1138
    %v1721 = vunpack.c.l.b16 %v1139
    %v1722 = vunpack.c.h.b16 %v1139
    %v1723 = vunpack.c.l.b16 %v1140
    %v1724 = vunpack.c.h.b16 %v1140
    %v1725 = vunpack.c.l.b16 %v1141
    %v1726 = vunpack.c.h.b16 %v1141
    %v1727 = vunpack.c.l.b16 %v1142
    %v1728 = vunpack.c.h.b16 %v1142
    %v1729 = vunpack.c.l.b16 %v1143
    %v1730 = vunpack.c.h.b16 %v1143
    %v1731 = vunpack.c.l.b16 %v1144
    %v1732 = vunpack.c.h.b16 %v1144
    %v1733 = vunpack.c.l.b16 %v1145
    %v1734 = vunpack.c.h.b16 %v1145
    %v1735 = vunpack.c.l.b16 %v1146
    %v1736 = vunpack.c.h.b16 %v1146
    %v1737 = vunpack.c.l.b16 %v1147
    %v1738 = vunpack.c.h.b16 %v1147
    %v1739 = vunpack.c.l.b16 %v1148
    %v1740 = vunpack.c.h.b16 %v1148
    %v1741 = vunpack.c.l.b16 %v1149
    %v1742 = vunpack.c.h.b16 %v1149
    %v1743 = vunpack.c.l.b16 %v1150
    %v1744 = vunpack.c.h.b16 %v1150
    %v1745 = vunpack.c.l.b16 %v1151
    %v1746 = vunpack.c.h.b16 %v1151
    %v1747 = vunpack.c.l.b16 %v1152
    %v1748 = vunpack.c.h.b16 %v1152
    %v1749 = vunpack.c.l.b16 %v1153
    %v1750 = vunpack.c.h.b16 %v1153
    %v1751 = vunpack.c.l.b16 %v1154
    %v1752 = vunpack.c.h.b16 %v1154
    %v1753 = vunpack.c.l.b16 %v1155
    %v1754 = vunpack.c.h.b16 %v1155
    %v1755 = vunpack.c.l.b16 %v1156
    %v1756 = vunpack.c.h.b16 %v1156
    %v1757 = vunpack.c.l.b16 %v1157
    %v1758 = vunpack.c.h.b16 %v1157
    %v1759 = vunpack.c.l.b16 %v1158
    %v1760 = vunpack.c.h.b16 %v1158
    %v1761 = vunpack.c.l.b16 %v1159
    %v1762 = vunpack.c.h.b16 %v1159
    %v1763 = vunpack.c.l.b16 %v1160
    %v1764 = vunpack.c.h.b16 %v1160
    %v1765 = vunpack.c.l.b16 %v1161
    %v1766 = vunpack.c.h.b16 %v1161
    %v1767 = vunpack.c.l.b16 %v1162
    %v1768 = vunpack.c.h.b16 %v1162
    %v1769 = vunpack.c.l.b16 %v1163
    %v1770 = vunpack.c.h.b16 %v1163
    %v1771 = vunpack.c.l.b16 %v1164
    %v1772 = vunpack.c.h.b16 %v1164
    %v1773 = vunpack.c.l.b16 %v1165
    %v1774 = vunpack.c.h.b16 %v1165
    %v1775 = vunpack.c.l.b16 %v1166
    %v1776 = vunpack.c.h.b16 %v1166
    %v1777 = vunpack.c.l.b16 %v1167
    %v1778 = vunpack.c.h.b16 %v1167
    %v1779 = vunpack.c.l.b16 %v1168
    %v1780 = vunpack.c.h.b16 %v1168
    %v1781 = vunpack.c.l.b16 %v1169
    %v1782 = vunpack.c.h.b16 %v1169
    %v1783 = vunpack.c.l.b16 %v1170
    %v1784 = vunpack.c.h.b16 %v1170
    %v1785 = vunpack.c.l.b16 %v1171
    %v1786 = vunpack.c.h.b16 %v1171
    %v1787 = vunpack.c.l.b16 %v1172
    %v1788 = vunpack.c.h.b16 %v1172
    %v1789 = vunpack.c.l.b16 %v1173
    %v1790 = vunpack.c.h.b16 %v1173
    %v1791 = vunpack.c.l.b16 %v1174
    %v1792 = vunpack.c.h.b16 %v1174
    %v1793 = vunpack.c.l.b16 %v1175
    %v1794 = vunpack.c.h.b16 %v1175
    %v1795 = vunpack.c.l.b16 %v1176
    %v1796 = vunpack.c.h.b16 %v1176
    %v1797 = vunpack.c.l.b16 %v1177
    %v1798 = vunpack.c.h.b16 %v1177
    %v1799 = vunpack.c.l.b16 %v1178
    %v1800 = vunpack.c.h.b16 %v1178
    %v1801 = vunpack.c.l.b16 %v1179
    %v1802 = vunpack.c.h.b16 %v1179
    %v1803 = vunpack.c.l.b16 %v1180
    %v1804 = vunpack.c.h.b16 %v1180
    %v1805 = vunpack.c.l.b16 %v1181
    %v1806 = vunpack.c.h.b16 %v1181
    %v1807 = vunpack.c.l.b16 %v1182
    %v1808 = vunpack.c.h.b16 %v1182
    %v1809 = vunpack.c.l.b16 %v1183
    %v1810 = vunpack.c.h.b16 %v1183
    %v1811 = vunpack.c.l.b16 %v1184
    %v1812 = vunpack.c.h.b16 %v1184
    %v1813 = vunpack.c.l.b16 %v1185
    %v1814 = vunpack.c.h.b16 %v1185
    %v1815 = vunpack.c.l.b16 %v1186
    %v1816 = vunpack.c.h.b16 %v1186
    %v1817 = vunpack.c.l.b16 %v1187
    %v1818 = vunpack.c.h.b16 %v1187
    %v1819 = vunpack.c.l.b16 %v1188
    %v1820 = vunpack.c.h.b16 %v1188
    %v1821 = vunpack.c.l.b16 %v1189
    %v1822 = vunpack.c.h.b16 %v1189
    %v1823 = vunpack.c.l.b16 %v1190
    %v1824 = vunpack.c.h.b16 %v1190
    %v1825 = vunpack.c.l.b16 %v1191
    %v1826 = vunpack.c.h.b16 %v1191
    %v1827 = vunpack.c.l.b16 %v1192
    %v1828 = vunpack.c.h.b16 %v1192
    %v1829 = vunpack.c.l.b16 %v1193
    %v1830 = vunpack.c.h.b16 %v1193
    %v1831 = vunpack.c.l.b16 %v1194
    %v1832 = vunpack.c.h.b16 %v1194
    %v1833 = vunpack.c.l.b16 %v1195
    %v1834 = vunpack.c.h.b16 %v1195
    %v1835 = vunpack.c.l.b16 %v1196
    %v1836 = vunpack.c.h.b16 %v1196
    %v1837 = vunpack.c.l.b16 %v1197
    %v1838 = vunpack.c.h.b16 %v1197
    %v1839 = vunpack.c.l.b16 %v1198
    %v1840 = vunpack.c.h.b16 %v1198
    %v1841 = vunpack.c.l.b16 %v1199
    %v1842 = vunpack.c.h.b16 %v1199
    %v1843 = vunpack.c.l.b16 %v1200
    %v1844 = vunpack.c.h.b16 %v1200
    %v1845 = vunpack.c.l.b16 %v1201
    %v1846 = vunpack.c.h.b16 %v1201
    %v1847 = vunpack.c.l.b16 %v1202
    %v1848 = vunpack.c.h.b16 %v1202
    %v1849 = vunpack.c.l.b16 %v1203
    %v1850 = vunpack.c.h.b16 %v1203
    %v1851 = vunpack.c.l.b16 %v1204
    %v1852 = vunpack.c.h.b16 %v1204
    %v1853 = vunpack.c.l.b16 %v1205
    %v1854 = vunpack.c.h.b16 %v1205
    %v1855 = vunpack.c.l.b16 %v1206
    %v1856 = vunpack.c.h.b16 %v1206
    %v1857 = vunpack.c.l.b16 %v1207
    %v1858 = vunpack.c.h.b16 %v1207
    %v1859 = vunpack.c.l.b16 %v1208
    %v1860 = vunpack.c.h.b16 %v1208
    %v1861 = vunpack.c.l.b16 %v1209
    %v1862 = vunpack.c.h.b16 %v1209
    %v1863 = vunpack.c.l.b16 %v1210
    %v1864 = vunpack.c.h.b16 %v1210
    %v1865 = vunpack.c.l.b16 %v1211
    %v1866 = vunpack.c.h.b16 %v1211
    %v1867 = vunpack.c.l.b16 %v1212
    %v1868 = vunpack.c.h.b16 %v1212
    %v1869 = vunpack.c.l.b16 %v1213
    %v1870 = vunpack.c.h.b16 %v1213
    %v1871 = vunpack.c.l.b16 %v1214
    %v1872 = vunpack.c.h.b16 %v1214
    %v1873 = vunpack.c.l.b16 %v1215
    %v1874 = vunpack.c.h.b16 %v1215
    %v1875 = vunpack.c.l.b16 %v1216
    %v1876 = vunpack.c.h.b16 %v1216
    %v1877 = vunpack.c.l.b16 %v1217
    %v1878 = vunpack.c.h.b16 %v1217
    %v1879 = vunpack.c.l.b16 %v1218
    %v1880 = vunpack.c.h.b16 %v1218
    %v1881 = vunpack.c.l.b16 %v1219
    %v1882 = vunpack.c.h.b16 %v1219
    %v1883 = vunpack.c.l.b16 %v1220
    %v1884 = vunpack.c.h.b16 %v1220
    %v1885 = vunpack.c.l.b16 %v1221
    %v1886 = vunpack.c.h.b16 %v1221
    %v1887 = vunpack.c.l.b16 %v1222
    %v1888 = vunpack.c.h.b16 %v1222
    %v1889 = vunpack.c.l.b16 %v1223
    %v1890 = vunpack.c.h.b16 %v1223
    %v1891 = vunpack.c.l.b16 %v1224
    %v1892 = vunpack.c.h.b16 %v1224
    %v1893 = vunpack.c.l.b16 %v1225
    %v1894 = vunpack.c.h.b16 %v1225
    %v1895 = vunpack.c.l.b16 %v1226
    %v1896 = vunpack.c.h.b16 %v1226
    %v1897 = vunpack.c.l.b16 %v1227
    %v1898 = vunpack.c.h.b16 %v1227
    %v1899 = vunpack.c.l.b16 %v1228
    %v1900 = vunpack.c.h.b16 %v1228
    %v1901 = vunpack.c.l.b16 %v1229
    %v1902 = vunpack.c.h.b16 %v1229
    %v1903 = vunpack.c.l.b16 %v1230
    %v1904 = vunpack.c.h.b16 %v1230
    %v1905 = vunpack.c.l.b16 %v1231
    %v1906 = vunpack.c.h.b16 %v1231
    %v1907 = vunpack.c.l.b16 %v1232
    %v1908 = vunpack.c.h.b16 %v1232
    %v1909 = vunpack.c.l.b16 %v1233
    %v1910 = vunpack.c.h.b16 %v1233
    %v1911 = vunpack.c.l.b16 %v1234
    %v1912 = vunpack.c.h.b16 %v1234
    %v1913 = vunpack.c.l.b16 %v1235
    %v1914 = vunpack.c.h.b16 %v1235
    %v1915 = vunpack.c.l.b16 %v1236
    %v1916 = vunpack.c.h.b16 %v1236
    %v1917 = vunpack.c.l.b16 %v1237
    %v1918 = vunpack.c.h.b16 %v1237
    %v1919 = vunpack.c.l.b16 %v1238
    %v1920 = vunpack.c.h.b16 %v1238
    %v1921 = vunpack.c.l.b16 %v1239
    %v1922 = vunpack.c.h.b16 %v1239
    %v1923 = vunpack.c.l.b16 %v1240
    %v1924 = vunpack.c.h.b16 %v1240
    %v1925 = vunpack.c.l.b16 %v1241
    %v1926 = vunpack.c.h.b16 %v1241
    %v1927 = vunpack.c.l.b16 %v1242
    %v1928 = vunpack.c.h.b16 %v1242
    %v1929 = vunpack.c.l.b16 %v1243
    %v1930 = vunpack.c.h.b16 %v1243
    %v1931 = vunpack.c.l.b16 %v1244
    %v1932 = vunpack.c.h.b16 %v1244
    %v1933 = vunpack.c.l.b16 %v1245
    %v1934 = vunpack.c.h.b16 %v1245
    %v1935 = vunpack.c.l.b16 %v1246
    %v1936 = vunpack.c.h.b16 %v1246
    %v1937 = vunpack.c.l.b16 %v1247
    %v1938 = vunpack.c.h.b16 %v1247
    %v1939 = vunpack.c.l.b16 %v1248
    %v1940 = vunpack.c.h.b16 %v1248
    %v1941 = vunpack.c.l.b16 %v1249
    %v1942 = vunpack.c.h.b16 %v1249
    %v1943 = vunpack.c.l.b16 %v1250
    %v1944 = vunpack.c.h.b16 %v1250
    %v1945 = vunpack.c.l.b16 %v1251
    %v1946 = vunpack.c.h.b16 %v1251
    %v1947 = vunpack.c.l.b16 %v1252
    %v1948 = vunpack.c.h.b16 %v1252
    %v1949 = vunpack.c.l.b16 %v1253
    %v1950 = vunpack.c.h.b16 %v1253
    %v1951 = vunpack.c.l.b16 %v1254
    %v1952 = vunpack.c.h.b16 %v1254
    %v1953 = vunpack.c.l.b16 %v1255
    %v1954 = vunpack.c.h.b16 %v1255
    %v1955 = vunpack.c.l.b16 %v1256
    %v1956 = vunpack.c.h.b16 %v1256
    %v1957 = vunpack.c.l.b16 %v1257
    %v1958 = vunpack.c.h.b16 %v1257
    %v1959 = vunpack.c.l.b16 %v1258
    %v1960 = vunpack.c.h.b16 %v1258
    %v1961 = vunpack.c.l.b16 %v1259
    %v1962 = vunpack.c.h.b16 %v1259
    %v1963 = vunpack.c.l.b16 %v1260
    %v1964 = vunpack.c.h.b16 %v1260
    %v1965 = vunpack.c.l.b16 %v1261
    %v1966 = vunpack.c.h.b16 %v1261
    %v1967 = vunpack.c.l.b16 %v1262
    %v1968 = vunpack.c.h.b16 %v1262
    %v1969 = vunpack.c.l.b16 %v1263
    %v1970 = vunpack.c.h.b16 %v1263
    %v1971 = vunpack.c.l.b16 %v1264
    %v1972 = vunpack.c.h.b16 %v1264
    %v1973 = vunpack.c.l.b16 %v1265
    %v1974 = vunpack.c.h.b16 %v1265
    %v1975 = vunpack.c.l.b16 %v1266
    %v1976 = vunpack.c.h.b16 %v1266
    %v1977 = vunpack.c.l.b16 %v1267
    %v1978 = vunpack.c.h.b16 %v1267
    %v1979 = vunpack.c.l.b16 %v1268
    %v1980 = vunpack.c.h.b16 %v1268
    %v1981 = vunpack.c.l.b16 %v1269
    %v1982 = vunpack.c.h.b16 %v1269
    %v1983 = vunpack.c.l.b16 %v1270
    %v1984 = vunpack.c.h.b16 %v1270
    %v1985 = vunpack.c.l.b16 %v1271
    %v1986 = vunpack.c.h.b16 %v1271
    %v1987 = vunpack.c.l.b16 %v1272
    %v1988 = vunpack.c.h.b16 %v1272
    %v1989 = vunpack.c.l.b16 %v1273
    %v1990 = vunpack.c.h.b16 %v1273
    %v1991 = vunpack.c.l.b16 %v1274
    %v1992 = vunpack.c.h.b16 %v1274
    %v1993 = vunpack.c.l.b16 %v1275
    %v1994 = vunpack.c.h.b16 %v1275
    %v1995 = vunpack.c.l.b16 %v1276
    %v1996 = vunpack.c.h.b16 %v1276
    %v1997 = vunpack.c.l.b16 %v1277
    %v1998 = vunpack.c.h.b16 %v1277
    %v1999 = vunpack.c.l.b16 %v1278
    %v2000 = vunpack.c.h.b16 %v1278
    %v2001 = vunpack.c.l.b16 %v1279
    %v2002 = vunpack.c.h.b16 %v1279
    %v2003 = vunpack.c.l.b16 %v1280
    %v2004 = vunpack.c.h.b16 %v1280
    %v2005 = vunpack.c.l.b16 %v1281
    %v2006 = vunpack.c.h.b16 %v1281
    %v2007 = vunpack.c.l.b16 %v1282
    %v2008 = vunpack.c.h.b16 %v1282
    %v2009 = vunpack.c.l.b16 %v1283
    %v2010 = vunpack.c.h.b16 %v1283
    %v2011 = vunpack.c.l.b16 %v1284
    %v2012 = vunpack.c.h.b16 %v1284
    %v2013 = vunpack.c.l.b16 %v1285
    %v2014 = vunpack.c.h.b16 %v1285
    %v2015 = vunpack.c.l.b16 %v1286
    %v2016 = vunpack.c.h.b16 %v1286
    %v2017 = vunpack.c.l.b16 %v1287
    %v2018 = vunpack.c.h.b16 %v1287
    %v2019 = vunpack.c.l.b16 %v1288
    %v2020 = vunpack.c.h.b16 %v1288
    %v2021 = vunpack.c.l.b16 %v1289
    %v2022 = vunpack.c.h.b16 %v1289
    %v2023 = vunpack.c.l.b16 %v1290
    %v2024 = vunpack.c.h.b16 %v1290
    %v2025 = vunpack.c.l.b16 %v1291
    %v2026 = vunpack.c.h.b16 %v1291
    %v2027 = vunpack.c.l.b16 %v1292
    %v2028 = vunpack.c.h.b16 %v1292
    %v2029 = vunpack.c.l.b16 %v1293
    %v2030 = vunpack.c.h.b16 %v1293
    %v2031 = vunpack.c.l.b16 %v1294
    %v2032 = vunpack.c.h.b16 %v1294
    %v2033 = vunpack.c.l.b16 %v1295
    %v2034 = vunpack.c.h.b16 %v1295
    %v2035 = vunpack.c.l.b16 %v1296
    %v2036 = vunpack.c.h.b16 %v1296
    %v2037 = vunpack.c.l.b16 %v1297
    %v2038 = vunpack.c.h.b16 %v1297
    %v2039 = vunpack.c.l.b16 %v1298
    %v2040 = vunpack.c.h.b16 %v1298
    %v2041 = vunpack.c.l.b16 %v1299
    %v2042 = vunpack.c.h.b16 %v1299
    %v2043 = vunpack.c.l.b16 %v1300
    %v2044 = vunpack.c.h.b16 %v1300
    %v2045 = vunpack.c.l.b16 %v1301
    %v2046 = vunpack.c.h.b16 %v1301
    %v2047 = vunpack.c.l.b16 %v1302
    %v2048 = vunpack.c.h.b16 %v1302
    %v2049 = vunpack.c.l.b16 %v1303
    %v2050 = vunpack.c.h.b16 %v1303
    %v2051 = vunpack.c.l.b16 %v1304
    %v2052 = vunpack.c.h.b16 %v1304
    %v2053 = vunpack.c.l.b16 %v1305
    %v2054 = vunpack.c.h.b16 %v1305
    %v2055 = vunpack.c.l.b16 %v1306
    %v2056 = vunpack.c.h.b16 %v1306
    %v2057 = vunpack.c.l.b16 %v1307
    %v2058 = vunpack.c.h.b16 %v1307
    %v2059 = vunpack.c.l.b16 %v1308
    %v2060 = vunpack.c.h.b16 %v1308
    %v2061 = vunpack.c.l.b16 %v1309
    %v2062 = vunpack.c.h.b16 %v1309
    %v2063 = vunpack.c.l.b16 %v1310
    %v2064 = vunpack.c.h.b16 %v1310
    %v2065 = vunpack.c.l.b16 %v1311
    %v2066 = vunpack.c.h.b16 %v1311
    %v2067 = vunpack.c.l.b16 %v1312
    %v2068 = vunpack.c.h.b16 %v1312
    %v2069 = vunpack.c.l.b16 %v1313
    %v2070 = vunpack.c.h.b16 %v1313
    %v2071 = vunpack.c.l.b16 %v1314
    %v2072 = vunpack.c.h.b16 %v1314
    %v2073 = vunpack.c.l.b16 %v1315
    %v2074 = vunpack.c.h.b16 %v1315
    %v2075 = vunpack.c.l.b16 %v1316
    %v2076 = vunpack.c.h.b16 %v1316
    %v2077 = vunpack.c.l.b16 %v1317
    %v2078 = vunpack.c.h.b16 %v1317
    %v2079 = vunpack.c.l.b16 %v1318
    %v2080 = vunpack.c.h.b16 %v1318
    %v2081 = vunpack.c.l.b16 %v1319
    %v2082 = vunpack.c.h.b16 %v1319
    %v2083 = vunpack.c.l.b16 %v1320
    %v2084 = vunpack.c.h.b16 %v1320
    %v2085 = vunpack.c.l.b16 %v1321
    %v2086 = vunpack.c.h.b16 %v1321
    %v2087 = vunpack.c.l.b16 %v1322
    %v2088 = vunpack.c.h.b16 %v1322
    %v2089 = vunpack.c.l.b16 %v1323
    %v2090 = vunpack.c.h.b16 %v1323
    %v2091 = vunpack.c.l.b16 %v1324
    %v2092 = vunpack.c.h.b16 %v1324
    %v2093 = vunpack.c.l.b16 %v1325
    %v2094 = vunpack.c.h.b16 %v1325
    %v2095 = vunpack.c.l.b16 %v1326
    %v2096 = vunpack.c.h.b16 %v1326
    %v2097 = vunpack.c.l.b16 %v1327
    %v2098 = vunpack.c.h.b16 %v1327
    %v2099 = vunpack.c.l.b16 %v1328
    %v2100 = vunpack.c.h.b16 %v1328
    %v2101 = vpack.c.b16 %v1597, %v1589
    %v2102 = vpack.c.b16 %v1598, %v1590
    %v2103 = vpack.c.b16 %v1599, %v1591
    %v2104 = vpack.c.b16 %v1600, %v1592
    %v2105 = vpack.c.b16 %v1601, %v1593
    %v2106 = vpack.c.b16 %v1602, %v1594
    %v2107 = vpack.c.b16 %v1603, %v1595
    %v2108 = vpack.c.b16 %v1604, %v1596
    %v2109 = vpack.c.b16 %v1613, %v1605
    %v2110 = vpack.c.b16 %v1614, %v1606
    %v2111 = vpack.c.b16 %v1615, %v1607
    %v2112 = vpack.c.b16 %v1616, %v1608
    %v2113 = vpack.c.b16 %v1617, %v1609
    %v2114 = vpack.c.b16 %v1618, %v1610
    %v2115 = vpack.c.b16 %v1619, %v1611
    %v2116 = vpack.c.b16 %v1620, %v1612
    %v2117 = vpack.c.b16 %v1629, %v1621
    %v2118 = vpack.c.b16 %v1630, %v1622
    %v2119 = vpack.c.b16 %v1631, %v1623
    %v2120 = vpack.c.b16 %v1632, %v1624
    %v2121 = vpack.c.b16 %v1633, %v1625
    %v2122 = vpack.c.b16 %v1634, %v1626
    %v2123 = vpack.c.b16 %v1635, %v1627
    %v2124 = vpack.c.b16 %v1636, %v1628
    %v2125 = vpack.c.b16 %v1645, %v1637
    %v2126 = vpack.c.b16 %v1646, %v1638
    %v2127 = vpack.c.b16 %v1647, %v1639
    %v2128 = vpack.c.b16 %v1648, %v1640
    %v2129 = vpack.c.b16 %v1649, %v1641
    %v2130 = vpack.c.b16 %v1650, %v1642
    %v2131 = vpack.c.b16 %v1651, %v1643
    %v2132 = vpack.c.b16 %v1652, %v1644
    %v2133 = vpack.c.b16 %v1661, %v1653
    %v2134 = vpack.c.b16 %v1662, %v1654
    %v2135 = vpack.c.b16 %v1663, %v1655
    %v2136 = vpack.c.b16 %v1664, %v1656
    %v2137 = vpack.c.b16 %v1665, %v1657
    %v2138 = vpack.c.b16 %v1666, %v1658
    %v2139 = vpack.c.b16 %v1667, %v1659
    %v2140 = vpack.c.b16 %v1668, %v1660
    %v2141 = vpack.c.b16 %v1677, %v1669
    %v2142 = vpack.c.b16 %v1678, %v1670
    %v2143 = vpack.c.b16 %v1679, %v1671
    %v2144 = vpack.c.b16 %v1680, %v1672
    %v2145 = vpack.c.b16 %v1681, %v1673
    %v2146 = vpack.c.b16 %v1682, %v1674
    %v2147 = vpack.c.b16 %v1683, %v1675
    %v2148 = vpack.c.b16 %v1684, %v1676
    %v2149 = vpack.c.b16 %v1693, %v1685
    %v2150 = vpack.c.b16 %v1694, %v1686
    %v2151 = vpack.c.b16 %v1695, %v1687
    %v2152 = vpack.c.b16 %v1696, %v1688
    %v2153 = vpack.c.b16 %v1697, %v1689
    %v2154 = vpack.c.b16 %v1698, %v1690
    %v2155 = vpack.c.b16 %v1699, %v1691
    %v2156 = vpack.c.b16 %v1700, %v1692
    %v2157 = vpack.c.b16 %v1709, %v1701
    %v2158 = vpack.c.b16 %v1710, %v1702
    %v2159 = vpack.c.b16 %v1711, %v1703
    %v2160 = vpack.c.b16 %v1712, %v1704
    %v2161 = vpack.c.b16 %v1713, %v1705
    %v2162 = vpack.c.b16 %v1714, %v1706
    %v2163 = vpack.c.b16 %v1715, %v1707
    %v2164 = vpack.c.b16 %v1716, %v1708
    %v2165 = vpack.c.b16 %v1725, %v1717
    %v2166 = vpack.c.b16 %v1726, %v1718
    %v2167 = vpack.c.b16 %v1727, %v1719
    %v2168 = vpack.c.b16 %v1728, %v1720
    %v2169 = vpack.c.b16 %v1729, %v1721
    %v2170 = vpack.c.b16 %v1730, %v1722
    %v2171 = vpack.c.b16 %v1731, %v1723
    %v2172 = vpack.c.b16 %v1732, %v1724
    %v2173 = vpack.c.b16 %v1741, %v1733
    %v2174 = vpack.c.b16 %v1742, %v1734
    %v2175 = vpack.c.b16 %v1743, %v1735
    %v2176 = vpack.c.b16 %v1744, %v1736
    %v2177 = vpack.c.b16 %v1745, %v1737
    %v2178 = vpack.c.b16 %v1746, %v1738
    %v2179 = vpack.c.b16 %v1747, %v1739
    %v2180 = vpack.c.b16 %v1748, %v1740
    %v2181 = vpack.c.b16 %v1757, %v1749
    %v2182 = vpack.c.b16 %v1758, %v1750
    %v2183 = vpack.c.b16 %v1759, %v1751
    %v2184 = vpack.c.b16 %v1760, %v1752
    %v2185 = vpack.c.b16 %v1761, %v1753
    %v2186 = vpack.c.b16 %v1762, %v1754
    %v2187 = vpack.c.b16 %v1763, %v1755
    %v2188 = vpack.c.b16 %v1764, %v1756
    %v2189 = vpack.c.b16 %v1773, %v1765
    %v2190 = vpack.c.b16 %v1774, %v1766
    %v2191 = vpack.c.b16 %v1775, %v1767
    %v2192 = vpack.c.b16 %v1776, %v1768
    %v2193 = vpack.c.b16 %v1777, %v1769
    %v2194 = vpack.c.b16 %v1778, %v1770
    %v2195 = vpack.c.b16 %v1779, %v1771
    %v2196 = vpack.c.b16 %v1780, %v1772
    %v2197 = vpack.c.b16 %v1789, %v1781
    %v2198 = vpack.c.b16 %v1790, %v1782
    %v2199 = vpack.c.b16 %v1791, %v1783
    %v2200 = vpack.c.b16 %v1792, %v1784
    %v2201 = vpack.c.b16 %v1793, %v1785
    %v2202 = vpack.c.b16 %v1794, %v1786
    %v2203 = vpack.c.b16 %v1795, %v1787
    %v2204 = vpack.c.b16 %v1796, %v1788
    %v2205 = vpack.c.b16 %v1805, %v1797
    %v2206 = vpack.c.b16 %v1806, %v1798
    %v2207 = vpack.c.b16 %v1807, %v1799
    %v2208 = vpack.c.b16 %v1808, %v1800
    %v2209 = vpack.c.b16 %v1809, %v1801
    %v2210 = vpack.c.b16 %v1810, %v1802
    %v2211 = vpack.c.b16 %v1811, %v1803
    %v2212 = vpack.c.b16 %v1812, %v1804
    %v2213 = vpack.c.b16 %v1821, %v1813
    %v2214 = vpack.c.b16 %v1822, %v1814
    %v2215 = vpack.c.b16 %v1823, %v1815
    %v2216 = vpack.c.b16 %v1824, %v1816
    %v2217 = vpack.c.b16 %v1825, %v1817
    %v2218 = vpack.c.b16 %v1826, %v1818
    %v2219 = vpack.c.b16 %v1827, %v1819
    %v2220 = vpack.c.b16 %v1828, %v1820
    %v2221 = vpack.c.b16 %v1837, %v1829
    %v2222 = vpack.c.b16 %v1838, %v1830
    %v2223 = vpack.c.b16 %v1839, %v1831
    %v2224 = vpack.c.b16 %v1840, %v1832
    %v2225 = vpack.c.b16 %v1841, %v1833
    %v2226 = vpack.c.b16 %v1842, %v1834
    %v2227 = vpack.c.b16 %v1843, %v1835
    %v2228 = vpack.c.b16 %v1844, %v1836
    %v2229 = vpack.c.b16 %v1853, %v1845
    %v2230 = vpack.c.b16 %v1854, %v1846
    %v2231 = vpack.c.b16 %v1855, %v1847
    %v2232 = vpack.c.b16 %v1856, %v1848
    %v2233 = vpack.c.b16 %v1857, %v1849
    %v2234 = vpack.c.b16 %v1858, %v1850
    %v2235 = vpack.c.b16 %v1859, %v1851
    %v2236 = vpack.c.b16 %v1860, %v1852
    %v2237 = vpack.c.b16 %v1869, %v1861
    %v2238 = vpack.c.b16 %v1870, %v1862
    %v2239 = vpack.c.b16 %v1871, %v1863
    %v2240 = vpack.c.b16 %v1872, %v1864
    %v2241 = vpack.c.b16 %v1873, %v1865
    %v2242 = vpack.c.b16 %v1874, %v1866
    %v2243 = vpack.c.b16 %v1875, %v1867
    %v2244 = vpack.c.b16 %v1876, %v1868
    %v2245 = vpack.c.b16 %v1885, %v1877
    %v2246 = vpack.c.b16 %v1886, %v1878
    %v2247 = vpack.c.b16 %v1887, %v1879
    %v2248 = vpack.c.b16 %v1888, %v1880
    %v2249 = vpack.c.b16 %v1889, %v1881
    %v2250 = vpack.c.b16 %v1890, %v1882
    %v2251 = vpack.c.b16 %v1891, %v1883
    %v2252 = vpack.c.b16 %v1892, %v1884
    %v2253 = vpack.c.b16 %v1901, %v1893
    %v2254 = vpack.c.b16 %v1902, %v1894
    %v2255 = vpack.c.b16 %v1903, %v1895
    %v2256 = vpack.c.b16 %v1904, %v1896
    %v2257 = vpack.c.b16 %v1905, %v1897
    %v2258 = vpack.c.b16 %v1906, %v1898
    %v2259 = vpack.c.b16 %v1907, %v1899
    %v2260 = vpack.c.b16 %v1908, %v1900
    %v2261 = vpack.c.b16 %v1917, %v1909
    %v2262 = vpack.c.b16 %v1918, %v1910
    %v2263 = vpack.c.b16 %v1919, %v1911
    %v2264 = vpack.c.b16 %v1920, %v1912
    %v2265 = vpack.c.b16 %v1921, %v1913
    %v2266 = vpack.c.b16 %v1922, %v1914
    %v2267 = vpack.c.b16 %v1923, %v1915
    %v2268 = vpack.c.b16 %v1924, %v1916
    %v2269 = vpack.c.b16 %v1933, %v1925
    %v2270 = vpack.c.b16 %v1934, %v1926
    %v2271 = vpack.c.b16 %v1935, %v1927
    %v2272 = vpack.c.b16 %v1936, %v1928
    %v2273 = vpack.c.b16 %v1937, %v1929
    %v2274 = vpack.c.b16 %v1938, %v1930
    %v2275 = vpack.c.b16 %v1939, %v1931
    %v2276 = vpack.c.b16 %v1940, %v1932
    %v2277 = vpack.c.b16 %v1949, %v1941
    %v2278 = vpack.c.b16 %v1950, %v1942
    %v2279 = vpack.c.b16 %v1951, %v1943
    %v2280 = vpack.c.b16 %v1952, %v1944
    %v2281 = vpack.c.b16 %v1953, %v1945
    %v2282 = vpack.c.b16 %v1954, %v1946
    %v2283 = vpack.c.b16 %v1955, %v1947
    %v2284 = vpack.c.b16 %v1956, %v1948
    %v2285 = vpack.c.b16 %v1965, %v1957
    %v2286 = vpack.c.b16 %v1966, %v1958
    %v2287 = vpack.c.b16 %v1967, %v1959
    %v2288 = vpack.c.b16 %v1968, %v1960
    %v2289 = vpack.c.b16 %v1969, %v1961
    %v2290 = vpack.c.b16 %v1970, %v1962
    %v2291 = vpack.c.b16 %v1971, %v1963
    %v2292 = vpack.c.b16 %v1972, %v1964
    %v2293 = vpack.c.b16 %v1981, %v1973
    %v2294 = vpack.c.b16 %v1982, %v1974
    %v2295 = vpack.c.b16 %v1983, %v1975
    %v2296 = vpack.c.b16 %v1984, %v1976
    %v2297 = vpack.c.b16 %v1985, %v1977
    %v2298 = vpack.c.b16 %v1986, %v1978
    %v2299 = vpack.c.b16 %v1987, %v1979
    %v2300 = vpack.c.b16 %v1988, %v1980
    %v2301 = vpack.c.b16 %v1997, %v1989
    %v2302 = vpack.c.b16 %v1998, %v1990
    %v2303 = vpack.c.b16 %v1999, %v1991
    %v2304 = vpack.c.b16 %v2000, %v1992
    %v2305 = vpack.c.b16 %v2001, %v1993
    %v2306 = vpack.c.b16 %v2002, %v1994
    %v2307 = vpack.c.b16 %v2003, %v1995
    %v2308 = vpack.c.b16 %v2004, %v1996
    %v2309 = vpack.c.b16 %v2013, %v2005
    %v2310 = vpack.c.b16 %v2014, %v2006
    %v2311 = vpack.c.b16 %v2015, %v2007
    %v2312 = vpack.c.b16 %v2016, %v2008
    %v2313 = vpack.c.b16 %v2017, %v2009
    %v2314 = vpack.c.b16 %v2018, %v2010
    %v2315 = vpack.c.b16 %v2019, %v2011
    %v2316 = vpack.c.b16 %v2020, %v2012
    %v2317 = vpack.c.b16 %v2029, %v2021
    %v2318 = vpack.c.b16 %v2030, %v2022
    %v2319 = vpack.c.b16 %v2031, %v2023
    %v2320 = vpack.c.b16 %v2032, %v2024
    %v2321 = vpack.c.b16 %v2033, %v2025
    %v2322 = vpack.c.b16 %v2034, %v2026
    %v2323 = vpack.c.b16 %v2035, %v2027
    %v2324 = vpack.c.b16 %v2036, %v2028
    %v2325 = vpack.c.b16 %v2045, %v2037
    %v2326 = vpack.c.b16 %v2046, %v2038
    %v2327 = vpack.c.b16 %v2047, %v2039
    %v2328 = vpack.c.b16 %v2048, %v2040
    %v2329 = vpack.c.b16 %v2049, %v2041
    %v2330 = vpack.c.b16 %v2050, %v2042
    %v2331 = vpack.c.b16 %v2051, %v2043
    %v2332 = vpack.c.b16 %v2052, %v2044
    %v2333 = vpack.c.b16 %v2061, %v2053
    %v2334 = vpack.c.b16 %v2062, %v2054
    %v2335 = vpack.c.b16 %v2063, %v2055
    %v2336 = vpack.c.b16 %v2064, %v2056
    %v2337 = vpack.c.b16 %v2065, %v2057
    %v2338 = vpack.c.b16 %v2066, %v2058
    %v2339 = vpack.c.b16 %v2067, %v2059
    %v2340 = vpack.c.b16 %v2068, %v2060
    %v2341 = vpack.c.b16 %v2077, %v2069
    %v2342 = vpack.c.b16 %v2078, %v2070
    %v2343 = vpack.c.b16 %v2079, %v2071
    %v2344 = vpack.c.b16 %v2080, %v2072
    %v2345 = vpack.c.b16 %v2081, %v2073
    %v2346 = vpack.c.b16 %v2082, %v2074
    %v2347 = vpack.c.b16 %v2083, %v2075
    %v2348 = vpack.c.b16 %v2084, %v2076
    %v2349 = vpack.c.b16 %v2093, %v2085
    %v2350 = vpack.c.b16 %v2094, %v2086
    %v2351 = vpack.c.b16 %v2095, %v2087
    %v2352 = vpack.c.b16 %v2096, %v2088
    %v2353 = vpack.c.b16 %v2097, %v2089
    %v2354 = vpack.c.b16 %v2098, %v2090
    %v2355 = vpack.c.b16 %v2099, %v2091
    %v2356 = vpack.c.b16 %v2100, %v2092
    %2613 = vmatpush.bf16.msra.mxu0 %v2157
    %2614 = vmatpush.bf16.msra.mxu0 %v2149
    %2615 = vmatpush.bf16.msra.mxu0 %v2141
    %2616 = vmatpush.bf16.msra.mxu0 %v2133
    %2617 = vmatpush.bf16.msra.mxu0 %v2125
    %2618 = vmatpush.bf16.msra.mxu0 %v2117
    %2619 = vmatpush.bf16.msra.mxu0 %v2109
    %2620 = vmatpush.bf16.msra.mxu0 %v2101
    %2621 = vmatmul.bf16.gmra.mxu0 %v1329
    %v2622 = vpop.f32.mrf.mxu0
    %v2623 = vadd.f32 0.0, %v2622
    %v2624 = vpop.f32.mrf.mxu0
    %2625 = vdwg.mxu0
    %2626 = vmatpush.bf16.msra.mxu0 %v2221
    %2627 = vmatpush.bf16.msra.mxu0 %v2213
    %2628 = vmatpush.bf16.msra.mxu0 %v2205
    %2629 = vmatpush.bf16.msra.mxu0 %v2197
    %2630 = vmatpush.bf16.msra.mxu0 %v2189
    %2631 = vmatpush.bf16.msra.mxu0 %v2181
    %2632 = vmatpush.bf16.msra.mxu0 %v2173
    %2633 = vmatpush.bf16.msra.mxu0 %v2165
    %2634 = vmatmul.bf16.gmra.mxu0 %v1330
    %v2635 = vpop.f32.mrf.mxu0
    %v2636 = vadd.f32 %v2623, %v2635
    %v2637 = vpop.f32.mrf.mxu0
    %2638 = vdwg.mxu0
    %2639 = vmatpush.bf16.msra.mxu0 %v2285
    %2640 = vmatpush.bf16.msra.mxu0 %v2277
    %2641 = vmatpush.bf16.msra.mxu0 %v2269
    %2642 = vmatpush.bf16.msra.mxu0 %v2261
    %2643 = vmatpush.bf16.msra.mxu0 %v2253
    %2644 = vmatpush.bf16.msra.mxu0 %v2245
    %2645 = vmatpush.bf16.msra.mxu0 %v2237
    %2646 = vmatpush.bf16.msra.mxu0 %v2229
    %2647 = vmatmul.bf16.gmra.mxu0 %v1331
    %v2648 = vpop.f32.mrf.mxu0
    %v2649 = vadd.f32 %v2636, %v2648
    %v2650 = vpop.f32.mrf.mxu0
    %2651 = vdwg.mxu0
    %2652 = vmatpush.bf16.msra.mxu0 %v2349
    %2653 = vmatpush.bf16.msra.mxu0 %v2341
    %2654 = vmatpush.bf16.msra.mxu0 %v2333
    %2655 = vmatpush.bf16.msra.mxu0 %v2325
    %2656 = vmatpush.bf16.msra.mxu0 %v2317
    %2657 = vmatpush.bf16.msra.mxu0 %v2309
    %2658 = vmatpush.bf16.msra.mxu0 %v2301
    %2659 = vmatpush.bf16.msra.mxu0 %v2293
    %2660 = vmatmul.bf16.gmra.mxu0 %v1332
    %v2661 = vpop.f32.mrf.mxu0
    %v2662 = vadd.f32 %v2649, %v2661
    %v2663 = vpop.f32.mrf.mxu0
    %2664 = vdwg.mxu0
    %2665 = vmatpush.bf16.msra.mxu0 %v2158
    %2666 = vmatpush.bf16.msra.mxu0 %v2150
    %2667 = vmatpush.bf16.msra.mxu0 %v2142
    %2668 = vmatpush.bf16.msra.mxu0 %v2134
    %2669 = vmatpush.bf16.msra.mxu0 %v2126
    %2670 = vmatpush.bf16.msra.mxu0 %v2118
    %2671 = vmatpush.bf16.msra.mxu0 %v2110
    %2672 = vmatpush.bf16.msra.mxu0 %v2102
    %2673 = vmatmul.bf16.gmra.mxu0 %v1329
    %v2674 = vpop.f32.mrf.mxu0
    %v2675 = vadd.f32 0.0, %v2674
    %v2676 = vpop.f32.mrf.mxu0
    %2677 = vdwg.mxu0
    %2678 = vmatpush.bf16.msra.mxu0 %v2222
    %2679 = vmatpush.bf16.msra.mxu0 %v2214
    %2680 = vmatpush.bf16.msra.mxu0 %v2206
    %2681 = vmatpush.bf16.msra.mxu0 %v2198
    %2682 = vmatpush.bf16.msra.mxu0 %v2190
    %2683 = vmatpush.bf16.msra.mxu0 %v2182
    %2684 = vmatpush.bf16.msra.mxu0 %v2174
    %2685 = vmatpush.bf16.msra.mxu0 %v2166
    %2686 = vmatmul.bf16.gmra.mxu0 %v1330
    %v2687 = vpop.f32.mrf.mxu0
    %v2688 = vadd.f32 %v2675, %v2687
    %v2689 = vpop.f32.mrf.mxu0
    %2690 = vdwg.mxu0
    %2691 = vmatpush.bf16.msra.mxu0 %v2286
    %2692 = vmatpush.bf16.msra.mxu0 %v2278
    %2693 = vmatpush.bf16.msra.mxu0 %v2270
    %2694 = vmatpush.bf16.msra.mxu0 %v2262
    %2695 = vmatpush.bf16.msra.mxu0 %v2254
    %2696 = vmatpush.bf16.msra.mxu0 %v2246
    %2697 = vmatpush.bf16.msra.mxu0 %v2238
    %2698 = vmatpush.bf16.msra.mxu0 %v2230
    %2699 = vmatmul.bf16.gmra.mxu0 %v1331
    %v2700 = vpop.f32.mrf.mxu0
    %v2701 = vadd.f32 %v2688, %v2700
    %v2702 = vpop.f32.mrf.mxu0
    %2703 = vdwg.mxu0
    %2704 = vmatpush.bf16.msra.mxu0 %v2350
    %2705 = vmatpush.bf16.msra.mxu0 %v2342
    %2706 = vmatpush.bf16.msra.mxu0 %v2334
    %2707 = vmatpush.bf16.msra.mxu0 %v2326
    %2708 = vmatpush.bf16.msra.mxu0 %v2318
    %2709 = vmatpush.bf16.msra.mxu0 %v2310
    %2710 = vmatpush.bf16.msra.mxu0 %v2302
    %2711 = vmatpush.bf16.msra.mxu0 %v2294
    %2712 = vmatmul.bf16.gmra.mxu0 %v1332
    %v2713 = vpop.f32.mrf.mxu0
    %v2714 = vadd.f32 %v2701, %v2713
    %v2715 = vpop.f32.mrf.mxu0
    %2716 = vdwg.mxu0
    %2717 = vmatpush.bf16.msra.mxu0 %v2159
    %2718 = vmatpush.bf16.msra.mxu0 %v2151
    %2719 = vmatpush.bf16.msra.mxu0 %v2143
    %2720 = vmatpush.bf16.msra.mxu0 %v2135
    %2721 = vmatpush.bf16.msra.mxu0 %v2127
    %2722 = vmatpush.bf16.msra.mxu0 %v2119
    %2723 = vmatpush.bf16.msra.mxu0 %v2111
    %2724 = vmatpush.bf16.msra.mxu0 %v2103
    %2725 = vmatmul.bf16.gmra.mxu0 %v1329
    %v2726 = vpop.f32.mrf.mxu0
    %v2727 = vadd.f32 0.0, %v2726
    %v2728 = vpop.f32.mrf.mxu0
    %2729 = vdwg.mxu0
    %2730 = vmatpush.bf16.msra.mxu0 %v2223
    %2731 = vmatpush.bf16.msra.mxu0 %v2215
    %2732 = vmatpush.bf16.msra.mxu0 %v2207
    %2733 = vmatpush.bf16.msra.mxu0 %v2199
    %2734 = vmatpush.bf16.msra.mxu0 %v2191
    %2735 = vmatpush.bf16.msra.mxu0 %v2183
    %2736 = vmatpush.bf16.msra.mxu0 %v2175
    %2737 = vmatpush.bf16.msra.mxu0 %v2167
    %2738 = vmatmul.bf16.gmra.mxu0 %v1330
    %v2739 = vpop.f32.mrf.mxu0
    %v2740 = vadd.f32 %v2727, %v2739
    %v2741 = vpop.f32.mrf.mxu0
    %2742 = vdwg.mxu0
    %2743 = vmatpush.bf16.msra.mxu0 %v2287
    %2744 = vmatpush.bf16.msra.mxu0 %v2279
    %2745 = vmatpush.bf16.msra.mxu0 %v2271
    %2746 = vmatpush.bf16.msra.mxu0 %v2263
    %2747 = vmatpush.bf16.msra.mxu0 %v2255
    %2748 = vmatpush.bf16.msra.mxu0 %v2247
    %2749 = vmatpush.bf16.msra.mxu0 %v2239
    %2750 = vmatpush.bf16.msra.mxu0 %v2231
    %2751 = vmatmul.bf16.gmra.mxu0 %v1331
    %v2752 = vpop.f32.mrf.mxu0
    %v2753 = vadd.f32 %v2740, %v2752
    %v2754 = vpop.f32.mrf.mxu0
    %2755 = vdwg.mxu0
    %2756 = vmatpush.bf16.msra.mxu0 %v2351
    %2757 = vmatpush.bf16.msra.mxu0 %v2343
    %2758 = vmatpush.bf16.msra.mxu0 %v2335
    %2759 = vmatpush.bf16.msra.mxu0 %v2327
    %2760 = vmatpush.bf16.msra.mxu0 %v2319
    %2761 = vmatpush.bf16.msra.mxu0 %v2311
    %2762 = vmatpush.bf16.msra.mxu0 %v2303
    %2763 = vmatpush.bf16.msra.mxu0 %v2295
    %2764 = vmatmul.bf16.gmra.mxu0 %v1332
    %v2765 = vpop.f32.mrf.mxu0
    %v2766 = vadd.f32 %v2753, %v2765
    %v2767 = vpop.f32.mrf.mxu0
    %2768 = vdwg.mxu0
    %2769 = vmatpush.bf16.msra.mxu0 %v2160
    %2770 = vmatpush.bf16.msra.mxu0 %v2152
    %2771 = vmatpush.bf16.msra.mxu0 %v2144
    %2772 = vmatpush.bf16.msra.mxu0 %v2136
    %2773 = vmatpush.bf16.msra.mxu0 %v2128
    %2774 = vmatpush.bf16.msra.mxu0 %v2120
    %2775 = vmatpush.bf16.msra.mxu0 %v2112
    %2776 = vmatpush.bf16.msra.mxu0 %v2104
    %2777 = vmatmul.bf16.gmra.mxu0 %v1329
    %v2778 = vpop.f32.mrf.mxu0
    %v2779 = vadd.f32 0.0, %v2778
    %v2780 = vpop.f32.mrf.mxu0
    %2781 = vdwg.mxu0
    %2782 = vmatpush.bf16.msra.mxu0 %v2224
    %2783 = vmatpush.bf16.msra.mxu0 %v2216
    %2784 = vmatpush.bf16.msra.mxu0 %v2208
    %2785 = vmatpush.bf16.msra.mxu0 %v2200
    %2786 = vmatpush.bf16.msra.mxu0 %v2192
    %2787 = vmatpush.bf16.msra.mxu0 %v2184
    %2788 = vmatpush.bf16.msra.mxu0 %v2176
    %2789 = vmatpush.bf16.msra.mxu0 %v2168
    %2790 = vmatmul.bf16.gmra.mxu0 %v1330
    %v2791 = vpop.f32.mrf.mxu0
    %v2792 = vadd.f32 %v2779, %v2791
    %v2793 = vpop.f32.mrf.mxu0
    %2794 = vdwg.mxu0
    %2795 = vmatpush.bf16.msra.mxu0 %v2288
    %2796 = vmatpush.bf16.msra.mxu0 %v2280
    %2797 = vmatpush.bf16.msra.mxu0 %v2272
    %2798 = vmatpush.bf16.msra.mxu0 %v2264
    %2799 = vmatpush.bf16.msra.mxu0 %v2256
    %2800 = vmatpush.bf16.msra.mxu0 %v2248
    %2801 = vmatpush.bf16.msra.mxu0 %v2240
    %2802 = vmatpush.bf16.msra.mxu0 %v2232
    %2803 = vmatmul.bf16.gmra.mxu0 %v1331
    %v2804 = vpop.f32.mrf.mxu0
    %v2805 = vadd.f32 %v2792, %v2804
    %v2806 = vpop.f32.mrf.mxu0
    %2807 = vdwg.mxu0
    %2808 = vmatpush.bf16.msra.mxu0 %v2352
    %2809 = vmatpush.bf16.msra.mxu0 %v2344
    %2810 = vmatpush.bf16.msra.mxu0 %v2336
    %2811 = vmatpush.bf16.msra.mxu0 %v2328
    %2812 = vmatpush.bf16.msra.mxu0 %v2320
    %2813 = vmatpush.bf16.msra.mxu0 %v2312
    %2814 = vmatpush.bf16.msra.mxu0 %v2304
    %2815 = vmatpush.bf16.msra.mxu0 %v2296
    %2816 = vmatmul.bf16.gmra.mxu0 %v1332
    %v2817 = vpop.f32.mrf.mxu0
    %v2818 = vadd.f32 %v2805, %v2817
    %v2819 = vpop.f32.mrf.mxu0
    %2820 = vdwg.mxu0
    %2821 = vmatpush.bf16.msra.mxu0 %v2161
    %2822 = vmatpush.bf16.msra.mxu0 %v2153
    %2823 = vmatpush.bf16.msra.mxu0 %v2145
    %2824 = vmatpush.bf16.msra.mxu0 %v2137
    %2825 = vmatpush.bf16.msra.mxu0 %v2129
    %2826 = vmatpush.bf16.msra.mxu0 %v2121
    %2827 = vmatpush.bf16.msra.mxu0 %v2113
    %2828 = vmatpush.bf16.msra.mxu0 %v2105
    %2829 = vmatmul.bf16.gmra.mxu0 %v1329
    %v2830 = vpop.f32.mrf.mxu0
    %v2831 = vadd.f32 0.0, %v2830
    %v2832 = vpop.f32.mrf.mxu0
    %2833 = vdwg.mxu0
    %2834 = vmatpush.bf16.msra.mxu0 %v2225
    %2835 = vmatpush.bf16.msra.mxu0 %v2217
    %2836 = vmatpush.bf16.msra.mxu0 %v2209
    %2837 = vmatpush.bf16.msra.mxu0 %v2201
    %2838 = vmatpush.bf16.msra.mxu0 %v2193
    %2839 = vmatpush.bf16.msra.mxu0 %v2185
    %2840 = vmatpush.bf16.msra.mxu0 %v2177
    %2841 = vmatpush.bf16.msra.mxu0 %v2169
    %2842 = vmatmul.bf16.gmra.mxu0 %v1330
    %v2843 = vpop.f32.mrf.mxu0
    %v2844 = vadd.f32 %v2831, %v2843
    %v2845 = vpop.f32.mrf.mxu0
    %2846 = vdwg.mxu0
    %2847 = vmatpush.bf16.msra.mxu0 %v2289
    %2848 = vmatpush.bf16.msra.mxu0 %v2281
    %2849 = vmatpush.bf16.msra.mxu0 %v2273
    %2850 = vmatpush.bf16.msra.mxu0 %v2265
    %2851 = vmatpush.bf16.msra.mxu0 %v2257
    %2852 = vmatpush.bf16.msra.mxu0 %v2249
    %2853 = vmatpush.bf16.msra.mxu0 %v2241
    %2854 = vmatpush.bf16.msra.mxu0 %v2233
    %2855 = vmatmul.bf16.gmra.mxu0 %v1331
    %v2856 = vpop.f32.mrf.mxu0
    %v2857 = vadd.f32 %v2844, %v2856
    %v2858 = vpop.f32.mrf.mxu0
    %2859 = vdwg.mxu0
    %2860 = vmatpush.bf16.msra.mxu0 %v2353
    %2861 = vmatpush.bf16.msra.mxu0 %v2345
    %2862 = vmatpush.bf16.msra.mxu0 %v2337
    %2863 = vmatpush.bf16.msra.mxu0 %v2329
    %2864 = vmatpush.bf16.msra.mxu0 %v2321
    %2865 = vmatpush.bf16.msra.mxu0 %v2313
    %2866 = vmatpush.bf16.msra.mxu0 %v2305
    %2867 = vmatpush.bf16.msra.mxu0 %v2297
    %2868 = vmatmul.bf16.gmra.mxu0 %v1332
    %v2869 = vpop.f32.mrf.mxu0
    %v2870 = vadd.f32 %v2857, %v2869
    %v2871 = vpop.f32.mrf.mxu0
    %2872 = vdwg.mxu0
    %2873 = vmatpush.bf16.msra.mxu0 %v2162
    %2874 = vmatpush.bf16.msra.mxu0 %v2154
    %2875 = vmatpush.bf16.msra.mxu0 %v2146
    %2876 = vmatpush.bf16.msra.mxu0 %v2138
    %2877 = vmatpush.bf16.msra.mxu0 %v2130
    %2878 = vmatpush.bf16.msra.mxu0 %v2122
    %2879 = vmatpush.bf16.msra.mxu0 %v2114
    %2880 = vmatpush.bf16.msra.mxu0 %v2106
    %2881 = vmatmul.bf16.gmra.mxu0 %v1329
    %v2882 = vpop.f32.mrf.mxu0
    %v2883 = vadd.f32 0.0, %v2882
    %v2884 = vpop.f32.mrf.mxu0
    %2885 = vdwg.mxu0
    %2886 = vmatpush.bf16.msra.mxu0 %v2226
    %2887 = vmatpush.bf16.msra.mxu0 %v2218
    %2888 = vmatpush.bf16.msra.mxu0 %v2210
    %2889 = vmatpush.bf16.msra.mxu0 %v2202
    %2890 = vmatpush.bf16.msra.mxu0 %v2194
    %2891 = vmatpush.bf16.msra.mxu0 %v2186
    %2892 = vmatpush.bf16.msra.mxu0 %v2178
    %2893 = vmatpush.bf16.msra.mxu0 %v2170
    %2894 = vmatmul.bf16.gmra.mxu0 %v1330
    %v2895 = vpop.f32.mrf.mxu0
    %v2896 = vadd.f32 %v2883, %v2895
    %v2897 = vpop.f32.mrf.mxu0
    %2898 = vdwg.mxu0
    %2899 = vmatpush.bf16.msra.mxu0 %v2290
    %2900 = vmatpush.bf16.msra.mxu0 %v2282
    %2901 = vmatpush.bf16.msra.mxu0 %v2274
    %2902 = vmatpush.bf16.msra.mxu0 %v2266
    %2903 = vmatpush.bf16.msra.mxu0 %v2258
    %2904 = vmatpush.bf16.msra.mxu0 %v2250
    %2905 = vmatpush.bf16.msra.mxu0 %v2242
    %2906 = vmatpush.bf16.msra.mxu0 %v2234
    %2907 = vmatmul.bf16.gmra.mxu0 %v1331
    %v2908 = vpop.f32.mrf.mxu0
    %v2909 = vadd.f32 %v2896, %v2908
    %v2910 = vpop.f32.mrf.mxu0
    %2911 = vdwg.mxu0
    %2912 = vmatpush.bf16.msra.mxu0 %v2354
    %2913 = vmatpush.bf16.msra.mxu0 %v2346
    %2914 = vmatpush.bf16.msra.mxu0 %v2338
    %2915 = vmatpush.bf16.msra.mxu0 %v2330
    %2916 = vmatpush.bf16.msra.mxu0 %v2322
    %2917 = vmatpush.bf16.msra.mxu0 %v2314
    %2918 = vmatpush.bf16.msra.mxu0 %v2306
    %2919 = vmatpush.bf16.msra.mxu0 %v2298
    %2920 = vmatmul.bf16.gmra.mxu0 %v1332
    %v2921 = vpop.f32.mrf.mxu0
    %v2922 = vadd.f32 %v2909, %v2921
    %v2923 = vpop.f32.mrf.mxu0
    %2924 = vdwg.mxu0
    %2925 = vmatpush.bf16.msra.mxu0 %v2163
    %2926 = vmatpush.bf16.msra.mxu0 %v2155
    %2927 = vmatpush.bf16.msra.mxu0 %v2147
    %2928 = vmatpush.bf16.msra.mxu0 %v2139
    %2929 = vmatpush.bf16.msra.mxu0 %v2131
    %2930 = vmatpush.bf16.msra.mxu0 %v2123
    %2931 = vmatpush.bf16.msra.mxu0 %v2115
    %2932 = vmatpush.bf16.msra.mxu0 %v2107
    %2933 = vmatmul.bf16.gmra.mxu0 %v1329
    %v2934 = vpop.f32.mrf.mxu0
    %v2935 = vadd.f32 0.0, %v2934
    %v2936 = vpop.f32.mrf.mxu0
    %2937 = vdwg.mxu0
    %2938 = vmatpush.bf16.msra.mxu0 %v2227
    %2939 = vmatpush.bf16.msra.mxu0 %v2219
    %2940 = vmatpush.bf16.msra.mxu0 %v2211
    %2941 = vmatpush.bf16.msra.mxu0 %v2203
    %2942 = vmatpush.bf16.msra.mxu0 %v2195
    %2943 = vmatpush.bf16.msra.mxu0 %v2187
    %2944 = vmatpush.bf16.msra.mxu0 %v2179
    %2945 = vmatpush.bf16.msra.mxu0 %v2171
    %2946 = vmatmul.bf16.gmra.mxu0 %v1330
    %v2947 = vpop.f32.mrf.mxu0
    %v2948 = vadd.f32 %v2935, %v2947
    %v2949 = vpop.f32.mrf.mxu0
    %2950 = vdwg.mxu0
    %2951 = vmatpush.bf16.msra.mxu0 %v2291
    %2952 = vmatpush.bf16.msra.mxu0 %v2283
    %2953 = vmatpush.bf16.msra.mxu0 %v2275
    %2954 = vmatpush.bf16.msra.mxu0 %v2267
    %2955 = vmatpush.bf16.msra.mxu0 %v2259
    %2956 = vmatpush.bf16.msra.mxu0 %v2251
    %2957 = vmatpush.bf16.msra.mxu0 %v2243
    %2958 = vmatpush.bf16.msra.mxu0 %v2235
    %2959 = vmatmul.bf16.gmra.mxu0 %v1331
    %v2960 = vpop.f32.mrf.mxu0
    %v2961 = vadd.f32 %v2948, %v2960
    %v2962 = vpop.f32.mrf.mxu0
    %2963 = vdwg.mxu0
    %2964 = vmatpush.bf16.msra.mxu0 %v2355
    %2965 = vmatpush.bf16.msra.mxu0 %v2347
    %2966 = vmatpush.bf16.msra.mxu0 %v2339
    %2967 = vmatpush.bf16.msra.mxu0 %v2331
    %2968 = vmatpush.bf16.msra.mxu0 %v2323
    %2969 = vmatpush.bf16.msra.mxu0 %v2315
    %2970 = vmatpush.bf16.msra.mxu0 %v2307
    %2971 = vmatpush.bf16.msra.mxu0 %v2299
    %2972 = vmatmul.bf16.gmra.mxu0 %v1332
    %v2973 = vpop.f32.mrf.mxu0
    %v2974 = vadd.f32 %v2961, %v2973
    %v2975 = vpop.f32.mrf.mxu0
    %2976 = vdwg.mxu0
    %2977 = vmatpush.bf16.msra.mxu0 %v2164
    %2978 = vmatpush.bf16.msra.mxu0 %v2156
    %2979 = vmatpush.bf16.msra.mxu0 %v2148
    %2980 = vmatpush.bf16.msra.mxu0 %v2140
    %2981 = vmatpush.bf16.msra.mxu0 %v2132
    %2982 = vmatpush.bf16.msra.mxu0 %v2124
    %2983 = vmatpush.bf16.msra.mxu0 %v2116
    %2984 = vmatpush.bf16.msra.mxu0 %v2108
    %2985 = vmatmul.bf16.gmra.mxu0 %v1329
    %v2986 = vpop.f32.mrf.mxu0
    %v2987 = vadd.f32 0.0, %v2986
    %v2988 = vpop.f32.mrf.mxu0
    %2989 = vdwg.mxu0
    %2990 = vmatpush.bf16.msra.mxu0 %v2228
    %2991 = vmatpush.bf16.msra.mxu0 %v2220
    %2992 = vmatpush.bf16.msra.mxu0 %v2212
    %2993 = vmatpush.bf16.msra.mxu0 %v2204
    %2994 = vmatpush.bf16.msra.mxu0 %v2196
    %2995 = vmatpush.bf16.msra.mxu0 %v2188
    %2996 = vmatpush.bf16.msra.mxu0 %v2180
    %2997 = vmatpush.bf16.msra.mxu0 %v2172
    %2998 = vmatmul.bf16.gmra.mxu0 %v1330
    %v2999 = vpop.f32.mrf.mxu0
    %v3000 = vadd.f32 %v2987, %v2999
    %v3001 = vpop.f32.mrf.mxu0
    %3002 = vdwg.mxu0
    %3003 = vmatpush.bf16.msra.mxu0 %v2292
    %3004 = vmatpush.bf16.msra.mxu0 %v2284
    %3005 = vmatpush.bf16.msra.mxu0 %v2276
    %3006 = vmatpush.bf16.msra.mxu0 %v2268
    %3007 = vmatpush.bf16.msra.mxu0 %v2260
    %3008 = vmatpush.bf16.msra.mxu0 %v2252
    %3009 = vmatpush.bf16.msra.mxu0 %v2244
    %3010 = vmatpush.bf16.msra.mxu0 %v2236
    %3011 = vmatmul.bf16.gmra.mxu0 %v1331
    %v3012 = vpop.f32.mrf.mxu0
    %v3013 = vadd.f32 %v3000, %v3012
    %v3014 = vpop.f32.mrf.mxu0
    %3015 = vdwg.mxu0
    %3016 = vmatpush.bf16.msra.mxu0 %v2356
    %3017 = vmatpush.bf16.msra.mxu0 %v2348
    %3018 = vmatpush.bf16.msra.mxu0 %v2340
    %3019 = vmatpush.bf16.msra.mxu0 %v2332
    %3020 = vmatpush.bf16.msra.mxu0 %v2324
    %3021 = vmatpush.bf16.msra.mxu0 %v2316
    %3022 = vmatpush.bf16.msra.mxu0 %v2308
    %3023 = vmatpush.bf16.msra.mxu0 %v2300
    %3024 = vmatmul.bf16.gmra.mxu0 %v1332
    %v3025 = vpop.f32.mrf.mxu0
    %v3026 = vadd.f32 %v3013, %v3025
    %v3027 = vpop.f32.mrf.mxu0
    %3028 = vdwg.mxu0
    %v3029 = vrot.slane %v2662, 4
    %v3030 = vadd.f32 %v2662, %v3029
    %v3031 = vrot.slane %v3030, 2
    %v3032 = vadd.f32 %v3030, %v3031
    %v3033 = vrot.slane %v3032, 1
    %v3034 = vadd.f32 %v3032, %v3033
    %v3035 = vrot.slane %v2714, 4
    %v3036 = vadd.f32 %v2714, %v3035
    %v3037 = vrot.slane %v3036, 2
    %v3038 = vadd.f32 %v3036, %v3037
    %v3039 = vrot.slane %v3038, 1
    %v3040 = vadd.f32 %v3038, %v3039
    %v3041 = vrot.slane %v2766, 4
    %v3042 = vadd.f32 %v2766, %v3041
    %v3043 = vrot.slane %v3042, 2
    %v3044 = vadd.f32 %v3042, %v3043
    %v3045 = vrot.slane %v3044, 1
    %v3046 = vadd.f32 %v3044, %v3045
    %v3047 = vrot.slane %v2818, 4
    %v3048 = vadd.f32 %v2818, %v3047
    %v3049 = vrot.slane %v3048, 2
    %v3050 = vadd.f32 %v3048, %v3049
    %v3051 = vrot.slane %v3050, 1
    %v3052 = vadd.f32 %v3050, %v3051
    %v3053 = vrot.slane %v2870, 4
    %v3054 = vadd.f32 %v2870, %v3053
    %v3055 = vrot.slane %v3054, 2
    %v3056 = vadd.f32 %v3054, %v3055
    %v3057 = vrot.slane %v3056, 1
    %v3058 = vadd.f32 %v3056, %v3057
    %v3059 = vrot.slane %v2922, 4
    %v3060 = vadd.f32 %v2922, %v3059
    %v3061 = vrot.slane %v3060, 2
    %v3062 = vadd.f32 %v3060, %v3061
    %v3063 = vrot.slane %v3062, 1
    %v3064 = vadd.f32 %v3062, %v3063
    %v3065 = vrot.slane %v2974, 4
    %v3066 = vadd.f32 %v2974, %v3065
    %v3067 = vrot.slane %v3066, 2
    %v3068 = vadd.f32 %v3066, %v3067
    %v3069 = vrot.slane %v3068, 1
    %v3070 = vadd.f32 %v3068, %v3069
    %v3071 = vrot.slane %v3026, 4
    %v3072 = vadd.f32 %v3026, %v3071
    %v3073 = vrot.slane %v3072, 2
    %v3074 = vadd.f32 %v3072, %v3073
    %v3075 = vrot.slane %v3074, 1
    %v3076 = vadd.f32 %v3074, %v3075
    %v3077 = vmul.f32 %v3034, %v325
    %v3078 = vmul.f32 %v3040, %v325
    %v3079 = vmul.f32 %v3046, %v325
    %v3080 = vmul.f32 %v3052, %v325
    %v3081 = vmul.f32 %v3058, %v325
    %v3082 = vmul.f32 %v3064, %v325
    %v3083 = vmul.f32 %v3070, %v325
    %v3084 = vmul.f32 %v3076, %v325
    %v3085 = vsub.f32 %v2662, %v3077
    %v3086 = vsub.f32 %v2714, %v3078
    %v3087 = vsub.f32 %v2766, %v3079
    %v3088 = vsub.f32 %v2818, %v3080
    %v3089 = vsub.f32 %v2870, %v3081
    %v3090 = vsub.f32 %v2922, %v3082
    %v3091 = vsub.f32 %v2974, %v3083
    %v3092 = vsub.f32 %v3026, %v3084
    %v3093 = vmul.f32 %v3085, %v3085
    %v3094 = vmul.f32 %v3086, %v3086
    %v3095 = vmul.f32 %v3087, %v3087
    %v3096 = vmul.f32 %v3088, %v3088
    %v3097 = vmul.f32 %v3089, %v3089
    %v3098 = vmul.f32 %v3090, %v3090
    %v3099 = vmul.f32 %v3091, %v3091
    %v3100 = vmul.f32 %v3092, %v3092
    %v3101 = vrot.slane %v3093, 4
    %v3102 = vadd.f32 %v3093, %v3101
    %v3103 = vrot.slane %v3102, 2
    %v3104 = vadd.f32 %v3102, %v3103
    %v3105 = vrot.slane %v3104, 1
    %v3106 = vadd.f32 %v3104, %v3105
    %v3107 = vrot.slane %v3094, 4
    %v3108 = vadd.f32 %v3094, %v3107
    %v3109 = vrot.slane %v3108, 2
    %v3110 = vadd.f32 %v3108, %v3109
    %v3111 = vrot.slane %v3110, 1
    %v3112 = vadd.f32 %v3110, %v3111
    %v3113 = vrot.slane %v3095, 4
    %v3114 = vadd.f32 %v3095, %v3113
    %v3115 = vrot.slane %v3114, 2
    %v3116 = vadd.f32 %v3114, %v3115
    %v3117 = vrot.slane %v3116, 1
    %v3118 = vadd.f32 %v3116, %v3117
    %v3119 = vrot.slane %v3096, 4
    %v3120 = vadd.f32 %v3096, %v3119
    %v3121 = vrot.slane %v3120, 2
    %v3122 = vadd.f32 %v3120, %v3121
    %v3123 = vrot.slane %v3122, 1
    %v3124 = vadd.f32 %v3122, %v3123
    %v3125 = vrot.slane %v3097, 4
    %v3126 = vadd.f32 %v3097, %v3125
    %v3127 = vrot.slane %v3126, 2
    %v3128 = vadd.f32 %v3126, %v3127
    %v3129 = vrot.slane %v3128, 1
    %v3130 = vadd.f32 %v3128, %v3129
    %v3131 = vrot.slane %v3098, 4
    %v3132 = vadd.f32 %v3098, %v3131
    %v3133 = vrot.slane %v3132, 2
    %v3134 = vadd.f32 %v3132, %v3133
    %v3135 = vrot.slane %v3134, 1
    %v3136 = vadd.f32 %v3134, %v3135
    %v3137 = vrot.slane %v3099, 4
    %v3138 = vadd.f32 %v3099, %v3137
    %v3139 = vrot.slane %v3138, 2
    %v3140 = vadd.f32 %v3138, %v3139
    %v3141 = vrot.slane %v3140, 1
    %v3142 = vadd.f32 %v3140, %v3141
    %v3143 = vrot.slane %v3100, 4
    %v3144 = vadd.f32 %v3100, %v3143
    %v3145 = vrot.slane %v3144, 2
    %v3146 = vadd.f32 %v3144, %v3145
    %v3147 = vrot.slane %v3146, 1
    %v3148 = vadd.f32 %v3146, %v3147
    %v3149 = vmul.f32 %v3106, %v325
    %v3150 = vmul.f32 %v3112, %v325
    %v3151 = vmul.f32 %v3118, %v325
    %v3152 = vmul.f32 %v3124, %v325
    %v3153 = vmul.f32 %v3130, %v325
    %v3154 = vmul.f32 %v3136, %v325
    %v3155 = vmul.f32 %v3142, %v325
    %v3156 = vmul.f32 %v3148, %v325
    %v3157 = vadd.f32 %v3149, 1e-05
    %v3158 = vadd.f32 %v3150, 1e-05
    %v3159 = vadd.f32 %v3151, 1e-05
    %v3160 = vadd.f32 %v3152, 1e-05
    %v3161 = vadd.f32 %v3153, 1e-05
    %v3162 = vadd.f32 %v3154, 1e-05
    %v3163 = vadd.f32 %v3155, 1e-05
    %v3164 = vadd.f32 %v3156, 1e-05
    %v3165 = vrsqrt.pop %v3157
    %v3166 = vmul.f32 %v3165, %v3157
    %v3167 = vmul.f32 %v3166, %v3165
    %v3168 = vmul.f32 0.5, %v3167
    %v3169 = vsub.f32 1.5, %v3168
    %v3170 = vmul.f32 %v3165, %v3169
    %vm3171 = vweird.f32 %v3157
    %vm3172 = vweird.f32 %v3165
    %vm3173 = vmor %vm3171, %vm3172
    %v3174 = vsel %vm3173, %v3165, %v3170
    %v3175 = vrsqrt.pop %v3158
    %v3176 = vmul.f32 %v3175, %v3158
    %v3177 = vmul.f32 %v3176, %v3175
    %v3178 = vmul.f32 0.5, %v3177
    %v3179 = vsub.f32 1.5, %v3178
    %v3180 = vmul.f32 %v3175, %v3179
    %vm3181 = vweird.f32 %v3158
    %vm3182 = vweird.f32 %v3175
    %vm3183 = vmor %vm3181, %vm3182
    %v3184 = vsel %vm3183, %v3175, %v3180
    %v3185 = vrsqrt.pop %v3159
    %v3186 = vmul.f32 %v3185, %v3159
    %v3187 = vmul.f32 %v3186, %v3185
    %v3188 = vmul.f32 0.5, %v3187
    %v3189 = vsub.f32 1.5, %v3188
    %v3190 = vmul.f32 %v3185, %v3189
    %vm3191 = vweird.f32 %v3159
    %vm3192 = vweird.f32 %v3185
    %vm3193 = vmor %vm3191, %vm3192
    %v3194 = vsel %vm3193, %v3185, %v3190
    %v3195 = vrsqrt.pop %v3160
    %v3196 = vmul.f32 %v3195, %v3160
    %v3197 = vmul.f32 %v3196, %v3195
    %v3198 = vmul.f32 0.5, %v3197
    %v3199 = vsub.f32 1.5, %v3198
    %v3200 = vmul.f32 %v3195, %v3199
    %vm3201 = vweird.f32 %v3160
    %vm3202 = vweird.f32 %v3195
    %vm3203 = vmor %vm3201, %vm3202
    %v3204 = vsel %vm3203, %v3195, %v3200
    %v3205 = vrsqrt.pop %v3161
    %v3206 = vmul.f32 %v3205, %v3161
    %v3207 = vmul.f32 %v3206, %v3205
    %v3208 = vmul.f32 0.5, %v3207
    %v3209 = vsub.f32 1.5, %v3208
    %v3210 = vmul.f32 %v3205, %v3209
    %vm3211 = vweird.f32 %v3161
    %vm3212 = vweird.f32 %v3205
    %vm3213 = vmor %vm3211, %vm3212
    %v3214 = vsel %vm3213, %v3205, %v3210
    %v3215 = vrsqrt.pop %v3162
    %v3216 = vmul.f32 %v3215, %v3162
    %v3217 = vmul.f32 %v3216, %v3215
    %v3218 = vmul.f32 0.5, %v3217
    %v3219 = vsub.f32 1.5, %v3218
    %v3220 = vmul.f32 %v3215, %v3219
    %vm3221 = vweird.f32 %v3162
    %vm3222 = vweird.f32 %v3215
    %vm3223 = vmor %vm3221, %vm3222
    %v3224 = vsel %vm3223, %v3215, %v3220
    %v3225 = vrsqrt.pop %v3163
    %v3226 = vmul.f32 %v3225, %v3163
    %v3227 = vmul.f32 %v3226, %v3225
    %v3228 = vmul.f32 0.5, %v3227
    %v3229 = vsub.f32 1.5, %v3228
    %v3230 = vmul.f32 %v3225, %v3229
    %vm3231 = vweird.f32 %v3163
    %vm3232 = vweird.f32 %v3225
    %vm3233 = vmor %vm3231, %vm3232
    %v3234 = vsel %vm3233, %v3225, %v3230
    %v3235 = vrsqrt.pop %v3164
    %v3236 = vmul.f32 %v3235, %v3164
    %v3237 = vmul.f32 %v3236, %v3235
    %v3238 = vmul.f32 0.5, %v3237
    %v3239 = vsub.f32 1.5, %v3238
    %v3240 = vmul.f32 %v3235, %v3239
    %vm3241 = vweird.f32 %v3164
    %vm3242 = vweird.f32 %v3235
    %vm3243 = vmor %vm3241, %vm3242
    %v3244 = vsel %vm3243, %v3235, %v3240
    %v3253 = vrot.slane %v3184, 7
    %v3254 = vrot.slane %v3194, 6
    %v3255 = vrot.slane %v3204, 5
    %v3256 = vrot.slane %v3214, 4
    %v3257 = vrot.slane %v3224, 3
    %v3258 = vrot.slane %v3234, 2
    %v3259 = vrot.slane %v3244, 1
    %v3260 = vsel %vm371, %v3174, %v3253
    %v3261 = vsel %vm1009, %v3254, %v3255
    %v3262 = vsel %vm1011, %v3260, %v3261
    %vm3263 = vcmask 1044484
    %v3264 = vsel %vm3263, %v3256, %v3257
    %vm3265 = vcmask 1046534
    %v3266 = vsel %vm3265, %v3258, %v3259
    %vm3267 = vcmask 1045508
    %v3268 = vsel %vm3267, %v3264, %v3266
    %vm3269 = vcmask 1043456
    %v3270 = vsel %vm3269, %v3262, %v3268
    %v3272 = vmul.f32 %v141, %v3270
    %v3274 = vperm.slane %v3272, 0
    %v3275 = vperm.slane %v3272, 1
    %v3276 = vperm.slane %v3272, 2
    %v3277 = vperm.slane %v3272, 3
    %v3278 = vperm.slane %v3272, 4
    %v3279 = vperm.slane %v3272, 5
    %v3280 = vperm.slane %v3272, 6
    %v3281 = vperm.slane %v3272, 7
    %v3290 = vmul.f32 %v3077, %v3274
    %v3291 = vmul.f32 %v3078, %v3275
    %v3292 = vmul.f32 %v3079, %v3276
    %v3293 = vmul.f32 %v3080, %v3277
    %v3294 = vmul.f32 %v3081, %v3278
    %v3295 = vmul.f32 %v3082, %v3279
    %v3296 = vmul.f32 %v3083, %v3280
    %v3297 = vmul.f32 %v3084, %v3281
    %v3306 = vrot.slane %v3291, 7
    %v3307 = vrot.slane %v3292, 6
    %v3308 = vrot.slane %v3293, 5
    %v3309 = vrot.slane %v3294, 4
    %v3310 = vrot.slane %v3295, 3
    %v3311 = vrot.slane %v3296, 2
    %v3312 = vrot.slane %v3297, 1
    %v3313 = vsel %vm371, %v3290, %v3306
    %v3314 = vsel %vm1009, %v3307, %v3308
    %v3315 = vsel %vm1011, %v3313, %v3314
    %v3316 = vsel %vm3263, %v3309, %v3310
    %v3317 = vsel %vm3265, %v3311, %v3312
    %v3318 = vsel %vm3267, %v3316, %v3317
    %v3319 = vsel %vm3269, %v3315, %v3318
    %v3321 = vsub.f32 %v145, %v3319
    %v3322 = vmul.f32 %v2662, %v3274
    %v3323 = vmul.f32 %v2714, %v3275
    %v3324 = vmul.f32 %v2766, %v3276
    %v3325 = vmul.f32 %v2818, %v3277
    %v3326 = vmul.f32 %v2870, %v3278
    %v3327 = vmul.f32 %v2922, %v3279
    %v3328 = vmul.f32 %v2974, %v3280
    %v3329 = vmul.f32 %v3026, %v3281
    %v3331 = vperm.slane %v3321, 0
    %v3332 = vperm.slane %v3321, 1
    %v3333 = vperm.slane %v3321, 2
    %v3334 = vperm.slane %v3321, 3
    %v3335 = vperm.slane %v3321, 4
    %v3336 = vperm.slane %v3321, 5
    %v3337 = vperm.slane %v3321, 6
    %v3338 = vperm.slane %v3321, 7
    %v3347 = vadd.f32 %v3322, %v3331
    %v3348 = vadd.f32 %v3323, %v3332
    %v3349 = vadd.f32 %v3324, %v3333
    %v3350 = vadd.f32 %v3325, %v3334
    %v3351 = vadd.f32 %v3326, %v3335
    %v3352 = vadd.f32 %v3327, %v3336
    %v3353 = vadd.f32 %v3328, %v3337
    %v3354 = vadd.f32 %v3329, %v3338
    %vm3355 = vcmp.gt.f32.partialorder %v3347, 0.0
    %vm3356 = vcmp.gt.f32.partialorder %v3348, 0.0
    %vm3357 = vcmp.gt.f32.partialorder %v3349, 0.0
    %vm3358 = vcmp.gt.f32.partialorder %v3350, 0.0
    %vm3359 = vcmp.gt.f32.partialorder %v3351, 0.0
    %vm3360 = vcmp.gt.f32.partialorder %v3352, 0.0
    %vm3361 = vcmp.gt.f32.partialorder %v3353, 0.0
    %vm3362 = vcmp.gt.f32.partialorder %v3354, 0.0
    %v3363 = vmul.f32 %v3347, 0.2
    %v3364 = vmul.f32 %v3348, 0.2
    %v3365 = vmul.f32 %v3349, 0.2
    %v3366 = vmul.f32 %v3350, 0.2
    %v3367 = vmul.f32 %v3351, 0.2
    %v3368 = vmul.f32 %v3352, 0.2
    %v3369 = vmul.f32 %v3353, 0.2
    %v3370 = vmul.f32 %v3354, 0.2
    %v3371 = vsel %vm3355, %v3347, %v3363
    %v3372 = vsel %vm3356, %v3348, %v3364
    %v3373 = vsel %vm3357, %v3349, %v3365
    %v3374 = vsel %vm3358, %v3350, %v3366
    %v3375 = vsel %vm3359, %v3351, %v3367
    %v3376 = vsel %vm3360, %v3352, %v3368
    %v3377 = vsel %vm3361, %v3353, %v3369
    %v3378 = vsel %vm3362, %v3354, %v3370
    %s3379 = smul.u32 4, 128
    %s3380 = smul.u32 %s3379, 7
    %s3381 = sshll.u32 %s3380, 4
    %3382 = dma.done %s111, %s3381
    %v3383 = vld [vmem:[#allocation3] sm:$0xff]
    %v3384 = vld [vmem:[#allocation3 + $0x8] sm:$0xff]
    %v3385 = vld [vmem:[#allocation3 + $0x10] sm:$0xff]
    %v3386 = vld [vmem:[#allocation3 + $0x18] sm:$0xf]
    %v3387 = vld [vmem:[#allocation3 + $0x1c] sm:$0xff]
    %v3388 = vld [vmem:[#allocation3 + $0x24] sm:$0xff]
    %v3389 = vld [vmem:[#allocation3 + $0x2c] sm:$0xff]
    %v3390 = vld [vmem:[#allocation3 + $0x34] sm:$0xf]
    %v3391 = vld [vmem:[#allocation3 + $0x38] sm:$0xff]
    %v3392 = vld [vmem:[#allocation3 + $0x40] sm:$0xff]
    %v3393 = vld [vmem:[#allocation3 + $0x48] sm:$0xff]
    %v3394 = vld [vmem:[#allocation3 + $0x50] sm:$0xf]
    %v3395 = vld [vmem:[#allocation3 + $0x54] sm:$0xff]
    %v3396 = vld [vmem:[#allocation3 + $0x5c] sm:$0xff]
    %v3397 = vld [vmem:[#allocation3 + $0x64] sm:$0xff]
    %v3398 = vld [vmem:[#allocation3 + $0x6c] sm:$0xf]
    %v3399 = vld [vmem:[#allocation3 + $0x70] sm:$0xff]
    %v3400 = vld [vmem:[#allocation3 + $0x78] sm:$0xff]
    %v3401 = vld [vmem:[#allocation3 + $0x80] sm:$0xff]
    %v3402 = vld [vmem:[#allocation3 + $0x88] sm:$0xf]
    %v3403 = vld [vmem:[#allocation3 + $0x8c] sm:$0xff]
    %v3404 = vld [vmem:[#allocation3 + $0x94] sm:$0xff]
    %v3405 = vld [vmem:[#allocation3 + $0x9c] sm:$0xff]
    %v3406 = vld [vmem:[#allocation3 + $0xa4] sm:$0xf]
    %v3407 = vld [vmem:[#allocation3 + $0xa8] sm:$0xff]
    %v3408 = vld [vmem:[#allocation3 + $0xb0] sm:$0xff]
    %v3409 = vld [vmem:[#allocation3 + $0xb8] sm:$0xff]
    %v3410 = vld [vmem:[#allocation3 + $0xc0] sm:$0xf]
    %v3411 = vld [vmem:[#allocation3 + $0xc4] sm:$0xff]
    %v3412 = vld [vmem:[#allocation3 + $0xcc] sm:$0xff]
    %v3413 = vld [vmem:[#allocation3 + $0xd4] sm:$0xff]
    %v3414 = vld [vmem:[#allocation3 + $0xdc] sm:$0xf]
    %v3415 = vld [vmem:[#allocation3 + $0xe0] sm:$0xff]
    %v3416 = vld [vmem:[#allocation3 + $0xe8] sm:$0xff]
    %v3417 = vld [vmem:[#allocation3 + $0xf0] sm:$0xff]
    %v3418 = vld [vmem:[#allocation3 + $0xf8] sm:$0xf]
    %v3419 = vld [vmem:[#allocation3 + $0xfc] sm:$0xff]
    %v3420 = vld [vmem:[#allocation3 + $0x104] sm:$0xff]
    %v3421 = vld [vmem:[#allocation3 + $0x10c] sm:$0xff]
    %v3422 = vld [vmem:[#allocation3 + $0x114] sm:$0xf]
    %v3423 = vld [vmem:[#allocation3 + $0x118] sm:$0xff]
    %v3424 = vld [vmem:[#allocation3 + $0x120] sm:$0xff]
    %v3425 = vld [vmem:[#allocation3 + $0x128] sm:$0xff]
    %v3426 = vld [vmem:[#allocation3 + $0x130] sm:$0xf]
    %v3427 = vld [vmem:[#allocation3 + $0x134] sm:$0xff]
    %v3428 = vld [vmem:[#allocation3 + $0x13c] sm:$0xff]
    %v3429 = vld [vmem:[#allocation3 + $0x144] sm:$0xff]
    %v3430 = vld [vmem:[#allocation3 + $0x14c] sm:$0xf]
    %v3431 = vld [vmem:[#allocation3 + $0x150] sm:$0xff]
    %v3432 = vld [vmem:[#allocation3 + $0x158] sm:$0xff]
    %v3433 = vld [vmem:[#allocation3 + $0x160] sm:$0xff]
    %v3434 = vld [vmem:[#allocation3 + $0x168] sm:$0xf]
    %v3435 = vld [vmem:[#allocation3 + $0x16c] sm:$0xff]
    %v3436 = vld [vmem:[#allocation3 + $0x174] sm:$0xff]
    %v3437 = vld [vmem:[#allocation3 + $0x17c] sm:$0xff]
    %v3438 = vld [vmem:[#allocation3 + $0x184] sm:$0xf]
    %v3439 = vld [vmem:[#allocation3 + $0x188] sm:$0xff]
    %v3440 = vld [vmem:[#allocation3 + $0x190] sm:$0xff]
    %v3441 = vld [vmem:[#allocation3 + $0x198] sm:$0xff]
    %v3442 = vld [vmem:[#allocation3 + $0x1a0] sm:$0xf]
    %v3443 = vld [vmem:[#allocation3 + $0x1a4] sm:$0xff]
    %v3444 = vld [vmem:[#allocation3 + $0x1ac] sm:$0xff]
    %v3445 = vld [vmem:[#allocation3 + $0x1b4] sm:$0xff]
    %v3446 = vld [vmem:[#allocation3 + $0x1bc] sm:$0xf]
    %v3447 = vld [vmem:[#allocation3 + $0x1c0] sm:$0xff]
    %v3448 = vld [vmem:[#allocation3 + $0x1c8] sm:$0xff]
    %v3449 = vld [vmem:[#allocation3 + $0x1d0] sm:$0xff]
    %v3450 = vld [vmem:[#allocation3 + $0x1d8] sm:$0xf]
    %v3451 = vld [vmem:[#allocation3 + $0x1dc] sm:$0xff]
    %v3452 = vld [vmem:[#allocation3 + $0x1e4] sm:$0xff]
    %v3453 = vld [vmem:[#allocation3 + $0x1ec] sm:$0xff]
    %v3454 = vld [vmem:[#allocation3 + $0x1f4] sm:$0xf]
    %v3455 = vld [vmem:[#allocation3 + $0x1f8] sm:$0xff]
    %v3456 = vld [vmem:[#allocation3 + $0x200] sm:$0xff]
    %v3457 = vld [vmem:[#allocation3 + $0x208] sm:$0xff]
    %v3458 = vld [vmem:[#allocation3 + $0x210] sm:$0xf]
    %v3459 = vld [vmem:[#allocation3 + $0x214] sm:$0xff]
    %v3460 = vld [vmem:[#allocation3 + $0x21c] sm:$0xff]
    %v3461 = vld [vmem:[#allocation3 + $0x224] sm:$0xff]
    %v3462 = vld [vmem:[#allocation3 + $0x22c] sm:$0xf]
    %v3463 = vld [vmem:[#allocation3 + $0x230] sm:$0xff]
    %v3464 = vld [vmem:[#allocation3 + $0x238] sm:$0xff]
    %v3465 = vld [vmem:[#allocation3 + $0x240] sm:$0xff]
    %v3466 = vld [vmem:[#allocation3 + $0x248] sm:$0xf]
    %v3467 = vld [vmem:[#allocation3 + $0x24c] sm:$0xff]
    %v3468 = vld [vmem:[#allocation3 + $0x254] sm:$0xff]
    %v3469 = vld [vmem:[#allocation3 + $0x25c] sm:$0xff]
    %v3470 = vld [vmem:[#allocation3 + $0x264] sm:$0xf]
    %v3471 = vld [vmem:[#allocation3 + $0x268] sm:$0xff]
    %v3472 = vld [vmem:[#allocation3 + $0x270] sm:$0xff]
    %v3473 = vld [vmem:[#allocation3 + $0x278] sm:$0xff]
    %v3474 = vld [vmem:[#allocation3 + $0x280] sm:$0xf]
    %v3475 = vld [vmem:[#allocation3 + $0x284] sm:$0xff]
    %v3476 = vld [vmem:[#allocation3 + $0x28c] sm:$0xff]
    %v3477 = vld [vmem:[#allocation3 + $0x294] sm:$0xff]
    %v3478 = vld [vmem:[#allocation3 + $0x29c] sm:$0xf]
    %v3479 = vld [vmem:[#allocation3 + $0x2a0] sm:$0xff]
    %v3480 = vld [vmem:[#allocation3 + $0x2a8] sm:$0xff]
    %v3481 = vld [vmem:[#allocation3 + $0x2b0] sm:$0xff]
    %v3482 = vld [vmem:[#allocation3 + $0x2b8] sm:$0xf]
    %v3483 = vld [vmem:[#allocation3 + $0x2bc] sm:$0xff]
    %v3484 = vld [vmem:[#allocation3 + $0x2c4] sm:$0xff]
    %v3485 = vld [vmem:[#allocation3 + $0x2cc] sm:$0xff]
    %v3486 = vld [vmem:[#allocation3 + $0x2d4] sm:$0xf]
    %v3487 = vld [vmem:[#allocation3 + $0x2d8] sm:$0xff]
    %v3488 = vld [vmem:[#allocation3 + $0x2e0] sm:$0xff]
    %v3489 = vld [vmem:[#allocation3 + $0x2e8] sm:$0xff]
    %v3490 = vld [vmem:[#allocation3 + $0x2f0] sm:$0xf]
    %v3491 = vld [vmem:[#allocation3 + $0x2f4] sm:$0xff]
    %v3492 = vld [vmem:[#allocation3 + $0x2fc] sm:$0xff]
    %v3493 = vld [vmem:[#allocation3 + $0x304] sm:$0xff]
    %v3494 = vld [vmem:[#allocation3 + $0x30c] sm:$0xf]
    %v3495 = vld [vmem:[#allocation3 + $0x310] sm:$0xff]
    %v3496 = vld [vmem:[#allocation3 + $0x318] sm:$0xff]
    %v3497 = vld [vmem:[#allocation3 + $0x320] sm:$0xff]
    %v3498 = vld [vmem:[#allocation3 + $0x328] sm:$0xf]
    %v3499 = vld [vmem:[#allocation3 + $0x32c] sm:$0xff]
    %v3500 = vld [vmem:[#allocation3 + $0x334] sm:$0xff]
    %v3501 = vld [vmem:[#allocation3 + $0x33c] sm:$0xff]
    %v3502 = vld [vmem:[#allocation3 + $0x344] sm:$0xf]
    %v3503 = vld [vmem:[#allocation3 + $0x348] sm:$0xff]
    %v3504 = vld [vmem:[#allocation3 + $0x350] sm:$0xff]
    %v3505 = vld [vmem:[#allocation3 + $0x358] sm:$0xff]
    %v3506 = vld [vmem:[#allocation3 + $0x360] sm:$0xf]
    %v3507 = vld [vmem:[#allocation3 + $0x364] sm:$0xff]
    %v3508 = vld [vmem:[#allocation3 + $0x36c] sm:$0xff]
    %v3509 = vld [vmem:[#allocation3 + $0x374] sm:$0xff]
    %v3510 = vld [vmem:[#allocation3 + $0x37c] sm:$0xf]
    %v3511 = vld [vmem:[#allocation3 + $0x380] sm:$0xff]
    %v3512 = vld [vmem:[#allocation3 + $0x388] sm:$0xff]
    %v3513 = vld [vmem:[#allocation3 + $0x390] sm:$0xff]
    %v3514 = vld [vmem:[#allocation3 + $0x398] sm:$0xf]
    %v3515 = vld [vmem:[#allocation3 + $0x39c] sm:$0xff]
    %v3516 = vld [vmem:[#allocation3 + $0x3a4] sm:$0xff]
    %v3517 = vld [vmem:[#allocation3 + $0x3ac] sm:$0xff]
    %v3518 = vld [vmem:[#allocation3 + $0x3b4] sm:$0xf]
    %v3519 = vld [vmem:[#allocation3 + $0x3b8] sm:$0xff]
    %v3520 = vld [vmem:[#allocation3 + $0x3c0] sm:$0xff]
    %v3521 = vld [vmem:[#allocation3 + $0x3c8] sm:$0xff]
    %v3522 = vld [vmem:[#allocation3 + $0x3d0] sm:$0xf]
    %v3523 = vld [vmem:[#allocation3 + $0x3d4] sm:$0xff]
    %v3524 = vld [vmem:[#allocation3 + $0x3dc] sm:$0xff]
    %v3525 = vld [vmem:[#allocation3 + $0x3e4] sm:$0xff]
    %v3526 = vld [vmem:[#allocation3 + $0x3ec] sm:$0xf]
    %v3527 = vld [vmem:[#allocation3 + $0x3f0] sm:$0xff]
    %v3528 = vld [vmem:[#allocation3 + $0x3f8] sm:$0xff]
    %v3529 = vld [vmem:[#allocation3 + $0x400] sm:$0xff]
    %v3530 = vld [vmem:[#allocation3 + $0x408] sm:$0xf]
    %v3531 = vld [vmem:[#allocation3 + $0x40c] sm:$0xff]
    %v3532 = vld [vmem:[#allocation3 + $0x414] sm:$0xff]
    %v3533 = vld [vmem:[#allocation3 + $0x41c] sm:$0xff]
    %v3534 = vld [vmem:[#allocation3 + $0x424] sm:$0xf]
    %v3535 = vld [vmem:[#allocation3 + $0x428] sm:$0xff]
    %v3536 = vld [vmem:[#allocation3 + $0x430] sm:$0xff]
    %v3537 = vld [vmem:[#allocation3 + $0x438] sm:$0xff]
    %v3538 = vld [vmem:[#allocation3 + $0x440] sm:$0xf]
    %v3539 = vld [vmem:[#allocation3 + $0x444] sm:$0xff]
    %v3540 = vld [vmem:[#allocation3 + $0x44c] sm:$0xff]
    %v3541 = vld [vmem:[#allocation3 + $0x454] sm:$0xff]
    %v3542 = vld [vmem:[#allocation3 + $0x45c] sm:$0xf]
    %v3543 = vld [vmem:[#allocation3 + $0x460] sm:$0xff]
    %v3544 = vld [vmem:[#allocation3 + $0x468] sm:$0xff]
    %v3545 = vld [vmem:[#allocation3 + $0x470] sm:$0xff]
    %v3546 = vld [vmem:[#allocation3 + $0x478] sm:$0xf]
    %v3547 = vld [vmem:[#allocation3 + $0x47c] sm:$0xff]
    %v3548 = vld [vmem:[#allocation3 + $0x484] sm:$0xff]
    %v3549 = vld [vmem:[#allocation3 + $0x48c] sm:$0xff]
    %v3550 = vld [vmem:[#allocation3 + $0x494] sm:$0xf]
    %v3551 = vld [vmem:[#allocation3 + $0x498] sm:$0xff]
    %v3552 = vld [vmem:[#allocation3 + $0x4a0] sm:$0xff]
    %v3553 = vld [vmem:[#allocation3 + $0x4a8] sm:$0xff]
    %v3554 = vld [vmem:[#allocation3 + $0x4b0] sm:$0xf]
    %v3555 = vld [vmem:[#allocation3 + $0x4b4] sm:$0xff]
    %v3556 = vld [vmem:[#allocation3 + $0x4bc] sm:$0xff]
    %v3557 = vld [vmem:[#allocation3 + $0x4c4] sm:$0xff]
    %v3558 = vld [vmem:[#allocation3 + $0x4cc] sm:$0xf]
    %v3559 = vld [vmem:[#allocation3 + $0x4d0] sm:$0xff]
    %v3560 = vld [vmem:[#allocation3 + $0x4d8] sm:$0xff]
    %v3561 = vld [vmem:[#allocation3 + $0x4e0] sm:$0xff]
    %v3562 = vld [vmem:[#allocation3 + $0x4e8] sm:$0xf]
    %v3563 = vld [vmem:[#allocation3 + $0x4ec] sm:$0xff]
    %v3564 = vld [vmem:[#allocation3 + $0x4f4] sm:$0xff]
    %v3565 = vld [vmem:[#allocation3 + $0x4fc] sm:$0xff]
    %v3566 = vld [vmem:[#allocation3 + $0x504] sm:$0xf]
    %v3567 = vld [vmem:[#allocation3 + $0x508] sm:$0xff]
    %v3568 = vld [vmem:[#allocation3 + $0x510] sm:$0xff]
    %v3569 = vld [vmem:[#allocation3 + $0x518] sm:$0xff]
    %v3570 = vld [vmem:[#allocation3 + $0x520] sm:$0xf]
    %v3571 = vld [vmem:[#allocation3 + $0x524] sm:$0xff]
    %v3572 = vld [vmem:[#allocation3 + $0x52c] sm:$0xff]
    %v3573 = vld [vmem:[#allocation3 + $0x534] sm:$0xff]
    %v3574 = vld [vmem:[#allocation3 + $0x53c] sm:$0xf]
    %v3575 = vld [vmem:[#allocation3 + $0x540] sm:$0xff]
    %v3576 = vld [vmem:[#allocation3 + $0x548] sm:$0xff]
    %v3577 = vld [vmem:[#allocation3 + $0x550] sm:$0xff]
    %v3578 = vld [vmem:[#allocation3 + $0x558] sm:$0xf]
    %v3579 = vld [vmem:[#allocation3 + $0x55c] sm:$0xff]
    %v3580 = vld [vmem:[#allocation3 + $0x564] sm:$0xff]
    %v3581 = vld [vmem:[#allocation3 + $0x56c] sm:$0xff]
    %v3582 = vld [vmem:[#allocation3 + $0x574] sm:$0xf]
    %v3583 = vld [vmem:[#allocation3 + $0x578] sm:$0xff]
    %v3584 = vld [vmem:[#allocation3 + $0x580] sm:$0xff]
    %v3585 = vld [vmem:[#allocation3 + $0x588] sm:$0xff]
    %v3586 = vld [vmem:[#allocation3 + $0x590] sm:$0xf]
    %v3587 = vld [vmem:[#allocation3 + $0x594] sm:$0xff]
    %v3588 = vld [vmem:[#allocation3 + $0x59c] sm:$0xff]
    %v3589 = vld [vmem:[#allocation3 + $0x5a4] sm:$0xff]
    %v3590 = vld [vmem:[#allocation3 + $0x5ac] sm:$0xf]
    %v3591 = vld [vmem:[#allocation3 + $0x5b0] sm:$0xff]
    %v3592 = vld [vmem:[#allocation3 + $0x5b8] sm:$0xff]
    %v3593 = vld [vmem:[#allocation3 + $0x5c0] sm:$0xff]
    %v3594 = vld [vmem:[#allocation3 + $0x5c8] sm:$0xf]
    %v3595 = vld [vmem:[#allocation3 + $0x5cc] sm:$0xff]
    %v3596 = vld [vmem:[#allocation3 + $0x5d4] sm:$0xff]
    %v3597 = vld [vmem:[#allocation3 + $0x5dc] sm:$0xff]
    %v3598 = vld [vmem:[#allocation3 + $0x5e4] sm:$0xf]
    %v3599 = vld [vmem:[#allocation3 + $0x5e8] sm:$0xff]
    %v3600 = vld [vmem:[#allocation3 + $0x5f0] sm:$0xff]
    %v3601 = vld [vmem:[#allocation3 + $0x5f8] sm:$0xff]
    %v3602 = vld [vmem:[#allocation3 + $0x600] sm:$0xf]
    %v3603 = vld [vmem:[#allocation3 + $0x604] sm:$0xff]
    %v3604 = vld [vmem:[#allocation3 + $0x60c] sm:$0xff]
    %v3605 = vld [vmem:[#allocation3 + $0x614] sm:$0xff]
    %v3606 = vld [vmem:[#allocation3 + $0x61c] sm:$0xf]
    %v3607 = vld [vmem:[#allocation3 + $0x620] sm:$0xff]
    %v3608 = vld [vmem:[#allocation3 + $0x628] sm:$0xff]
    %v3609 = vld [vmem:[#allocation3 + $0x630] sm:$0xff]
    %v3610 = vld [vmem:[#allocation3 + $0x638] sm:$0xf]
    %v3611 = vld [vmem:[#allocation3 + $0x63c] sm:$0xff]
    %v3612 = vld [vmem:[#allocation3 + $0x644] sm:$0xff]
    %v3613 = vld [vmem:[#allocation3 + $0x64c] sm:$0xff]
    %v3614 = vld [vmem:[#allocation3 + $0x654] sm:$0xf]
    %v3615 = vld [vmem:[#allocation3 + $0x658] sm:$0xff]
    %v3616 = vld [vmem:[#allocation3 + $0x660] sm:$0xff]
    %v3617 = vld [vmem:[#allocation3 + $0x668] sm:$0xff]
    %v3618 = vld [vmem:[#allocation3 + $0x670] sm:$0xf]
    %v3619 = vld [vmem:[#allocation3 + $0x674] sm:$0xff]
    %v3620 = vld [vmem:[#allocation3 + $0x67c] sm:$0xff]
    %v3621 = vld [vmem:[#allocation3 + $0x684] sm:$0xff]
    %v3622 = vld [vmem:[#allocation3 + $0x68c] sm:$0xf]
    %v3623 = vld [vmem:[#allocation3 + $0x690] sm:$0xff]
    %v3624 = vld [vmem:[#allocation3 + $0x698] sm:$0xff]
    %v3625 = vld [vmem:[#allocation3 + $0x6a0] sm:$0xff]
    %v3626 = vld [vmem:[#allocation3 + $0x6a8] sm:$0xf]
    %v3627 = vld [vmem:[#allocation3 + $0x6ac] sm:$0xff]
    %v3628 = vld [vmem:[#allocation3 + $0x6b4] sm:$0xff]
    %v3629 = vld [vmem:[#allocation3 + $0x6bc] sm:$0xff]
    %v3630 = vld [vmem:[#allocation3 + $0x6c4] sm:$0xf]
    %v3631 = vld [vmem:[#allocation3 + $0x6c8] sm:$0xff]
    %v3632 = vld [vmem:[#allocation3 + $0x6d0] sm:$0xff]
    %v3633 = vld [vmem:[#allocation3 + $0x6d8] sm:$0xff]
    %v3634 = vld [vmem:[#allocation3 + $0x6e0] sm:$0xf]
    %v3635 = vld [vmem:[#allocation3 + $0x6e4] sm:$0xff]
    %v3636 = vld [vmem:[#allocation3 + $0x6ec] sm:$0xff]
    %v3637 = vld [vmem:[#allocation3 + $0x6f4] sm:$0xff]
    %v3638 = vld [vmem:[#allocation3 + $0x6fc] sm:$0xf]
    %v3639 = vld [vmem:[#allocation3 + $0x700] sm:$0xff]
    %v3640 = vld [vmem:[#allocation3 + $0x708] sm:$0xff]
    %v3641 = vld [vmem:[#allocation3 + $0x710] sm:$0xff]
    %v3642 = vld [vmem:[#allocation3 + $0x718] sm:$0xf]
    %v3643 = vld [vmem:[#allocation3 + $0x71c] sm:$0xff]
    %v3644 = vld [vmem:[#allocation3 + $0x724] sm:$0xff]
    %v3645 = vld [vmem:[#allocation3 + $0x72c] sm:$0xff]
    %v3646 = vld [vmem:[#allocation3 + $0x734] sm:$0xf]
    %v3647 = vld [vmem:[#allocation3 + $0x738] sm:$0xff]
    %v3648 = vld [vmem:[#allocation3 + $0x740] sm:$0xff]
    %v3649 = vld [vmem:[#allocation3 + $0x748] sm:$0xff]
    %v3650 = vld [vmem:[#allocation3 + $0x750] sm:$0xf]
    %v3651 = vld [vmem:[#allocation3 + $0x754] sm:$0xff]
    %v3652 = vld [vmem:[#allocation3 + $0x75c] sm:$0xff]
    %v3653 = vld [vmem:[#allocation3 + $0x764] sm:$0xff]
    %v3654 = vld [vmem:[#allocation3 + $0x76c] sm:$0xf]
    %v3655 = vld [vmem:[#allocation3 + $0x770] sm:$0xff]
    %v3656 = vld [vmem:[#allocation3 + $0x778] sm:$0xff]
    %v3657 = vld [vmem:[#allocation3 + $0x780] sm:$0xff]
    %v3658 = vld [vmem:[#allocation3 + $0x788] sm:$0xf]
    %v3659 = vld [vmem:[#allocation3 + $0x78c] sm:$0xff]
    %v3660 = vld [vmem:[#allocation3 + $0x794] sm:$0xff]
    %v3661 = vld [vmem:[#allocation3 + $0x79c] sm:$0xff]
    %v3662 = vld [vmem:[#allocation3 + $0x7a4] sm:$0xf]
    %v3663 = vld [vmem:[#allocation3 + $0x7a8] sm:$0xff]
    %v3664 = vld [vmem:[#allocation3 + $0x7b0] sm:$0xff]
    %v3665 = vld [vmem:[#allocation3 + $0x7b8] sm:$0xff]
    %v3666 = vld [vmem:[#allocation3 + $0x7c0] sm:$0xf]
    %v3667 = vld [vmem:[#allocation3 + $0x7c4] sm:$0xff]
    %v3668 = vld [vmem:[#allocation3 + $0x7cc] sm:$0xff]
    %v3669 = vld [vmem:[#allocation3 + $0x7d4] sm:$0xff]
    %v3670 = vld [vmem:[#allocation3 + $0x7dc] sm:$0xf]
    %v3671 = vld [vmem:[#allocation3 + $0x7e0] sm:$0xff]
    %v3672 = vld [vmem:[#allocation3 + $0x7e8] sm:$0xff]
    %v3673 = vld [vmem:[#allocation3 + $0x7f0] sm:$0xff]
    %v3674 = vld [vmem:[#allocation3 + $0x7f8] sm:$0xf]
    %v3675 = vld [vmem:[#allocation3 + $0x7fc] sm:$0xff]
    %v3676 = vld [vmem:[#allocation3 + $0x804] sm:$0xff]
    %v3677 = vld [vmem:[#allocation3 + $0x80c] sm:$0xff]
    %v3678 = vld [vmem:[#allocation3 + $0x814] sm:$0xf]
    %v3679 = vld [vmem:[#allocation3 + $0x818] sm:$0xff]
    %v3680 = vld [vmem:[#allocation3 + $0x820] sm:$0xff]
    %v3681 = vld [vmem:[#allocation3 + $0x828] sm:$0xff]
    %v3682 = vld [vmem:[#allocation3 + $0x830] sm:$0xf]
    %v3683 = vld [vmem:[#allocation3 + $0x834] sm:$0xff]
    %v3684 = vld [vmem:[#allocation3 + $0x83c] sm:$0xff]
    %v3685 = vld [vmem:[#allocation3 + $0x844] sm:$0xff]
    %v3686 = vld [vmem:[#allocation3 + $0x84c] sm:$0xf]
    %v3687 = vld [vmem:[#allocation3 + $0x850] sm:$0xff]
    %v3688 = vld [vmem:[#allocation3 + $0x858] sm:$0xff]
    %v3689 = vld [vmem:[#allocation3 + $0x860] sm:$0xff]
    %v3690 = vld [vmem:[#allocation3 + $0x868] sm:$0xf]
    %v3691 = vld [vmem:[#allocation3 + $0x86c] sm:$0xff]
    %v3692 = vld [vmem:[#allocation3 + $0x874] sm:$0xff]
    %v3693 = vld [vmem:[#allocation3 + $0x87c] sm:$0xff]
    %v3694 = vld [vmem:[#allocation3 + $0x884] sm:$0xf]
    %v3695 = vld [vmem:[#allocation3 + $0x888] sm:$0xff]
    %v3696 = vld [vmem:[#allocation3 + $0x890] sm:$0xff]
    %v3697 = vld [vmem:[#allocation3 + $0x898] sm:$0xff]
    %v3698 = vld [vmem:[#allocation3 + $0x8a0] sm:$0xf]
    %v3699 = vld [vmem:[#allocation3 + $0x8a4] sm:$0xff]
    %v3700 = vld [vmem:[#allocation3 + $0x8ac] sm:$0xff]
    %v3701 = vld [vmem:[#allocation3 + $0x8b4] sm:$0xff]
    %v3702 = vld [vmem:[#allocation3 + $0x8bc] sm:$0xf]
    %v3703 = vld [vmem:[#allocation3 + $0x8c0] sm:$0xff]
    %v3704 = vld [vmem:[#allocation3 + $0x8c8] sm:$0xff]
    %v3705 = vld [vmem:[#allocation3 + $0x8d0] sm:$0xff]
    %v3706 = vld [vmem:[#allocation3 + $0x8d8] sm:$0xf]
    %v3707 = vld [vmem:[#allocation3 + $0x8dc] sm:$0xff]
    %v3708 = vld [vmem:[#allocation3 + $0x8e4] sm:$0xff]
    %v3709 = vld [vmem:[#allocation3 + $0x8ec] sm:$0xff]
    %v3710 = vld [vmem:[#allocation3 + $0x8f4] sm:$0xf]
    %v3711 = vld [vmem:[#allocation3 + $0x8f8] sm:$0xff]
    %v3712 = vld [vmem:[#allocation3 + $0x900] sm:$0xff]
    %v3713 = vld [vmem:[#allocation3 + $0x908] sm:$0xff]
    %v3714 = vld [vmem:[#allocation3 + $0x910] sm:$0xf]
    %v3715 = vld [vmem:[#allocation3 + $0x914] sm:$0xff]
    %v3716 = vld [vmem:[#allocation3 + $0x91c] sm:$0xff]
    %v3717 = vld [vmem:[#allocation3 + $0x924] sm:$0xff]
    %v3718 = vld [vmem:[#allocation3 + $0x92c] sm:$0xf]
    %v3719 = vld [vmem:[#allocation3 + $0x930] sm:$0xff]
    %v3720 = vld [vmem:[#allocation3 + $0x938] sm:$0xff]
    %v3721 = vld [vmem:[#allocation3 + $0x940] sm:$0xff]
    %v3722 = vld [vmem:[#allocation3 + $0x948] sm:$0xf]
    %v3723 = vld [vmem:[#allocation3 + $0x94c] sm:$0xff]
    %v3724 = vld [vmem:[#allocation3 + $0x954] sm:$0xff]
    %v3725 = vld [vmem:[#allocation3 + $0x95c] sm:$0xff]
    %v3726 = vld [vmem:[#allocation3 + $0x964] sm:$0xf]
    %v3727 = vld [vmem:[#allocation3 + $0x968] sm:$0xff]
    %v3728 = vld [vmem:[#allocation3 + $0x970] sm:$0xff]
    %v3729 = vld [vmem:[#allocation3 + $0x978] sm:$0xff]
    %v3730 = vld [vmem:[#allocation3 + $0x980] sm:$0xf]
    %v3731 = vld [vmem:[#allocation3 + $0x984] sm:$0xff]
    %v3732 = vld [vmem:[#allocation3 + $0x98c] sm:$0xff]
    %v3733 = vld [vmem:[#allocation3 + $0x994] sm:$0xff]
    %v3734 = vld [vmem:[#allocation3 + $0x99c] sm:$0xf]
    %v3735 = vld [vmem:[#allocation3 + $0x9a0] sm:$0xff]
    %v3736 = vld [vmem:[#allocation3 + $0x9a8] sm:$0xff]
    %v3737 = vld [vmem:[#allocation3 + $0x9b0] sm:$0xff]
    %v3738 = vld [vmem:[#allocation3 + $0x9b8] sm:$0xf]
    %v3739 = vld [vmem:[#allocation3 + $0x9bc] sm:$0xff]
    %v3740 = vld [vmem:[#allocation3 + $0x9c4] sm:$0xff]
    %v3741 = vld [vmem:[#allocation3 + $0x9cc] sm:$0xff]
    %v3742 = vld [vmem:[#allocation3 + $0x9d4] sm:$0xf]
    %v3743 = vld [vmem:[#allocation3 + $0x9d8] sm:$0xff]
    %v3744 = vld [vmem:[#allocation3 + $0x9e0] sm:$0xff]
    %v3745 = vld [vmem:[#allocation3 + $0x9e8] sm:$0xff]
    %v3746 = vld [vmem:[#allocation3 + $0x9f0] sm:$0xf]
    %v3747 = vld [vmem:[#allocation3 + $0x9f4] sm:$0xff]
    %v3748 = vld [vmem:[#allocation3 + $0x9fc] sm:$0xff]
    %v3749 = vld [vmem:[#allocation3 + $0xa04] sm:$0xff]
    %v3750 = vld [vmem:[#allocation3 + $0xa0c] sm:$0xf]
    %v3751 = vld [vmem:[#allocation3 + $0xa10] sm:$0xff]
    %v3752 = vld [vmem:[#allocation3 + $0xa18] sm:$0xff]
    %v3753 = vld [vmem:[#allocation3 + $0xa20] sm:$0xff]
    %v3754 = vld [vmem:[#allocation3 + $0xa28] sm:$0xf]
    %v3755 = vld [vmem:[#allocation3 + $0xa2c] sm:$0xff]
    %v3756 = vld [vmem:[#allocation3 + $0xa34] sm:$0xff]
    %v3757 = vld [vmem:[#allocation3 + $0xa3c] sm:$0xff]
    %v3758 = vld [vmem:[#allocation3 + $0xa44] sm:$0xf]
    %v3759 = vld [vmem:[#allocation3 + $0xa48] sm:$0xff]
    %v3760 = vld [vmem:[#allocation3 + $0xa50] sm:$0xff]
    %v3761 = vld [vmem:[#allocation3 + $0xa58] sm:$0xff]
    %v3762 = vld [vmem:[#allocation3 + $0xa60] sm:$0xf]
    %v3763 = vld [vmem:[#allocation3 + $0xa64] sm:$0xff]
    %v3764 = vld [vmem:[#allocation3 + $0xa6c] sm:$0xff]
    %v3765 = vld [vmem:[#allocation3 + $0xa74] sm:$0xff]
    %v3766 = vld [vmem:[#allocation3 + $0xa7c] sm:$0xf]
    %v3767 = vld [vmem:[#allocation3 + $0xa80] sm:$0xff]
    %v3768 = vld [vmem:[#allocation3 + $0xa88] sm:$0xff]
    %v3769 = vld [vmem:[#allocation3 + $0xa90] sm:$0xff]
    %v3770 = vld [vmem:[#allocation3 + $0xa98] sm:$0xf]
    %v3771 = vld [vmem:[#allocation3 + $0xa9c] sm:$0xff]
    %v3772 = vld [vmem:[#allocation3 + $0xaa4] sm:$0xff]
    %v3773 = vld [vmem:[#allocation3 + $0xaac] sm:$0xff]
    %v3774 = vld [vmem:[#allocation3 + $0xab4] sm:$0xf]
    %v3775 = vld [vmem:[#allocation3 + $0xab8] sm:$0xff]
    %v3776 = vld [vmem:[#allocation3 + $0xac0] sm:$0xff]
    %v3777 = vld [vmem:[#allocation3 + $0xac8] sm:$0xff]
    %v3778 = vld [vmem:[#allocation3 + $0xad0] sm:$0xf]
    %v3779 = vld [vmem:[#allocation3 + $0xad4] sm:$0xff]
    %v3780 = vld [vmem:[#allocation3 + $0xadc] sm:$0xff]
    %v3781 = vld [vmem:[#allocation3 + $0xae4] sm:$0xff]
    %v3782 = vld [vmem:[#allocation3 + $0xaec] sm:$0xf]
    %v3783 = vld [vmem:[#allocation3 + $0xaf0] sm:$0xff]
    %v3784 = vld [vmem:[#allocation3 + $0xaf8] sm:$0xff]
    %v3785 = vld [vmem:[#allocation3 + $0xb00] sm:$0xff]
    %v3786 = vld [vmem:[#allocation3 + $0xb08] sm:$0xf]
    %v3787 = vld [vmem:[#allocation3 + $0xb0c] sm:$0xff]
    %v3788 = vld [vmem:[#allocation3 + $0xb14] sm:$0xff]
    %v3789 = vld [vmem:[#allocation3 + $0xb1c] sm:$0xff]
    %v3790 = vld [vmem:[#allocation3 + $0xb24] sm:$0xf]
    %v3791 = vld [vmem:[#allocation3 + $0xb28] sm:$0xff]
    %v3792 = vld [vmem:[#allocation3 + $0xb30] sm:$0xff]
    %v3793 = vld [vmem:[#allocation3 + $0xb38] sm:$0xff]
    %v3794 = vld [vmem:[#allocation3 + $0xb40] sm:$0xf]
    %v3795 = vld [vmem:[#allocation3 + $0xb44] sm:$0xff]
    %v3796 = vld [vmem:[#allocation3 + $0xb4c] sm:$0xff]
    %v3797 = vld [vmem:[#allocation3 + $0xb54] sm:$0xff]
    %v3798 = vld [vmem:[#allocation3 + $0xb5c] sm:$0xf]
    %v3799 = vld [vmem:[#allocation3 + $0xb60] sm:$0xff]
    %v3800 = vld [vmem:[#allocation3 + $0xb68] sm:$0xff]
    %v3801 = vld [vmem:[#allocation3 + $0xb70] sm:$0xff]
    %v3802 = vld [vmem:[#allocation3 + $0xb78] sm:$0xf]
    %v3803 = vld [vmem:[#allocation3 + $0xb7c] sm:$0xff]
    %v3804 = vld [vmem:[#allocation3 + $0xb84] sm:$0xff]
    %v3805 = vld [vmem:[#allocation3 + $0xb8c] sm:$0xff]
    %v3806 = vld [vmem:[#allocation3 + $0xb94] sm:$0xf]
    %v3807 = vld [vmem:[#allocation3 + $0xb98] sm:$0xff]
    %v3808 = vld [vmem:[#allocation3 + $0xba0] sm:$0xff]
    %v3809 = vld [vmem:[#allocation3 + $0xba8] sm:$0xff]
    %v3810 = vld [vmem:[#allocation3 + $0xbb0] sm:$0xf]
    %v3811 = vld [vmem:[#allocation3 + $0xbb4] sm:$0xff]
    %v3812 = vld [vmem:[#allocation3 + $0xbbc] sm:$0xff]
    %v3813 = vld [vmem:[#allocation3 + $0xbc4] sm:$0xff]
    %v3814 = vld [vmem:[#allocation3 + $0xbcc] sm:$0xf]
    %v3815 = vld [vmem:[#allocation3 + $0xbd0] sm:$0xff]
    %v3816 = vld [vmem:[#allocation3 + $0xbd8] sm:$0xff]
    %v3817 = vld [vmem:[#allocation3 + $0xbe0] sm:$0xff]
    %v3818 = vld [vmem:[#allocation3 + $0xbe8] sm:$0xf]
    %v3819 = vld [vmem:[#allocation3 + $0xbec] sm:$0xff]
    %v3820 = vld [vmem:[#allocation3 + $0xbf4] sm:$0xff]
    %v3821 = vld [vmem:[#allocation3 + $0xbfc] sm:$0xff]
    %v3822 = vld [vmem:[#allocation3 + $0xc04] sm:$0xf]
    %v3823 = vld [vmem:[#allocation3 + $0xc08] sm:$0xff]
    %v3824 = vld [vmem:[#allocation3 + $0xc10] sm:$0xff]
    %v3825 = vld [vmem:[#allocation3 + $0xc18] sm:$0xff]
    %v3826 = vld [vmem:[#allocation3 + $0xc20] sm:$0xf]
    %v3827 = vld [vmem:[#allocation3 + $0xc24] sm:$0xff]
    %v3828 = vld [vmem:[#allocation3 + $0xc2c] sm:$0xff]
    %v3829 = vld [vmem:[#allocation3 + $0xc34] sm:$0xff]
    %v3830 = vld [vmem:[#allocation3 + $0xc3c] sm:$0xf]
    %v3831 = vld [vmem:[#allocation3 + $0xc40] sm:$0xff]
    %v3832 = vld [vmem:[#allocation3 + $0xc48] sm:$0xff]
    %v3833 = vld [vmem:[#allocation3 + $0xc50] sm:$0xff]
    %v3834 = vld [vmem:[#allocation3 + $0xc58] sm:$0xf]
    %v3835 = vld [vmem:[#allocation3 + $0xc5c] sm:$0xff]
    %v3836 = vld [vmem:[#allocation3 + $0xc64] sm:$0xff]
    %v3837 = vld [vmem:[#allocation3 + $0xc6c] sm:$0xff]
    %v3838 = vld [vmem:[#allocation3 + $0xc74] sm:$0xf]
    %v3839 = vld [vmem:[#allocation3 + $0xc78] sm:$0xff]
    %v3840 = vld [vmem:[#allocation3 + $0xc80] sm:$0xff]
    %v3841 = vld [vmem:[#allocation3 + $0xc88] sm:$0xff]
    %v3842 = vld [vmem:[#allocation3 + $0xc90] sm:$0xf]
    %v3843 = vld [vmem:[#allocation3 + $0xc94] sm:$0xff]
    %v3844 = vld [vmem:[#allocation3 + $0xc9c] sm:$0xff]
    %v3845 = vld [vmem:[#allocation3 + $0xca4] sm:$0xff]
    %v3846 = vld [vmem:[#allocation3 + $0xcac] sm:$0xf]
    %v3847 = vld [vmem:[#allocation3 + $0xcb0] sm:$0xff]
    %v3848 = vld [vmem:[#allocation3 + $0xcb8] sm:$0xff]
    %v3849 = vld [vmem:[#allocation3 + $0xcc0] sm:$0xff]
    %v3850 = vld [vmem:[#allocation3 + $0xcc8] sm:$0xf]
    %v3851 = vld [vmem:[#allocation3 + $0xccc] sm:$0xff]
    %v3852 = vld [vmem:[#allocation3 + $0xcd4] sm:$0xff]
    %v3853 = vld [vmem:[#allocation3 + $0xcdc] sm:$0xff]
    %v3854 = vld [vmem:[#allocation3 + $0xce4] sm:$0xf]
    %v3855 = vld [vmem:[#allocation3 + $0xce8] sm:$0xff]
    %v3856 = vld [vmem:[#allocation3 + $0xcf0] sm:$0xff]
    %v3857 = vld [vmem:[#allocation3 + $0xcf8] sm:$0xff]
    %v3858 = vld [vmem:[#allocation3 + $0xd00] sm:$0xf]
    %v3859 = vld [vmem:[#allocation3 + $0xd04] sm:$0xff]
    %v3860 = vld [vmem:[#allocation3 + $0xd0c] sm:$0xff]
    %v3861 = vld [vmem:[#allocation3 + $0xd14] sm:$0xff]
    %v3862 = vld [vmem:[#allocation3 + $0xd1c] sm:$0xf]
    %v3863 = vld [vmem:[#allocation3 + $0xd20] sm:$0xff]
    %v3864 = vld [vmem:[#allocation3 + $0xd28] sm:$0xff]
    %v3865 = vld [vmem:[#allocation3 + $0xd30] sm:$0xff]
    %v3866 = vld [vmem:[#allocation3 + $0xd38] sm:$0xf]
    %v3867 = vld [vmem:[#allocation3 + $0xd3c] sm:$0xff]
    %v3868 = vld [vmem:[#allocation3 + $0xd44] sm:$0xff]
    %v3869 = vld [vmem:[#allocation3 + $0xd4c] sm:$0xff]
    %v3870 = vld [vmem:[#allocation3 + $0xd54] sm:$0xf]
    %v3871 = vld [vmem:[#allocation3 + $0xd58] sm:$0xff]
    %v3872 = vld [vmem:[#allocation3 + $0xd60] sm:$0xff]
    %v3873 = vld [vmem:[#allocation3 + $0xd68] sm:$0xff]
    %v3874 = vld [vmem:[#allocation3 + $0xd70] sm:$0xf]
    %v3875 = vld [vmem:[#allocation3 + $0xd74] sm:$0xff]
    %v3876 = vld [vmem:[#allocation3 + $0xd7c] sm:$0xff]
    %v3877 = vld [vmem:[#allocation3 + $0xd84] sm:$0xff]
    %v3878 = vld [vmem:[#allocation3 + $0xd8c] sm:$0xf]
    %v3879 = vld [vmem:[#allocation3 + $0xd90] sm:$0xff]
    %v3880 = vld [vmem:[#allocation3 + $0xd98] sm:$0xff]
    %v3881 = vld [vmem:[#allocation3 + $0xda0] sm:$0xff]
    %v3882 = vld [vmem:[#allocation3 + $0xda8] sm:$0xf]
    %v3883 = vld [vmem:[#allocation3 + $0xdac] sm:$0xff]
    %v3884 = vld [vmem:[#allocation3 + $0xdb4] sm:$0xff]
    %v3885 = vld [vmem:[#allocation3 + $0xdbc] sm:$0xff]
    %v3886 = vld [vmem:[#allocation3 + $0xdc4] sm:$0xf]
    %v3887 = vld [vmem:[#allocation3 + $0xdc8] sm:$0xff]
    %v3888 = vld [vmem:[#allocation3 + $0xdd0] sm:$0xff]
    %v3889 = vld [vmem:[#allocation3 + $0xdd8] sm:$0xff]
    %v3890 = vld [vmem:[#allocation3 + $0xde0] sm:$0xf]
    %v3891 = vld [vmem:[#allocation3 + $0xde4] sm:$0xff]
    %v3892 = vld [vmem:[#allocation3 + $0xdec] sm:$0xff]
    %v3893 = vld [vmem:[#allocation3 + $0xdf4] sm:$0xff]
    %v3894 = vld [vmem:[#allocation3 + $0xdfc] sm:$0xf]
    %v3895 = vpack.c.bf16 %v3371, %v3371
    %v3896 = vpack.c.bf16 %v3372, %v3372
    %v3897 = vpack.c.bf16 %v3373, %v3373
    %v3898 = vpack.c.bf16 %v3374, %v3374
    %v3899 = vpack.c.bf16 %v3375, %v3375
    %v3900 = vpack.c.bf16 %v3376, %v3376
    %v3901 = vpack.c.bf16 %v3377, %v3377
    %v3902 = vpack.c.bf16 %v3378, %v3378
    %v3904 = vperm.slane %v129, 0
    %v3905 = vperm.slane %v129, 1
    %v3906 = vperm.slane %v129, 2
    %v3907 = vperm.slane %v129, 3
    %v3908 = vperm.slane %v129, 4
    %v3909 = vperm.slane %v129, 5
    %v3910 = vperm.slane %v129, 6
    %v4430 = vunpack.c.l.b16 %v3383
    %v4431 = vunpack.c.h.b16 %v3383
    %v4432 = vunpack.c.l.b16 %v3384
    %v4433 = vunpack.c.h.b16 %v3384
    %v4434 = vunpack.c.l.b16 %v3385
    %v4435 = vunpack.c.h.b16 %v3385
    %v4436 = vunpack.c.l.b16 %v3386
    %v4437 = vunpack.c.l.b16 %v3387
    %v4438 = vunpack.c.h.b16 %v3387
    %v4439 = vunpack.c.l.b16 %v3388
    %v4440 = vunpack.c.h.b16 %v3388
    %v4441 = vunpack.c.l.b16 %v3389
    %v4442 = vunpack.c.h.b16 %v3389
    %v4443 = vunpack.c.l.b16 %v3390
    %v4444 = vunpack.c.l.b16 %v3391
    %v4445 = vunpack.c.h.b16 %v3391
    %v4446 = vunpack.c.l.b16 %v3392
    %v4447 = vunpack.c.h.b16 %v3392
    %v4448 = vunpack.c.l.b16 %v3393
    %v4449 = vunpack.c.h.b16 %v3393
    %v4450 = vunpack.c.l.b16 %v3394
    %v4451 = vunpack.c.l.b16 %v3395
    %v4452 = vunpack.c.h.b16 %v3395
    %v4453 = vunpack.c.l.b16 %v3396
    %v4454 = vunpack.c.h.b16 %v3396
    %v4455 = vunpack.c.l.b16 %v3397
    %v4456 = vunpack.c.h.b16 %v3397
    %v4457 = vunpack.c.l.b16 %v3398
    %v4458 = vunpack.c.l.b16 %v3399
    %v4459 = vunpack.c.h.b16 %v3399
    %v4460 = vunpack.c.l.b16 %v3400
    %v4461 = vunpack.c.h.b16 %v3400
    %v4462 = vunpack.c.l.b16 %v3401
    %v4463 = vunpack.c.h.b16 %v3401
    %v4464 = vunpack.c.l.b16 %v3402
    %v4465 = vunpack.c.l.b16 %v3403
    %v4466 = vunpack.c.h.b16 %v3403
    %v4467 = vunpack.c.l.b16 %v3404
    %v4468 = vunpack.c.h.b16 %v3404
    %v4469 = vunpack.c.l.b16 %v3405
    %v4470 = vunpack.c.h.b16 %v3405
    %v4471 = vunpack.c.l.b16 %v3406
    %v4472 = vunpack.c.l.b16 %v3407
    %v4473 = vunpack.c.h.b16 %v3407
    %v4474 = vunpack.c.l.b16 %v3408
    %v4475 = vunpack.c.h.b16 %v3408
    %v4476 = vunpack.c.l.b16 %v3409
    %v4477 = vunpack.c.h.b16 %v3409
    %v4478 = vunpack.c.l.b16 %v3410
    %v4479 = vunpack.c.l.b16 %v3411
    %v4480 = vunpack.c.h.b16 %v3411
    %v4481 = vunpack.c.l.b16 %v3412
    %v4482 = vunpack.c.h.b16 %v3412
    %v4483 = vunpack.c.l.b16 %v3413
    %v4484 = vunpack.c.h.b16 %v3413
    %v4485 = vunpack.c.l.b16 %v3414
    %v4486 = vunpack.c.l.b16 %v3415
    %v4487 = vunpack.c.h.b16 %v3415
    %v4488 = vunpack.c.l.b16 %v3416
    %v4489 = vunpack.c.h.b16 %v3416
    %v4490 = vunpack.c.l.b16 %v3417
    %v4491 = vunpack.c.h.b16 %v3417
    %v4492 = vunpack.c.l.b16 %v3418
    %v4493 = vunpack.c.l.b16 %v3419
    %v4494 = vunpack.c.h.b16 %v3419
    %v4495 = vunpack.c.l.b16 %v3420
    %v4496 = vunpack.c.h.b16 %v3420
    %v4497 = vunpack.c.l.b16 %v3421
    %v4498 = vunpack.c.h.b16 %v3421
    %v4499 = vunpack.c.l.b16 %v3422
    %v4500 = vunpack.c.l.b16 %v3423
    %v4501 = vunpack.c.h.b16 %v3423
    %v4502 = vunpack.c.l.b16 %v3424
    %v4503 = vunpack.c.h.b16 %v3424
    %v4504 = vunpack.c.l.b16 %v3425
    %v4505 = vunpack.c.h.b16 %v3425
    %v4506 = vunpack.c.l.b16 %v3426
    %v4507 = vunpack.c.l.b16 %v3427
    %v4508 = vunpack.c.h.b16 %v3427
    %v4509 = vunpack.c.l.b16 %v3428
    %v4510 = vunpack.c.h.b16 %v3428
    %v4511 = vunpack.c.l.b16 %v3429
    %v4512 = vunpack.c.h.b16 %v3429
    %v4513 = vunpack.c.l.b16 %v3430
    %v4514 = vunpack.c.l.b16 %v3431
    %v4515 = vunpack.c.h.b16 %v3431
    %v4516 = vunpack.c.l.b16 %v3432
    %v4517 = vunpack.c.h.b16 %v3432
    %v4518 = vunpack.c.l.b16 %v3433
    %v4519 = vunpack.c.h.b16 %v3433
    %v4520 = vunpack.c.l.b16 %v3434
    %v4521 = vunpack.c.l.b16 %v3435
    %v4522 = vunpack.c.h.b16 %v3435
    %v4523 = vunpack.c.l.b16 %v3436
    %v4524 = vunpack.c.h.b16 %v3436
    %v4525 = vunpack.c.l.b16 %v3437
    %v4526 = vunpack.c.h.b16 %v3437
    %v4527 = vunpack.c.l.b16 %v3438
    %v4528 = vunpack.c.l.b16 %v3439
    %v4529 = vunpack.c.h.b16 %v3439
    %v4530 = vunpack.c.l.b16 %v3440
    %v4531 = vunpack.c.h.b16 %v3440
    %v4532 = vunpack.c.l.b16 %v3441
    %v4533 = vunpack.c.h.b16 %v3441
    %v4534 = vunpack.c.l.b16 %v3442
    %v4535 = vunpack.c.l.b16 %v3443
    %v4536 = vunpack.c.h.b16 %v3443
    %v4537 = vunpack.c.l.b16 %v3444
    %v4538 = vunpack.c.h.b16 %v3444
    %v4539 = vunpack.c.l.b16 %v3445
    %v4540 = vunpack.c.h.b16 %v3445
    %v4541 = vunpack.c.l.b16 %v3446
    %v4542 = vunpack.c.l.b16 %v3447
    %v4543 = vunpack.c.h.b16 %v3447
    %v4544 = vunpack.c.l.b16 %v3448
    %v4545 = vunpack.c.h.b16 %v3448
    %v4546 = vunpack.c.l.b16 %v3449
    %v4547 = vunpack.c.h.b16 %v3449
    %v4548 = vunpack.c.l.b16 %v3450
    %v4549 = vunpack.c.l.b16 %v3451
    %v4550 = vunpack.c.h.b16 %v3451
    %v4551 = vunpack.c.l.b16 %v3452
    %v4552 = vunpack.c.h.b16 %v3452
    %v4553 = vunpack.c.l.b16 %v3453
    %v4554 = vunpack.c.h.b16 %v3453
    %v4555 = vunpack.c.l.b16 %v3454
    %v4556 = vunpack.c.l.b16 %v3455
    %v4557 = vunpack.c.h.b16 %v3455
    %v4558 = vunpack.c.l.b16 %v3456
    %v4559 = vunpack.c.h.b16 %v3456
    %v4560 = vunpack.c.l.b16 %v3457
    %v4561 = vunpack.c.h.b16 %v3457
    %v4562 = vunpack.c.l.b16 %v3458
    %v4563 = vunpack.c.l.b16 %v3459
    %v4564 = vunpack.c.h.b16 %v3459
    %v4565 = vunpack.c.l.b16 %v3460
    %v4566 = vunpack.c.h.b16 %v3460
    %v4567 = vunpack.c.l.b16 %v3461
    %v4568 = vunpack.c.h.b16 %v3461
    %v4569 = vunpack.c.l.b16 %v3462
    %v4570 = vunpack.c.l.b16 %v3463
    %v4571 = vunpack.c.h.b16 %v3463
    %v4572 = vunpack.c.l.b16 %v3464
    %v4573 = vunpack.c.h.b16 %v3464
    %v4574 = vunpack.c.l.b16 %v3465
    %v4575 = vunpack.c.h.b16 %v3465
    %v4576 = vunpack.c.l.b16 %v3466
    %v4577 = vunpack.c.l.b16 %v3467
    %v4578 = vunpack.c.h.b16 %v3467
    %v4579 = vunpack.c.l.b16 %v3468
    %v4580 = vunpack.c.h.b16 %v3468
    %v4581 = vunpack.c.l.b16 %v3469
    %v4582 = vunpack.c.h.b16 %v3469
    %v4583 = vunpack.c.l.b16 %v3470
    %v4584 = vunpack.c.l.b16 %v3471
    %v4585 = vunpack.c.h.b16 %v3471
    %v4586 = vunpack.c.l.b16 %v3472
    %v4587 = vunpack.c.h.b16 %v3472
    %v4588 = vunpack.c.l.b16 %v3473
    %v4589 = vunpack.c.h.b16 %v3473
    %v4590 = vunpack.c.l.b16 %v3474
    %v4591 = vunpack.c.l.b16 %v3475
    %v4592 = vunpack.c.h.b16 %v3475
    %v4593 = vunpack.c.l.b16 %v3476
    %v4594 = vunpack.c.h.b16 %v3476
    %v4595 = vunpack.c.l.b16 %v3477
    %v4596 = vunpack.c.h.b16 %v3477
    %v4597 = vunpack.c.l.b16 %v3478
    %v4598 = vunpack.c.l.b16 %v3479
    %v4599 = vunpack.c.h.b16 %v3479
    %v4600 = vunpack.c.l.b16 %v3480
    %v4601 = vunpack.c.h.b16 %v3480
    %v4602 = vunpack.c.l.b16 %v3481
    %v4603 = vunpack.c.h.b16 %v3481
    %v4604 = vunpack.c.l.b16 %v3482
    %v4605 = vunpack.c.l.b16 %v3483
    %v4606 = vunpack.c.h.b16 %v3483
    %v4607 = vunpack.c.l.b16 %v3484
    %v4608 = vunpack.c.h.b16 %v3484
    %v4609 = vunpack.c.l.b16 %v3485
    %v4610 = vunpack.c.h.b16 %v3485
    %v4611 = vunpack.c.l.b16 %v3486
    %v4612 = vunpack.c.l.b16 %v3487
    %v4613 = vunpack.c.h.b16 %v3487
    %v4614 = vunpack.c.l.b16 %v3488
    %v4615 = vunpack.c.h.b16 %v3488
    %v4616 = vunpack.c.l.b16 %v3489
    %v4617 = vunpack.c.h.b16 %v3489
    %v4618 = vunpack.c.l.b16 %v3490
    %v4619 = vunpack.c.l.b16 %v3491
    %v4620 = vunpack.c.h.b16 %v3491
    %v4621 = vunpack.c.l.b16 %v3492
    %v4622 = vunpack.c.h.b16 %v3492
    %v4623 = vunpack.c.l.b16 %v3493
    %v4624 = vunpack.c.h.b16 %v3493
    %v4625 = vunpack.c.l.b16 %v3494
    %v4626 = vunpack.c.l.b16 %v3495
    %v4627 = vunpack.c.h.b16 %v3495
    %v4628 = vunpack.c.l.b16 %v3496
    %v4629 = vunpack.c.h.b16 %v3496
    %v4630 = vunpack.c.l.b16 %v3497
    %v4631 = vunpack.c.h.b16 %v3497
    %v4632 = vunpack.c.l.b16 %v3498
    %v4633 = vunpack.c.l.b16 %v3499
    %v4634 = vunpack.c.h.b16 %v3499
    %v4635 = vunpack.c.l.b16 %v3500
    %v4636 = vunpack.c.h.b16 %v3500
    %v4637 = vunpack.c.l.b16 %v3501
    %v4638 = vunpack.c.h.b16 %v3501
    %v4639 = vunpack.c.l.b16 %v3502
    %v4640 = vunpack.c.l.b16 %v3503
    %v4641 = vunpack.c.h.b16 %v3503
    %v4642 = vunpack.c.l.b16 %v3504
    %v4643 = vunpack.c.h.b16 %v3504
    %v4644 = vunpack.c.l.b16 %v3505
    %v4645 = vunpack.c.h.b16 %v3505
    %v4646 = vunpack.c.l.b16 %v3506
    %v4647 = vunpack.c.l.b16 %v3507
    %v4648 = vunpack.c.h.b16 %v3507
    %v4649 = vunpack.c.l.b16 %v3508
    %v4650 = vunpack.c.h.b16 %v3508
    %v4651 = vunpack.c.l.b16 %v3509
    %v4652 = vunpack.c.h.b16 %v3509
    %v4653 = vunpack.c.l.b16 %v3510
    %v4654 = vunpack.c.l.b16 %v3511
    %v4655 = vunpack.c.h.b16 %v3511
    %v4656 = vunpack.c.l.b16 %v3512
    %v4657 = vunpack.c.h.b16 %v3512
    %v4658 = vunpack.c.l.b16 %v3513
    %v4659 = vunpack.c.h.b16 %v3513
    %v4660 = vunpack.c.l.b16 %v3514
    %v4661 = vunpack.c.l.b16 %v3515
    %v4662 = vunpack.c.h.b16 %v3515
    %v4663 = vunpack.c.l.b16 %v3516
    %v4664 = vunpack.c.h.b16 %v3516
    %v4665 = vunpack.c.l.b16 %v3517
    %v4666 = vunpack.c.h.b16 %v3517
    %v4667 = vunpack.c.l.b16 %v3518
    %v4668 = vunpack.c.l.b16 %v3519
    %v4669 = vunpack.c.h.b16 %v3519
    %v4670 = vunpack.c.l.b16 %v3520
    %v4671 = vunpack.c.h.b16 %v3520
    %v4672 = vunpack.c.l.b16 %v3521
    %v4673 = vunpack.c.h.b16 %v3521
    %v4674 = vunpack.c.l.b16 %v3522
    %v4675 = vunpack.c.l.b16 %v3523
    %v4676 = vunpack.c.h.b16 %v3523
    %v4677 = vunpack.c.l.b16 %v3524
    %v4678 = vunpack.c.h.b16 %v3524
    %v4679 = vunpack.c.l.b16 %v3525
    %v4680 = vunpack.c.h.b16 %v3525
    %v4681 = vunpack.c.l.b16 %v3526
    %v4682 = vunpack.c.l.b16 %v3527
    %v4683 = vunpack.c.h.b16 %v3527
    %v4684 = vunpack.c.l.b16 %v3528
    %v4685 = vunpack.c.h.b16 %v3528
    %v4686 = vunpack.c.l.b16 %v3529
    %v4687 = vunpack.c.h.b16 %v3529
    %v4688 = vunpack.c.l.b16 %v3530
    %v4689 = vunpack.c.l.b16 %v3531
    %v4690 = vunpack.c.h.b16 %v3531
    %v4691 = vunpack.c.l.b16 %v3532
    %v4692 = vunpack.c.h.b16 %v3532
    %v4693 = vunpack.c.l.b16 %v3533
    %v4694 = vunpack.c.h.b16 %v3533
    %v4695 = vunpack.c.l.b16 %v3534
    %v4696 = vunpack.c.l.b16 %v3535
    %v4697 = vunpack.c.h.b16 %v3535
    %v4698 = vunpack.c.l.b16 %v3536
    %v4699 = vunpack.c.h.b16 %v3536
    %v4700 = vunpack.c.l.b16 %v3537
    %v4701 = vunpack.c.h.b16 %v3537
    %v4702 = vunpack.c.l.b16 %v3538
    %v4703 = vunpack.c.l.b16 %v3539
    %v4704 = vunpack.c.h.b16 %v3539
    %v4705 = vunpack.c.l.b16 %v3540
    %v4706 = vunpack.c.h.b16 %v3540
    %v4707 = vunpack.c.l.b16 %v3541
    %v4708 = vunpack.c.h.b16 %v3541
    %v4709 = vunpack.c.l.b16 %v3542
    %v4710 = vunpack.c.l.b16 %v3543
    %v4711 = vunpack.c.h.b16 %v3543
    %v4712 = vunpack.c.l.b16 %v3544
    %v4713 = vunpack.c.h.b16 %v3544
    %v4714 = vunpack.c.l.b16 %v3545
    %v4715 = vunpack.c.h.b16 %v3545
    %v4716 = vunpack.c.l.b16 %v3546
    %v4717 = vunpack.c.l.b16 %v3547
    %v4718 = vunpack.c.h.b16 %v3547
    %v4719 = vunpack.c.l.b16 %v3548
    %v4720 = vunpack.c.h.b16 %v3548
    %v4721 = vunpack.c.l.b16 %v3549
    %v4722 = vunpack.c.h.b16 %v3549
    %v4723 = vunpack.c.l.b16 %v3550
    %v4724 = vunpack.c.l.b16 %v3551
    %v4725 = vunpack.c.h.b16 %v3551
    %v4726 = vunpack.c.l.b16 %v3552
    %v4727 = vunpack.c.h.b16 %v3552
    %v4728 = vunpack.c.l.b16 %v3553
    %v4729 = vunpack.c.h.b16 %v3553
    %v4730 = vunpack.c.l.b16 %v3554
    %v4731 = vunpack.c.l.b16 %v3555
    %v4732 = vunpack.c.h.b16 %v3555
    %v4733 = vunpack.c.l.b16 %v3556
    %v4734 = vunpack.c.h.b16 %v3556
    %v4735 = vunpack.c.l.b16 %v3557
    %v4736 = vunpack.c.h.b16 %v3557
    %v4737 = vunpack.c.l.b16 %v3558
    %v4738 = vunpack.c.l.b16 %v3559
    %v4739 = vunpack.c.h.b16 %v3559
    %v4740 = vunpack.c.l.b16 %v3560
    %v4741 = vunpack.c.h.b16 %v3560
    %v4742 = vunpack.c.l.b16 %v3561
    %v4743 = vunpack.c.h.b16 %v3561
    %v4744 = vunpack.c.l.b16 %v3562
    %v4745 = vunpack.c.l.b16 %v3563
    %v4746 = vunpack.c.h.b16 %v3563
    %v4747 = vunpack.c.l.b16 %v3564
    %v4748 = vunpack.c.h.b16 %v3564
    %v4749 = vunpack.c.l.b16 %v3565
    %v4750 = vunpack.c.h.b16 %v3565
    %v4751 = vunpack.c.l.b16 %v3566
    %v4752 = vunpack.c.l.b16 %v3567
    %v4753 = vunpack.c.h.b16 %v3567
    %v4754 = vunpack.c.l.b16 %v3568
    %v4755 = vunpack.c.h.b16 %v3568
    %v4756 = vunpack.c.l.b16 %v3569
    %v4757 = vunpack.c.h.b16 %v3569
    %v4758 = vunpack.c.l.b16 %v3570
    %v4759 = vunpack.c.l.b16 %v3571
    %v4760 = vunpack.c.h.b16 %v3571
    %v4761 = vunpack.c.l.b16 %v3572
    %v4762 = vunpack.c.h.b16 %v3572
    %v4763 = vunpack.c.l.b16 %v3573
    %v4764 = vunpack.c.h.b16 %v3573
    %v4765 = vunpack.c.l.b16 %v3574
    %v4766 = vunpack.c.l.b16 %v3575
    %v4767 = vunpack.c.h.b16 %v3575
    %v4768 = vunpack.c.l.b16 %v3576
    %v4769 = vunpack.c.h.b16 %v3576
    %v4770 = vunpack.c.l.b16 %v3577
    %v4771 = vunpack.c.h.b16 %v3577
    %v4772 = vunpack.c.l.b16 %v3578
    %v4773 = vunpack.c.l.b16 %v3579
    %v4774 = vunpack.c.h.b16 %v3579
    %v4775 = vunpack.c.l.b16 %v3580
    %v4776 = vunpack.c.h.b16 %v3580
    %v4777 = vunpack.c.l.b16 %v3581
    %v4778 = vunpack.c.h.b16 %v3581
    %v4779 = vunpack.c.l.b16 %v3582
    %v4780 = vunpack.c.l.b16 %v3583
    %v4781 = vunpack.c.h.b16 %v3583
    %v4782 = vunpack.c.l.b16 %v3584
    %v4783 = vunpack.c.h.b16 %v3584
    %v4784 = vunpack.c.l.b16 %v3585
    %v4785 = vunpack.c.h.b16 %v3585
    %v4786 = vunpack.c.l.b16 %v3586
    %v4787 = vunpack.c.l.b16 %v3587
    %v4788 = vunpack.c.h.b16 %v3587
    %v4789 = vunpack.c.l.b16 %v3588
    %v4790 = vunpack.c.h.b16 %v3588
    %v4791 = vunpack.c.l.b16 %v3589
    %v4792 = vunpack.c.h.b16 %v3589
    %v4793 = vunpack.c.l.b16 %v3590
    %v4794 = vunpack.c.l.b16 %v3591
    %v4795 = vunpack.c.h.b16 %v3591
    %v4796 = vunpack.c.l.b16 %v3592
    %v4797 = vunpack.c.h.b16 %v3592
    %v4798 = vunpack.c.l.b16 %v3593
    %v4799 = vunpack.c.h.b16 %v3593
    %v4800 = vunpack.c.l.b16 %v3594
    %v4801 = vunpack.c.l.b16 %v3595
    %v4802 = vunpack.c.h.b16 %v3595
    %v4803 = vunpack.c.l.b16 %v3596
    %v4804 = vunpack.c.h.b16 %v3596
    %v4805 = vunpack.c.l.b16 %v3597
    %v4806 = vunpack.c.h.b16 %v3597
    %v4807 = vunpack.c.l.b16 %v3598
    %v4808 = vunpack.c.l.b16 %v3599
    %v4809 = vunpack.c.h.b16 %v3599
    %v4810 = vunpack.c.l.b16 %v3600
    %v4811 = vunpack.c.h.b16 %v3600
    %v4812 = vunpack.c.l.b16 %v3601
    %v4813 = vunpack.c.h.b16 %v3601
    %v4814 = vunpack.c.l.b16 %v3602
    %v4815 = vunpack.c.l.b16 %v3603
    %v4816 = vunpack.c.h.b16 %v3603
    %v4817 = vunpack.c.l.b16 %v3604
    %v4818 = vunpack.c.h.b16 %v3604
    %v4819 = vunpack.c.l.b16 %v3605
    %v4820 = vunpack.c.h.b16 %v3605
    %v4821 = vunpack.c.l.b16 %v3606
    %v4822 = vunpack.c.l.b16 %v3607
    %v4823 = vunpack.c.h.b16 %v3607
    %v4824 = vunpack.c.l.b16 %v3608
    %v4825 = vunpack.c.h.b16 %v3608
    %v4826 = vunpack.c.l.b16 %v3609
    %v4827 = vunpack.c.h.b16 %v3609
    %v4828 = vunpack.c.l.b16 %v3610
    %v4829 = vunpack.c.l.b16 %v3611
    %v4830 = vunpack.c.h.b16 %v3611
    %v4831 = vunpack.c.l.b16 %v3612
    %v4832 = vunpack.c.h.b16 %v3612
    %v4833 = vunpack.c.l.b16 %v3613
    %v4834 = vunpack.c.h.b16 %v3613
    %v4835 = vunpack.c.l.b16 %v3614
    %v4836 = vunpack.c.l.b16 %v3615
    %v4837 = vunpack.c.h.b16 %v3615
    %v4838 = vunpack.c.l.b16 %v3616
    %v4839 = vunpack.c.h.b16 %v3616
    %v4840 = vunpack.c.l.b16 %v3617
    %v4841 = vunpack.c.h.b16 %v3617
    %v4842 = vunpack.c.l.b16 %v3618
    %v4843 = vunpack.c.l.b16 %v3619
    %v4844 = vunpack.c.h.b16 %v3619
    %v4845 = vunpack.c.l.b16 %v3620
    %v4846 = vunpack.c.h.b16 %v3620
    %v4847 = vunpack.c.l.b16 %v3621
    %v4848 = vunpack.c.h.b16 %v3621
    %v4849 = vunpack.c.l.b16 %v3622
    %v4850 = vunpack.c.l.b16 %v3623
    %v4851 = vunpack.c.h.b16 %v3623
    %v4852 = vunpack.c.l.b16 %v3624
    %v4853 = vunpack.c.h.b16 %v3624
    %v4854 = vunpack.c.l.b16 %v3625
    %v4855 = vunpack.c.h.b16 %v3625
    %v4856 = vunpack.c.l.b16 %v3626
    %v4857 = vunpack.c.l.b16 %v3627
    %v4858 = vunpack.c.h.b16 %v3627
    %v4859 = vunpack.c.l.b16 %v3628
    %v4860 = vunpack.c.h.b16 %v3628
    %v4861 = vunpack.c.l.b16 %v3629
    %v4862 = vunpack.c.h.b16 %v3629
    %v4863 = vunpack.c.l.b16 %v3630
    %v4864 = vunpack.c.l.b16 %v3631
    %v4865 = vunpack.c.h.b16 %v3631
    %v4866 = vunpack.c.l.b16 %v3632
    %v4867 = vunpack.c.h.b16 %v3632
    %v4868 = vunpack.c.l.b16 %v3633
    %v4869 = vunpack.c.h.b16 %v3633
    %v4870 = vunpack.c.l.b16 %v3634
    %v4871 = vunpack.c.l.b16 %v3635
    %v4872 = vunpack.c.h.b16 %v3635
    %v4873 = vunpack.c.l.b16 %v3636
    %v4874 = vunpack.c.h.b16 %v3636
    %v4875 = vunpack.c.l.b16 %v3637
    %v4876 = vunpack.c.h.b16 %v3637
    %v4877 = vunpack.c.l.b16 %v3638
    %v4878 = vunpack.c.l.b16 %v3639
    %v4879 = vunpack.c.h.b16 %v3639
    %v4880 = vunpack.c.l.b16 %v3640
    %v4881 = vunpack.c.h.b16 %v3640
    %v4882 = vunpack.c.l.b16 %v3641
    %v4883 = vunpack.c.h.b16 %v3641
    %v4884 = vunpack.c.l.b16 %v3642
    %v4885 = vunpack.c.l.b16 %v3643
    %v4886 = vunpack.c.h.b16 %v3643
    %v4887 = vunpack.c.l.b16 %v3644
    %v4888 = vunpack.c.h.b16 %v3644
    %v4889 = vunpack.c.l.b16 %v3645
    %v4890 = vunpack.c.h.b16 %v3645
    %v4891 = vunpack.c.l.b16 %v3646
    %v4892 = vunpack.c.l.b16 %v3647
    %v4893 = vunpack.c.h.b16 %v3647
    %v4894 = vunpack.c.l.b16 %v3648
    %v4895 = vunpack.c.h.b16 %v3648
    %v4896 = vunpack.c.l.b16 %v3649
    %v4897 = vunpack.c.h.b16 %v3649
    %v4898 = vunpack.c.l.b16 %v3650
    %v4899 = vunpack.c.l.b16 %v3651
    %v4900 = vunpack.c.h.b16 %v3651
    %v4901 = vunpack.c.l.b16 %v3652
    %v4902 = vunpack.c.h.b16 %v3652
    %v4903 = vunpack.c.l.b16 %v3653
    %v4904 = vunpack.c.h.b16 %v3653
    %v4905 = vunpack.c.l.b16 %v3654
    %v4906 = vunpack.c.l.b16 %v3655
    %v4907 = vunpack.c.h.b16 %v3655
    %v4908 = vunpack.c.l.b16 %v3656
    %v4909 = vunpack.c.h.b16 %v3656
    %v4910 = vunpack.c.l.b16 %v3657
    %v4911 = vunpack.c.h.b16 %v3657
    %v4912 = vunpack.c.l.b16 %v3658
    %v4913 = vunpack.c.l.b16 %v3659
    %v4914 = vunpack.c.h.b16 %v3659
    %v4915 = vunpack.c.l.b16 %v3660
    %v4916 = vunpack.c.h.b16 %v3660
    %v4917 = vunpack.c.l.b16 %v3661
    %v4918 = vunpack.c.h.b16 %v3661
    %v4919 = vunpack.c.l.b16 %v3662
    %v4920 = vunpack.c.l.b16 %v3663
    %v4921 = vunpack.c.h.b16 %v3663
    %v4922 = vunpack.c.l.b16 %v3664
    %v4923 = vunpack.c.h.b16 %v3664
    %v4924 = vunpack.c.l.b16 %v3665
    %v4925 = vunpack.c.h.b16 %v3665
    %v4926 = vunpack.c.l.b16 %v3666
    %v4927 = vunpack.c.l.b16 %v3667
    %v4928 = vunpack.c.h.b16 %v3667
    %v4929 = vunpack.c.l.b16 %v3668
    %v4930 = vunpack.c.h.b16 %v3668
    %v4931 = vunpack.c.l.b16 %v3669
    %v4932 = vunpack.c.h.b16 %v3669
    %v4933 = vunpack.c.l.b16 %v3670
    %v4934 = vunpack.c.l.b16 %v3671
    %v4935 = vunpack.c.h.b16 %v3671
    %v4936 = vunpack.c.l.b16 %v3672
    %v4937 = vunpack.c.h.b16 %v3672
    %v4938 = vunpack.c.l.b16 %v3673
    %v4939 = vunpack.c.h.b16 %v3673
    %v4940 = vunpack.c.l.b16 %v3674
    %v4941 = vunpack.c.l.b16 %v3675
    %v4942 = vunpack.c.h.b16 %v3675
    %v4943 = vunpack.c.l.b16 %v3676
    %v4944 = vunpack.c.h.b16 %v3676
    %v4945 = vunpack.c.l.b16 %v3677
    %v4946 = vunpack.c.h.b16 %v3677
    %v4947 = vunpack.c.l.b16 %v3678
    %v4948 = vunpack.c.l.b16 %v3679
    %v4949 = vunpack.c.h.b16 %v3679
    %v4950 = vunpack.c.l.b16 %v3680
    %v4951 = vunpack.c.h.b16 %v3680
    %v4952 = vunpack.c.l.b16 %v3681
    %v4953 = vunpack.c.h.b16 %v3681
    %v4954 = vunpack.c.l.b16 %v3682
    %v4955 = vunpack.c.l.b16 %v3683
    %v4956 = vunpack.c.h.b16 %v3683
    %v4957 = vunpack.c.l.b16 %v3684
    %v4958 = vunpack.c.h.b16 %v3684
    %v4959 = vunpack.c.l.b16 %v3685
    %v4960 = vunpack.c.h.b16 %v3685
    %v4961 = vunpack.c.l.b16 %v3686
    %v4962 = vunpack.c.l.b16 %v3687
    %v4963 = vunpack.c.h.b16 %v3687
    %v4964 = vunpack.c.l.b16 %v3688
    %v4965 = vunpack.c.h.b16 %v3688
    %v4966 = vunpack.c.l.b16 %v3689
    %v4967 = vunpack.c.h.b16 %v3689
    %v4968 = vunpack.c.l.b16 %v3690
    %v4969 = vunpack.c.l.b16 %v3691
    %v4970 = vunpack.c.h.b16 %v3691
    %v4971 = vunpack.c.l.b16 %v3692
    %v4972 = vunpack.c.h.b16 %v3692
    %v4973 = vunpack.c.l.b16 %v3693
    %v4974 = vunpack.c.h.b16 %v3693
    %v4975 = vunpack.c.l.b16 %v3694
    %v4976 = vunpack.c.l.b16 %v3695
    %v4977 = vunpack.c.h.b16 %v3695
    %v4978 = vunpack.c.l.b16 %v3696
    %v4979 = vunpack.c.h.b16 %v3696
    %v4980 = vunpack.c.l.b16 %v3697
    %v4981 = vunpack.c.h.b16 %v3697
    %v4982 = vunpack.c.l.b16 %v3698
    %v4983 = vunpack.c.l.b16 %v3699
    %v4984 = vunpack.c.h.b16 %v3699
    %v4985 = vunpack.c.l.b16 %v3700
    %v4986 = vunpack.c.h.b16 %v3700
    %v4987 = vunpack.c.l.b16 %v3701
    %v4988 = vunpack.c.h.b16 %v3701
    %v4989 = vunpack.c.l.b16 %v3702
    %v4990 = vunpack.c.l.b16 %v3703
    %v4991 = vunpack.c.h.b16 %v3703
    %v4992 = vunpack.c.l.b16 %v3704
    %v4993 = vunpack.c.h.b16 %v3704
    %v4994 = vunpack.c.l.b16 %v3705
    %v4995 = vunpack.c.h.b16 %v3705
    %v4996 = vunpack.c.l.b16 %v3706
    %v4997 = vunpack.c.l.b16 %v3707
    %v4998 = vunpack.c.h.b16 %v3707
    %v4999 = vunpack.c.l.b16 %v3708
    %v5000 = vunpack.c.h.b16 %v3708
    %v5001 = vunpack.c.l.b16 %v3709
    %v5002 = vunpack.c.h.b16 %v3709
    %v5003 = vunpack.c.l.b16 %v3710
    %v5004 = vunpack.c.l.b16 %v3711
    %v5005 = vunpack.c.h.b16 %v3711
    %v5006 = vunpack.c.l.b16 %v3712
    %v5007 = vunpack.c.h.b16 %v3712
    %v5008 = vunpack.c.l.b16 %v3713
    %v5009 = vunpack.c.h.b16 %v3713
    %v5010 = vunpack.c.l.b16 %v3714
    %v5011 = vunpack.c.l.b16 %v3715
    %v5012 = vunpack.c.h.b16 %v3715
    %v5013 = vunpack.c.l.b16 %v3716
    %v5014 = vunpack.c.h.b16 %v3716
    %v5015 = vunpack.c.l.b16 %v3717
    %v5016 = vunpack.c.h.b16 %v3717
    %v5017 = vunpack.c.l.b16 %v3718
    %v5018 = vunpack.c.l.b16 %v3719
    %v5019 = vunpack.c.h.b16 %v3719
    %v5020 = vunpack.c.l.b16 %v3720
    %v5021 = vunpack.c.h.b16 %v3720
    %v5022 = vunpack.c.l.b16 %v3721
    %v5023 = vunpack.c.h.b16 %v3721
    %v5024 = vunpack.c.l.b16 %v3722
    %v5025 = vunpack.c.l.b16 %v3723
    %v5026 = vunpack.c.h.b16 %v3723
    %v5027 = vunpack.c.l.b16 %v3724
    %v5028 = vunpack.c.h.b16 %v3724
    %v5029 = vunpack.c.l.b16 %v3725
    %v5030 = vunpack.c.h.b16 %v3725
    %v5031 = vunpack.c.l.b16 %v3726
    %v5032 = vunpack.c.l.b16 %v3727
    %v5033 = vunpack.c.h.b16 %v3727
    %v5034 = vunpack.c.l.b16 %v3728
    %v5035 = vunpack.c.h.b16 %v3728
    %v5036 = vunpack.c.l.b16 %v3729
    %v5037 = vunpack.c.h.b16 %v3729
    %v5038 = vunpack.c.l.b16 %v3730
    %v5039 = vunpack.c.l.b16 %v3731
    %v5040 = vunpack.c.h.b16 %v3731
    %v5041 = vunpack.c.l.b16 %v3732
    %v5042 = vunpack.c.h.b16 %v3732
    %v5043 = vunpack.c.l.b16 %v3733
    %v5044 = vunpack.c.h.b16 %v3733
    %v5045 = vunpack.c.l.b16 %v3734
    %v5046 = vunpack.c.l.b16 %v3735
    %v5047 = vunpack.c.h.b16 %v3735
    %v5048 = vunpack.c.l.b16 %v3736
    %v5049 = vunpack.c.h.b16 %v3736
    %v5050 = vunpack.c.l.b16 %v3737
    %v5051 = vunpack.c.h.b16 %v3737
    %v5052 = vunpack.c.l.b16 %v3738
    %v5053 = vunpack.c.l.b16 %v3739
    %v5054 = vunpack.c.h.b16 %v3739
    %v5055 = vunpack.c.l.b16 %v3740
    %v5056 = vunpack.c.h.b16 %v3740
    %v5057 = vunpack.c.l.b16 %v3741
    %v5058 = vunpack.c.h.b16 %v3741
    %v5059 = vunpack.c.l.b16 %v3742
    %v5060 = vunpack.c.l.b16 %v3743
    %v5061 = vunpack.c.h.b16 %v3743
    %v5062 = vunpack.c.l.b16 %v3744
    %v5063 = vunpack.c.h.b16 %v3744
    %v5064 = vunpack.c.l.b16 %v3745
    %v5065 = vunpack.c.h.b16 %v3745
    %v5066 = vunpack.c.l.b16 %v3746
    %v5067 = vunpack.c.l.b16 %v3747
    %v5068 = vunpack.c.h.b16 %v3747
    %v5069 = vunpack.c.l.b16 %v3748
    %v5070 = vunpack.c.h.b16 %v3748
    %v5071 = vunpack.c.l.b16 %v3749
    %v5072 = vunpack.c.h.b16 %v3749
    %v5073 = vunpack.c.l.b16 %v3750
    %v5074 = vunpack.c.l.b16 %v3751
    %v5075 = vunpack.c.h.b16 %v3751
    %v5076 = vunpack.c.l.b16 %v3752
    %v5077 = vunpack.c.h.b16 %v3752
    %v5078 = vunpack.c.l.b16 %v3753
    %v5079 = vunpack.c.h.b16 %v3753
    %v5080 = vunpack.c.l.b16 %v3754
    %v5081 = vunpack.c.l.b16 %v3755
    %v5082 = vunpack.c.h.b16 %v3755
    %v5083 = vunpack.c.l.b16 %v3756
    %v5084 = vunpack.c.h.b16 %v3756
    %v5085 = vunpack.c.l.b16 %v3757
    %v5086 = vunpack.c.h.b16 %v3757
    %v5087 = vunpack.c.l.b16 %v3758
    %v5088 = vunpack.c.l.b16 %v3759
    %v5089 = vunpack.c.h.b16 %v3759
    %v5090 = vunpack.c.l.b16 %v3760
    %v5091 = vunpack.c.h.b16 %v3760
    %v5092 = vunpack.c.l.b16 %v3761
    %v5093 = vunpack.c.h.b16 %v3761
    %v5094 = vunpack.c.l.b16 %v3762
    %v5095 = vunpack.c.l.b16 %v3763
    %v5096 = vunpack.c.h.b16 %v3763
    %v5097 = vunpack.c.l.b16 %v3764
    %v5098 = vunpack.c.h.b16 %v3764
    %v5099 = vunpack.c.l.b16 %v3765
    %v5100 = vunpack.c.h.b16 %v3765
    %v5101 = vunpack.c.l.b16 %v3766
    %v5102 = vunpack.c.l.b16 %v3767
    %v5103 = vunpack.c.h.b16 %v3767
    %v5104 = vunpack.c.l.b16 %v3768
    %v5105 = vunpack.c.h.b16 %v3768
    %v5106 = vunpack.c.l.b16 %v3769
    %v5107 = vunpack.c.h.b16 %v3769
    %v5108 = vunpack.c.l.b16 %v3770
    %v5109 = vunpack.c.l.b16 %v3771
    %v5110 = vunpack.c.h.b16 %v3771
    %v5111 = vunpack.c.l.b16 %v3772
    %v5112 = vunpack.c.h.b16 %v3772
    %v5113 = vunpack.c.l.b16 %v3773
    %v5114 = vunpack.c.h.b16 %v3773
    %v5115 = vunpack.c.l.b16 %v3774
    %v5116 = vunpack.c.l.b16 %v3775
    %v5117 = vunpack.c.h.b16 %v3775
    %v5118 = vunpack.c.l.b16 %v3776
    %v5119 = vunpack.c.h.b16 %v3776
    %v5120 = vunpack.c.l.b16 %v3777
    %v5121 = vunpack.c.h.b16 %v3777
    %v5122 = vunpack.c.l.b16 %v3778
    %v5123 = vunpack.c.l.b16 %v3779
    %v5124 = vunpack.c.h.b16 %v3779
    %v5125 = vunpack.c.l.b16 %v3780
    %v5126 = vunpack.c.h.b16 %v3780
    %v5127 = vunpack.c.l.b16 %v3781
    %v5128 = vunpack.c.h.b16 %v3781
    %v5129 = vunpack.c.l.b16 %v3782
    %v5130 = vunpack.c.l.b16 %v3783
    %v5131 = vunpack.c.h.b16 %v3783
    %v5132 = vunpack.c.l.b16 %v3784
    %v5133 = vunpack.c.h.b16 %v3784
    %v5134 = vunpack.c.l.b16 %v3785
    %v5135 = vunpack.c.h.b16 %v3785
    %v5136 = vunpack.c.l.b16 %v3786
    %v5137 = vunpack.c.l.b16 %v3787
    %v5138 = vunpack.c.h.b16 %v3787
    %v5139 = vunpack.c.l.b16 %v3788
    %v5140 = vunpack.c.h.b16 %v3788
    %v5141 = vunpack.c.l.b16 %v3789
    %v5142 = vunpack.c.h.b16 %v3789
    %v5143 = vunpack.c.l.b16 %v3790
    %v5144 = vunpack.c.l.b16 %v3791
    %v5145 = vunpack.c.h.b16 %v3791
    %v5146 = vunpack.c.l.b16 %v3792
    %v5147 = vunpack.c.h.b16 %v3792
    %v5148 = vunpack.c.l.b16 %v3793
    %v5149 = vunpack.c.h.b16 %v3793
    %v5150 = vunpack.c.l.b16 %v3794
    %v5151 = vunpack.c.l.b16 %v3795
    %v5152 = vunpack.c.h.b16 %v3795
    %v5153 = vunpack.c.l.b16 %v3796
    %v5154 = vunpack.c.h.b16 %v3796
    %v5155 = vunpack.c.l.b16 %v3797
    %v5156 = vunpack.c.h.b16 %v3797
    %v5157 = vunpack.c.l.b16 %v3798
    %v5158 = vunpack.c.l.b16 %v3799
    %v5159 = vunpack.c.h.b16 %v3799
    %v5160 = vunpack.c.l.b16 %v3800
    %v5161 = vunpack.c.h.b16 %v3800
    %v5162 = vunpack.c.l.b16 %v3801
    %v5163 = vunpack.c.h.b16 %v3801
    %v5164 = vunpack.c.l.b16 %v3802
    %v5165 = vunpack.c.l.b16 %v3803
    %v5166 = vunpack.c.h.b16 %v3803
    %v5167 = vunpack.c.l.b16 %v3804
    %v5168 = vunpack.c.h.b16 %v3804
    %v5169 = vunpack.c.l.b16 %v3805
    %v5170 = vunpack.c.h.b16 %v3805
    %v5171 = vunpack.c.l.b16 %v3806
    %v5172 = vunpack.c.l.b16 %v3807
    %v5173 = vunpack.c.h.b16 %v3807
    %v5174 = vunpack.c.l.b16 %v3808
    %v5175 = vunpack.c.h.b16 %v3808
    %v5176 = vunpack.c.l.b16 %v3809
    %v5177 = vunpack.c.h.b16 %v3809
    %v5178 = vunpack.c.l.b16 %v3810
    %v5179 = vunpack.c.l.b16 %v3811
    %v5180 = vunpack.c.h.b16 %v3811
    %v5181 = vunpack.c.l.b16 %v3812
    %v5182 = vunpack.c.h.b16 %v3812
    %v5183 = vunpack.c.l.b16 %v3813
    %v5184 = vunpack.c.h.b16 %v3813
    %v5185 = vunpack.c.l.b16 %v3814
    %v5186 = vunpack.c.l.b16 %v3815
    %v5187 = vunpack.c.h.b16 %v3815
    %v5188 = vunpack.c.l.b16 %v3816
    %v5189 = vunpack.c.h.b16 %v3816
    %v5190 = vunpack.c.l.b16 %v3817
    %v5191 = vunpack.c.h.b16 %v3817
    %v5192 = vunpack.c.l.b16 %v3818
    %v5193 = vunpack.c.l.b16 %v3819
    %v5194 = vunpack.c.h.b16 %v3819
    %v5195 = vunpack.c.l.b16 %v3820
    %v5196 = vunpack.c.h.b16 %v3820
    %v5197 = vunpack.c.l.b16 %v3821
    %v5198 = vunpack.c.h.b16 %v3821
    %v5199 = vunpack.c.l.b16 %v3822
    %v5200 = vunpack.c.l.b16 %v3823
    %v5201 = vunpack.c.h.b16 %v3823
    %v5202 = vunpack.c.l.b16 %v3824
    %v5203 = vunpack.c.h.b16 %v3824
    %v5204 = vunpack.c.l.b16 %v3825
    %v5205 = vunpack.c.h.b16 %v3825
    %v5206 = vunpack.c.l.b16 %v3826
    %v5207 = vunpack.c.l.b16 %v3827
    %v5208 = vunpack.c.h.b16 %v3827
    %v5209 = vunpack.c.l.b16 %v3828
    %v5210 = vunpack.c.h.b16 %v3828
    %v5211 = vunpack.c.l.b16 %v3829
    %v5212 = vunpack.c.h.b16 %v3829
    %v5213 = vunpack.c.l.b16 %v3830
    %v5214 = vunpack.c.l.b16 %v3831
    %v5215 = vunpack.c.h.b16 %v3831
    %v5216 = vunpack.c.l.b16 %v3832
    %v5217 = vunpack.c.h.b16 %v3832
    %v5218 = vunpack.c.l.b16 %v3833
    %v5219 = vunpack.c.h.b16 %v3833
    %v5220 = vunpack.c.l.b16 %v3834
    %v5221 = vunpack.c.l.b16 %v3835
    %v5222 = vunpack.c.h.b16 %v3835
    %v5223 = vunpack.c.l.b16 %v3836
    %v5224 = vunpack.c.h.b16 %v3836
    %v5225 = vunpack.c.l.b16 %v3837
    %v5226 = vunpack.c.h.b16 %v3837
    %v5227 = vunpack.c.l.b16 %v3838
    %v5228 = vunpack.c.l.b16 %v3839
    %v5229 = vunpack.c.h.b16 %v3839
    %v5230 = vunpack.c.l.b16 %v3840
    %v5231 = vunpack.c.h.b16 %v3840
    %v5232 = vunpack.c.l.b16 %v3841
    %v5233 = vunpack.c.h.b16 %v3841
    %v5234 = vunpack.c.l.b16 %v3842
    %v5235 = vunpack.c.l.b16 %v3843
    %v5236 = vunpack.c.h.b16 %v3843
    %v5237 = vunpack.c.l.b16 %v3844
    %v5238 = vunpack.c.h.b16 %v3844
    %v5239 = vunpack.c.l.b16 %v3845
    %v5240 = vunpack.c.h.b16 %v3845
    %v5241 = vunpack.c.l.b16 %v3846
    %v5242 = vunpack.c.l.b16 %v3847
    %v5243 = vunpack.c.h.b16 %v3847
    %v5244 = vunpack.c.l.b16 %v3848
    %v5245 = vunpack.c.h.b16 %v3848
    %v5246 = vunpack.c.l.b16 %v3849
    %v5247 = vunpack.c.h.b16 %v3849
    %v5248 = vunpack.c.l.b16 %v3850
    %v5249 = vunpack.c.l.b16 %v3851
    %v5250 = vunpack.c.h.b16 %v3851
    %v5251 = vunpack.c.l.b16 %v3852
    %v5252 = vunpack.c.h.b16 %v3852
    %v5253 = vunpack.c.l.b16 %v3853
    %v5254 = vunpack.c.h.b16 %v3853
    %v5255 = vunpack.c.l.b16 %v3854
    %v5256 = vunpack.c.l.b16 %v3855
    %v5257 = vunpack.c.h.b16 %v3855
    %v5258 = vunpack.c.l.b16 %v3856
    %v5259 = vunpack.c.h.b16 %v3856
    %v5260 = vunpack.c.l.b16 %v3857
    %v5261 = vunpack.c.h.b16 %v3857
    %v5262 = vunpack.c.l.b16 %v3858
    %v5263 = vunpack.c.l.b16 %v3859
    %v5264 = vunpack.c.h.b16 %v3859
    %v5265 = vunpack.c.l.b16 %v3860
    %v5266 = vunpack.c.h.b16 %v3860
    %v5267 = vunpack.c.l.b16 %v3861
    %v5268 = vunpack.c.h.b16 %v3861
    %v5269 = vunpack.c.l.b16 %v3862
    %v5270 = vunpack.c.l.b16 %v3863
    %v5271 = vunpack.c.h.b16 %v3863
    %v5272 = vunpack.c.l.b16 %v3864
    %v5273 = vunpack.c.h.b16 %v3864
    %v5274 = vunpack.c.l.b16 %v3865
    %v5275 = vunpack.c.h.b16 %v3865
    %v5276 = vunpack.c.l.b16 %v3866
    %v5277 = vunpack.c.l.b16 %v3867
    %v5278 = vunpack.c.h.b16 %v3867
    %v5279 = vunpack.c.l.b16 %v3868
    %v5280 = vunpack.c.h.b16 %v3868
    %v5281 = vunpack.c.l.b16 %v3869
    %v5282 = vunpack.c.h.b16 %v3869
    %v5283 = vunpack.c.l.b16 %v3870
    %v5284 = vunpack.c.l.b16 %v3871
    %v5285 = vunpack.c.h.b16 %v3871
    %v5286 = vunpack.c.l.b16 %v3872
    %v5287 = vunpack.c.h.b16 %v3872
    %v5288 = vunpack.c.l.b16 %v3873
    %v5289 = vunpack.c.h.b16 %v3873
    %v5290 = vunpack.c.l.b16 %v3874
    %v5291 = vunpack.c.l.b16 %v3875
    %v5292 = vunpack.c.h.b16 %v3875
    %v5293 = vunpack.c.l.b16 %v3876
    %v5294 = vunpack.c.h.b16 %v3876
    %v5295 = vunpack.c.l.b16 %v3877
    %v5296 = vunpack.c.h.b16 %v3877
    %v5297 = vunpack.c.l.b16 %v3878
    %v5298 = vunpack.c.l.b16 %v3879
    %v5299 = vunpack.c.h.b16 %v3879
    %v5300 = vunpack.c.l.b16 %v3880
    %v5301 = vunpack.c.h.b16 %v3880
    %v5302 = vunpack.c.l.b16 %v3881
    %v5303 = vunpack.c.h.b16 %v3881
    %v5304 = vunpack.c.l.b16 %v3882
    %v5305 = vunpack.c.l.b16 %v3883
    %v5306 = vunpack.c.h.b16 %v3883
    %v5307 = vunpack.c.l.b16 %v3884
    %v5308 = vunpack.c.h.b16 %v3884
    %v5309 = vunpack.c.l.b16 %v3885
    %v5310 = vunpack.c.h.b16 %v3885
    %v5311 = vunpack.c.l.b16 %v3886
    %v5312 = vunpack.c.l.b16 %v3887
    %v5313 = vunpack.c.h.b16 %v3887
    %v5314 = vunpack.c.l.b16 %v3888
    %v5315 = vunpack.c.h.b16 %v3888
    %v5316 = vunpack.c.l.b16 %v3889
    %v5317 = vunpack.c.h.b16 %v3889
    %v5318 = vunpack.c.l.b16 %v3890
    %v5319 = vunpack.c.l.b16 %v3891
    %v5320 = vunpack.c.h.b16 %v3891
    %v5321 = vunpack.c.l.b16 %v3892
    %v5322 = vunpack.c.h.b16 %v3892
    %v5323 = vunpack.c.l.b16 %v3893
    %v5324 = vunpack.c.h.b16 %v3893
    %v5325 = vunpack.c.l.b16 %v3894
    %v5326 = vpack.c.b16 %v4437, %v4430
    %v5327 = vpack.c.b16 %v4438, %v4431
    %v5328 = vpack.c.b16 %v4439, %v4432
    %v5329 = vpack.c.b16 %v4440, %v4433
    %v5330 = vpack.c.b16 %v4441, %v4434
    %v5331 = vpack.c.b16 %v4442, %v4435
    %v5332 = vpack.c.b16 %v4443, %v4436
    %v5333 = vpack.c.b16 %v4451, %v4444
    %v5334 = vpack.c.b16 %v4452, %v4445
    %v5335 = vpack.c.b16 %v4453, %v4446
    %v5336 = vpack.c.b16 %v4454, %v4447
    %v5337 = vpack.c.b16 %v4455, %v4448
    %v5338 = vpack.c.b16 %v4456, %v4449
    %v5339 = vpack.c.b16 %v4457, %v4450
    %v5340 = vpack.c.b16 %v4465, %v4458
    %v5341 = vpack.c.b16 %v4466, %v4459
    %v5342 = vpack.c.b16 %v4467, %v4460
    %v5343 = vpack.c.b16 %v4468, %v4461
    %v5344 = vpack.c.b16 %v4469, %v4462
    %v5345 = vpack.c.b16 %v4470, %v4463
    %v5346 = vpack.c.b16 %v4471, %v4464
    %v5347 = vpack.c.b16 %v4479, %v4472
    %v5348 = vpack.c.b16 %v4480, %v4473
    %v5349 = vpack.c.b16 %v4481, %v4474
    %v5350 = vpack.c.b16 %v4482, %v4475
    %v5351 = vpack.c.b16 %v4483, %v4476
    %v5352 = vpack.c.b16 %v4484, %v4477
    %v5353 = vpack.c.b16 %v4485, %v4478
    %v5354 = vpack.c.b16 %v4493, %v4486
    %v5355 = vpack.c.b16 %v4494, %v4487
    %v5356 = vpack.c.b16 %v4495, %v4488
    %v5357 = vpack.c.b16 %v4496, %v4489
    %v5358 = vpack.c.b16 %v4497, %v4490
    %v5359 = vpack.c.b16 %v4498, %v4491
    %v5360 = vpack.c.b16 %v4499, %v4492
    %v5361 = vpack.c.b16 %v4507, %v4500
    %v5362 = vpack.c.b16 %v4508, %v4501
    %v5363 = vpack.c.b16 %v4509, %v4502
    %v5364 = vpack.c.b16 %v4510, %v4503
    %v5365 = vpack.c.b16 %v4511, %v4504
    %v5366 = vpack.c.b16 %v4512, %v4505
    %v5367 = vpack.c.b16 %v4513, %v4506
    %v5368 = vpack.c.b16 %v4521, %v4514
    %v5369 = vpack.c.b16 %v4522, %v4515
    %v5370 = vpack.c.b16 %v4523, %v4516
    %v5371 = vpack.c.b16 %v4524, %v4517
    %v5372 = vpack.c.b16 %v4525, %v4518
    %v5373 = vpack.c.b16 %v4526, %v4519
    %v5374 = vpack.c.b16 %v4527, %v4520
    %v5375 = vpack.c.b16 %v4535, %v4528
    %v5376 = vpack.c.b16 %v4536, %v4529
    %v5377 = vpack.c.b16 %v4537, %v4530
    %v5378 = vpack.c.b16 %v4538, %v4531
    %v5379 = vpack.c.b16 %v4539, %v4532
    %v5380 = vpack.c.b16 %v4540, %v4533
    %v5381 = vpack.c.b16 %v4541, %v4534
    %v5382 = vpack.c.b16 %v4549, %v4542
    %v5383 = vpack.c.b16 %v4550, %v4543
    %v5384 = vpack.c.b16 %v4551, %v4544
    %v5385 = vpack.c.b16 %v4552, %v4545
    %v5386 = vpack.c.b16 %v4553, %v4546
    %v5387 = vpack.c.b16 %v4554, %v4547
    %v5388 = vpack.c.b16 %v4555, %v4548
    %v5389 = vpack.c.b16 %v4563, %v4556
    %v5390 = vpack.c.b16 %v4564, %v4557
    %v5391 = vpack.c.b16 %v4565, %v4558
    %v5392 = vpack.c.b16 %v4566, %v4559
    %v5393 = vpack.c.b16 %v4567, %v4560
    %v5394 = vpack.c.b16 %v4568, %v4561
    %v5395 = vpack.c.b16 %v4569, %v4562
    %v5396 = vpack.c.b16 %v4577, %v4570
    %v5397 = vpack.c.b16 %v4578, %v4571
    %v5398 = vpack.c.b16 %v4579, %v4572
    %v5399 = vpack.c.b16 %v4580, %v4573
    %v5400 = vpack.c.b16 %v4581, %v4574
    %v5401 = vpack.c.b16 %v4582, %v4575
    %v5402 = vpack.c.b16 %v4583, %v4576
    %v5403 = vpack.c.b16 %v4591, %v4584
    %v5404 = vpack.c.b16 %v4592, %v4585
    %v5405 = vpack.c.b16 %v4593, %v4586
    %v5406 = vpack.c.b16 %v4594, %v4587
    %v5407 = vpack.c.b16 %v4595, %v4588
    %v5408 = vpack.c.b16 %v4596, %v4589
    %v5409 = vpack.c.b16 %v4597, %v4590
    %v5410 = vpack.c.b16 %v4605, %v4598
    %v5411 = vpack.c.b16 %v4606, %v4599
    %v5412 = vpack.c.b16 %v4607, %v4600
    %v5413 = vpack.c.b16 %v4608, %v4601
    %v5414 = vpack.c.b16 %v4609, %v4602
    %v5415 = vpack.c.b16 %v4610, %v4603
    %v5416 = vpack.c.b16 %v4611, %v4604
    %v5417 = vpack.c.b16 %v4619, %v4612
    %v5418 = vpack.c.b16 %v4620, %v4613
    %v5419 = vpack.c.b16 %v4621, %v4614
    %v5420 = vpack.c.b16 %v4622, %v4615
    %v5421 = vpack.c.b16 %v4623, %v4616
    %v5422 = vpack.c.b16 %v4624, %v4617
    %v5423 = vpack.c.b16 %v4625, %v4618
    %v5424 = vpack.c.b16 %v4633, %v4626
    %v5425 = vpack.c.b16 %v4634, %v4627
    %v5426 = vpack.c.b16 %v4635, %v4628
    %v5427 = vpack.c.b16 %v4636, %v4629
    %v5428 = vpack.c.b16 %v4637, %v4630
    %v5429 = vpack.c.b16 %v4638, %v4631
    %v5430 = vpack.c.b16 %v4639, %v4632
    %v5431 = vpack.c.b16 %v4647, %v4640
    %v5432 = vpack.c.b16 %v4648, %v4641
    %v5433 = vpack.c.b16 %v4649, %v4642
    %v5434 = vpack.c.b16 %v4650, %v4643
    %v5435 = vpack.c.b16 %v4651, %v4644
    %v5436 = vpack.c.b16 %v4652, %v4645
    %v5437 = vpack.c.b16 %v4653, %v4646
    %v5438 = vpack.c.b16 %v4661, %v4654
    %v5439 = vpack.c.b16 %v4662, %v4655
    %v5440 = vpack.c.b16 %v4663, %v4656
    %v5441 = vpack.c.b16 %v4664, %v4657
    %v5442 = vpack.c.b16 %v4665, %v4658
    %v5443 = vpack.c.b16 %v4666, %v4659
    %v5444 = vpack.c.b16 %v4667, %v4660
    %v5445 = vpack.c.b16 %v4675, %v4668
    %v5446 = vpack.c.b16 %v4676, %v4669
    %v5447 = vpack.c.b16 %v4677, %v4670
    %v5448 = vpack.c.b16 %v4678, %v4671
    %v5449 = vpack.c.b16 %v4679, %v4672
    %v5450 = vpack.c.b16 %v4680, %v4673
    %v5451 = vpack.c.b16 %v4681, %v4674
    %v5452 = vpack.c.b16 %v4689, %v4682
    %v5453 = vpack.c.b16 %v4690, %v4683
    %v5454 = vpack.c.b16 %v4691, %v4684
    %v5455 = vpack.c.b16 %v4692, %v4685
    %v5456 = vpack.c.b16 %v4693, %v4686
    %v5457 = vpack.c.b16 %v4694, %v4687
    %v5458 = vpack.c.b16 %v4695, %v4688
    %v5459 = vpack.c.b16 %v4703, %v4696
    %v5460 = vpack.c.b16 %v4704, %v4697
    %v5461 = vpack.c.b16 %v4705, %v4698
    %v5462 = vpack.c.b16 %v4706, %v4699
    %v5463 = vpack.c.b16 %v4707, %v4700
    %v5464 = vpack.c.b16 %v4708, %v4701
    %v5465 = vpack.c.b16 %v4709, %v4702
    %v5466 = vpack.c.b16 %v4717, %v4710
    %v5467 = vpack.c.b16 %v4718, %v4711
    %v5468 = vpack.c.b16 %v4719, %v4712
    %v5469 = vpack.c.b16 %v4720, %v4713
    %v5470 = vpack.c.b16 %v4721, %v4714
    %v5471 = vpack.c.b16 %v4722, %v4715
    %v5472 = vpack.c.b16 %v4723, %v4716
    %v5473 = vpack.c.b16 %v4731, %v4724
    %v5474 = vpack.c.b16 %v4732, %v4725
    %v5475 = vpack.c.b16 %v4733, %v4726
    %v5476 = vpack.c.b16 %v4734, %v4727
    %v5477 = vpack.c.b16 %v4735, %v4728
    %v5478 = vpack.c.b16 %v4736, %v4729
    %v5479 = vpack.c.b16 %v4737, %v4730
    %v5480 = vpack.c.b16 %v4745, %v4738
    %v5481 = vpack.c.b16 %v4746, %v4739
    %v5482 = vpack.c.b16 %v4747, %v4740
    %v5483 = vpack.c.b16 %v4748, %v4741
    %v5484 = vpack.c.b16 %v4749, %v4742
    %v5485 = vpack.c.b16 %v4750, %v4743
    %v5486 = vpack.c.b16 %v4751, %v4744
    %v5487 = vpack.c.b16 %v4759, %v4752
    %v5488 = vpack.c.b16 %v4760, %v4753
    %v5489 = vpack.c.b16 %v4761, %v4754
    %v5490 = vpack.c.b16 %v4762, %v4755
    %v5491 = vpack.c.b16 %v4763, %v4756
    %v5492 = vpack.c.b16 %v4764, %v4757
    %v5493 = vpack.c.b16 %v4765, %v4758
    %v5494 = vpack.c.b16 %v4773, %v4766
    %v5495 = vpack.c.b16 %v4774, %v4767
    %v5496 = vpack.c.b16 %v4775, %v4768
    %v5497 = vpack.c.b16 %v4776, %v4769
    %v5498 = vpack.c.b16 %v4777, %v4770
    %v5499 = vpack.c.b16 %v4778, %v4771
    %v5500 = vpack.c.b16 %v4779, %v4772
    %v5501 = vpack.c.b16 %v4787, %v4780
    %v5502 = vpack.c.b16 %v4788, %v4781
    %v5503 = vpack.c.b16 %v4789, %v4782
    %v5504 = vpack.c.b16 %v4790, %v4783
    %v5505 = vpack.c.b16 %v4791, %v4784
    %v5506 = vpack.c.b16 %v4792, %v4785
    %v5507 = vpack.c.b16 %v4793, %v4786
    %v5508 = vpack.c.b16 %v4801, %v4794
    %v5509 = vpack.c.b16 %v4802, %v4795
    %v5510 = vpack.c.b16 %v4803, %v4796
    %v5511 = vpack.c.b16 %v4804, %v4797
    %v5512 = vpack.c.b16 %v4805, %v4798
    %v5513 = vpack.c.b16 %v4806, %v4799
    %v5514 = vpack.c.b16 %v4807, %v4800
    %v5515 = vpack.c.b16 %v4815, %v4808
    %v5516 = vpack.c.b16 %v4816, %v4809
    %v5517 = vpack.c.b16 %v4817, %v4810
    %v5518 = vpack.c.b16 %v4818, %v4811
    %v5519 = vpack.c.b16 %v4819, %v4812
    %v5520 = vpack.c.b16 %v4820, %v4813
    %v5521 = vpack.c.b16 %v4821, %v4814
    %v5522 = vpack.c.b16 %v4829, %v4822
    %v5523 = vpack.c.b16 %v4830, %v4823
    %v5524 = vpack.c.b16 %v4831, %v4824
    %v5525 = vpack.c.b16 %v4832, %v4825
    %v5526 = vpack.c.b16 %v4833, %v4826
    %v5527 = vpack.c.b16 %v4834, %v4827
    %v5528 = vpack.c.b16 %v4835, %v4828
    %v5529 = vpack.c.b16 %v4843, %v4836
    %v5530 = vpack.c.b16 %v4844, %v4837
    %v5531 = vpack.c.b16 %v4845, %v4838
    %v5532 = vpack.c.b16 %v4846, %v4839
    %v5533 = vpack.c.b16 %v4847, %v4840
    %v5534 = vpack.c.b16 %v4848, %v4841
    %v5535 = vpack.c.b16 %v4849, %v4842
    %v5536 = vpack.c.b16 %v4857, %v4850
    %v5537 = vpack.c.b16 %v4858, %v4851
    %v5538 = vpack.c.b16 %v4859, %v4852
    %v5539 = vpack.c.b16 %v4860, %v4853
    %v5540 = vpack.c.b16 %v4861, %v4854
    %v5541 = vpack.c.b16 %v4862, %v4855
    %v5542 = vpack.c.b16 %v4863, %v4856
    %v5543 = vpack.c.b16 %v4871, %v4864
    %v5544 = vpack.c.b16 %v4872, %v4865
    %v5545 = vpack.c.b16 %v4873, %v4866
    %v5546 = vpack.c.b16 %v4874, %v4867
    %v5547 = vpack.c.b16 %v4875, %v4868
    %v5548 = vpack.c.b16 %v4876, %v4869
    %v5549 = vpack.c.b16 %v4877, %v4870
    %v5550 = vpack.c.b16 %v4885, %v4878
    %v5551 = vpack.c.b16 %v4886, %v4879
    %v5552 = vpack.c.b16 %v4887, %v4880
    %v5553 = vpack.c.b16 %v4888, %v4881
    %v5554 = vpack.c.b16 %v4889, %v4882
    %v5555 = vpack.c.b16 %v4890, %v4883
    %v5556 = vpack.c.b16 %v4891, %v4884
    %v5557 = vpack.c.b16 %v4899, %v4892
    %v5558 = vpack.c.b16 %v4900, %v4893
    %v5559 = vpack.c.b16 %v4901, %v4894
    %v5560 = vpack.c.b16 %v4902, %v4895
    %v5561 = vpack.c.b16 %v4903, %v4896
    %v5562 = vpack.c.b16 %v4904, %v4897
    %v5563 = vpack.c.b16 %v4905, %v4898
    %v5564 = vpack.c.b16 %v4913, %v4906
    %v5565 = vpack.c.b16 %v4914, %v4907
    %v5566 = vpack.c.b16 %v4915, %v4908
    %v5567 = vpack.c.b16 %v4916, %v4909
    %v5568 = vpack.c.b16 %v4917, %v4910
    %v5569 = vpack.c.b16 %v4918, %v4911
    %v5570 = vpack.c.b16 %v4919, %v4912
    %v5571 = vpack.c.b16 %v4927, %v4920
    %v5572 = vpack.c.b16 %v4928, %v4921
    %v5573 = vpack.c.b16 %v4929, %v4922
    %v5574 = vpack.c.b16 %v4930, %v4923
    %v5575 = vpack.c.b16 %v4931, %v4924
    %v5576 = vpack.c.b16 %v4932, %v4925
    %v5577 = vpack.c.b16 %v4933, %v4926
    %v5578 = vpack.c.b16 %v4941, %v4934
    %v5579 = vpack.c.b16 %v4942, %v4935
    %v5580 = vpack.c.b16 %v4943, %v4936
    %v5581 = vpack.c.b16 %v4944, %v4937
    %v5582 = vpack.c.b16 %v4945, %v4938
    %v5583 = vpack.c.b16 %v4946, %v4939
    %v5584 = vpack.c.b16 %v4947, %v4940
    %v5585 = vpack.c.b16 %v4955, %v4948
    %v5586 = vpack.c.b16 %v4956, %v4949
    %v5587 = vpack.c.b16 %v4957, %v4950
    %v5588 = vpack.c.b16 %v4958, %v4951
    %v5589 = vpack.c.b16 %v4959, %v4952
    %v5590 = vpack.c.b16 %v4960, %v4953
    %v5591 = vpack.c.b16 %v4961, %v4954
    %v5592 = vpack.c.b16 %v4969, %v4962
    %v5593 = vpack.c.b16 %v4970, %v4963
    %v5594 = vpack.c.b16 %v4971, %v4964
    %v5595 = vpack.c.b16 %v4972, %v4965
    %v5596 = vpack.c.b16 %v4973, %v4966
    %v5597 = vpack.c.b16 %v4974, %v4967
    %v5598 = vpack.c.b16 %v4975, %v4968
    %v5599 = vpack.c.b16 %v4983, %v4976
    %v5600 = vpack.c.b16 %v4984, %v4977
    %v5601 = vpack.c.b16 %v4985, %v4978
    %v5602 = vpack.c.b16 %v4986, %v4979
    %v5603 = vpack.c.b16 %v4987, %v4980
    %v5604 = vpack.c.b16 %v4988, %v4981
    %v5605 = vpack.c.b16 %v4989, %v4982
    %v5606 = vpack.c.b16 %v4997, %v4990
    %v5607 = vpack.c.b16 %v4998, %v4991
    %v5608 = vpack.c.b16 %v4999, %v4992
    %v5609 = vpack.c.b16 %v5000, %v4993
    %v5610 = vpack.c.b16 %v5001, %v4994
    %v5611 = vpack.c.b16 %v5002, %v4995
    %v5612 = vpack.c.b16 %v5003, %v4996
    %v5613 = vpack.c.b16 %v5011, %v5004
    %v5614 = vpack.c.b16 %v5012, %v5005
    %v5615 = vpack.c.b16 %v5013, %v5006
    %v5616 = vpack.c.b16 %v5014, %v5007
    %v5617 = vpack.c.b16 %v5015, %v5008
    %v5618 = vpack.c.b16 %v5016, %v5009
    %v5619 = vpack.c.b16 %v5017, %v5010
    %v5620 = vpack.c.b16 %v5025, %v5018
    %v5621 = vpack.c.b16 %v5026, %v5019
    %v5622 = vpack.c.b16 %v5027, %v5020
    %v5623 = vpack.c.b16 %v5028, %v5021
    %v5624 = vpack.c.b16 %v5029, %v5022
    %v5625 = vpack.c.b16 %v5030, %v5023
    %v5626 = vpack.c.b16 %v5031, %v5024
    %v5627 = vpack.c.b16 %v5039, %v5032
    %v5628 = vpack.c.b16 %v5040, %v5033
    %v5629 = vpack.c.b16 %v5041, %v5034
    %v5630 = vpack.c.b16 %v5042, %v5035
    %v5631 = vpack.c.b16 %v5043, %v5036
    %v5632 = vpack.c.b16 %v5044, %v5037
    %v5633 = vpack.c.b16 %v5045, %v5038
    %v5634 = vpack.c.b16 %v5053, %v5046
    %v5635 = vpack.c.b16 %v5054, %v5047
    %v5636 = vpack.c.b16 %v5055, %v5048
    %v5637 = vpack.c.b16 %v5056, %v5049
    %v5638 = vpack.c.b16 %v5057, %v5050
    %v5639 = vpack.c.b16 %v5058, %v5051
    %v5640 = vpack.c.b16 %v5059, %v5052
    %v5641 = vpack.c.b16 %v5067, %v5060
    %v5642 = vpack.c.b16 %v5068, %v5061
    %v5643 = vpack.c.b16 %v5069, %v5062
    %v5644 = vpack.c.b16 %v5070, %v5063
    %v5645 = vpack.c.b16 %v5071, %v5064
    %v5646 = vpack.c.b16 %v5072, %v5065
    %v5647 = vpack.c.b16 %v5073, %v5066
    %v5648 = vpack.c.b16 %v5081, %v5074
    %v5649 = vpack.c.b16 %v5082, %v5075
    %v5650 = vpack.c.b16 %v5083, %v5076
    %v5651 = vpack.c.b16 %v5084, %v5077
    %v5652 = vpack.c.b16 %v5085, %v5078
    %v5653 = vpack.c.b16 %v5086, %v5079
    %v5654 = vpack.c.b16 %v5087, %v5080
    %v5655 = vpack.c.b16 %v5095, %v5088
    %v5656 = vpack.c.b16 %v5096, %v5089
    %v5657 = vpack.c.b16 %v5097, %v5090
    %v5658 = vpack.c.b16 %v5098, %v5091
    %v5659 = vpack.c.b16 %v5099, %v5092
    %v5660 = vpack.c.b16 %v5100, %v5093
    %v5661 = vpack.c.b16 %v5101, %v5094
    %v5662 = vpack.c.b16 %v5109, %v5102
    %v5663 = vpack.c.b16 %v5110, %v5103
    %v5664 = vpack.c.b16 %v5111, %v5104
    %v5665 = vpack.c.b16 %v5112, %v5105
    %v5666 = vpack.c.b16 %v5113, %v5106
    %v5667 = vpack.c.b16 %v5114, %v5107
    %v5668 = vpack.c.b16 %v5115, %v5108
    %v5669 = vpack.c.b16 %v5123, %v5116
    %v5670 = vpack.c.b16 %v5124, %v5117
    %v5671 = vpack.c.b16 %v5125, %v5118
    %v5672 = vpack.c.b16 %v5126, %v5119
    %v5673 = vpack.c.b16 %v5127, %v5120
    %v5674 = vpack.c.b16 %v5128, %v5121
    %v5675 = vpack.c.b16 %v5129, %v5122
    %v5676 = vpack.c.b16 %v5137, %v5130
    %v5677 = vpack.c.b16 %v5138, %v5131
    %v5678 = vpack.c.b16 %v5139, %v5132
    %v5679 = vpack.c.b16 %v5140, %v5133
    %v5680 = vpack.c.b16 %v5141, %v5134
    %v5681 = vpack.c.b16 %v5142, %v5135
    %v5682 = vpack.c.b16 %v5143, %v5136
    %v5683 = vpack.c.b16 %v5151, %v5144
    %v5684 = vpack.c.b16 %v5152, %v5145
    %v5685 = vpack.c.b16 %v5153, %v5146
    %v5686 = vpack.c.b16 %v5154, %v5147
    %v5687 = vpack.c.b16 %v5155, %v5148
    %v5688 = vpack.c.b16 %v5156, %v5149
    %v5689 = vpack.c.b16 %v5157, %v5150
    %v5690 = vpack.c.b16 %v5165, %v5158
    %v5691 = vpack.c.b16 %v5166, %v5159
    %v5692 = vpack.c.b16 %v5167, %v5160
    %v5693 = vpack.c.b16 %v5168, %v5161
    %v5694 = vpack.c.b16 %v5169, %v5162
    %v5695 = vpack.c.b16 %v5170, %v5163
    %v5696 = vpack.c.b16 %v5171, %v5164
    %v5697 = vpack.c.b16 %v5179, %v5172
    %v5698 = vpack.c.b16 %v5180, %v5173
    %v5699 = vpack.c.b16 %v5181, %v5174
    %v5700 = vpack.c.b16 %v5182, %v5175
    %v5701 = vpack.c.b16 %v5183, %v5176
    %v5702 = vpack.c.b16 %v5184, %v5177
    %v5703 = vpack.c.b16 %v5185, %v5178
    %v5704 = vpack.c.b16 %v5193, %v5186
    %v5705 = vpack.c.b16 %v5194, %v5187
    %v5706 = vpack.c.b16 %v5195, %v5188
    %v5707 = vpack.c.b16 %v5196, %v5189
    %v5708 = vpack.c.b16 %v5197, %v5190
    %v5709 = vpack.c.b16 %v5198, %v5191
    %v5710 = vpack.c.b16 %v5199, %v5192
    %v5711 = vpack.c.b16 %v5207, %v5200
    %v5712 = vpack.c.b16 %v5208, %v5201
    %v5713 = vpack.c.b16 %v5209, %v5202
    %v5714 = vpack.c.b16 %v5210, %v5203
    %v5715 = vpack.c.b16 %v5211, %v5204
    %v5716 = vpack.c.b16 %v5212, %v5205
    %v5717 = vpack.c.b16 %v5213, %v5206
    %v5718 = vpack.c.b16 %v5221, %v5214
    %v5719 = vpack.c.b16 %v5222, %v5215
    %v5720 = vpack.c.b16 %v5223, %v5216
    %v5721 = vpack.c.b16 %v5224, %v5217
    %v5722 = vpack.c.b16 %v5225, %v5218
    %v5723 = vpack.c.b16 %v5226, %v5219
    %v5724 = vpack.c.b16 %v5227, %v5220
    %v5725 = vpack.c.b16 %v5235, %v5228
    %v5726 = vpack.c.b16 %v5236, %v5229
    %v5727 = vpack.c.b16 %v5237, %v5230
    %v5728 = vpack.c.b16 %v5238, %v5231
    %v5729 = vpack.c.b16 %v5239, %v5232
    %v5730 = vpack.c.b16 %v5240, %v5233
    %v5731 = vpack.c.b16 %v5241, %v5234
    %v5732 = vpack.c.b16 %v5249, %v5242
    %v5733 = vpack.c.b16 %v5250, %v5243
    %v5734 = vpack.c.b16 %v5251, %v5244
    %v5735 = vpack.c.b16 %v5252, %v5245
    %v5736 = vpack.c.b16 %v5253, %v5246
    %v5737 = vpack.c.b16 %v5254, %v5247
    %v5738 = vpack.c.b16 %v5255, %v5248
    %v5739 = vpack.c.b16 %v5263, %v5256
    %v5740 = vpack.c.b16 %v5264, %v5257
    %v5741 = vpack.c.b16 %v5265, %v5258
    %v5742 = vpack.c.b16 %v5266, %v5259
    %v5743 = vpack.c.b16 %v5267, %v5260
    %v5744 = vpack.c.b16 %v5268, %v5261
    %v5745 = vpack.c.b16 %v5269, %v5262
    %v5746 = vpack.c.b16 %v5277, %v5270
    %v5747 = vpack.c.b16 %v5278, %v5271
    %v5748 = vpack.c.b16 %v5279, %v5272
    %v5749 = vpack.c.b16 %v5280, %v5273
    %v5750 = vpack.c.b16 %v5281, %v5274
    %v5751 = vpack.c.b16 %v5282, %v5275
    %v5752 = vpack.c.b16 %v5283, %v5276
    %v5753 = vpack.c.b16 %v5291, %v5284
    %v5754 = vpack.c.b16 %v5292, %v5285
    %v5755 = vpack.c.b16 %v5293, %v5286
    %v5756 = vpack.c.b16 %v5294, %v5287
    %v5757 = vpack.c.b16 %v5295, %v5288
    %v5758 = vpack.c.b16 %v5296, %v5289
    %v5759 = vpack.c.b16 %v5297, %v5290
    %v5760 = vpack.c.b16 %v5305, %v5298
    %v5761 = vpack.c.b16 %v5306, %v5299
    %v5762 = vpack.c.b16 %v5307, %v5300
    %v5763 = vpack.c.b16 %v5308, %v5301
    %v5764 = vpack.c.b16 %v5309, %v5302
    %v5765 = vpack.c.b16 %v5310, %v5303
    %v5766 = vpack.c.b16 %v5311, %v5304
    %v5767 = vpack.c.b16 %v5319, %v5312
    %v5768 = vpack.c.b16 %v5320, %v5313
    %v5769 = vpack.c.b16 %v5321, %v5314
    %v5770 = vpack.c.b16 %v5322, %v5315
    %v5771 = vpack.c.b16 %v5323, %v5316
    %v5772 = vpack.c.b16 %v5324, %v5317
    %v5773 = vpack.c.b16 %v5325, %v5318
    %6222 = vmatpush.bf16.msra.mxu0 %v5375
    %6223 = vmatpush.bf16.msra.mxu0 %v5368
    %6224 = vmatpush.bf16.msra.mxu0 %v5361
    %6225 = vmatpush.bf16.msra.mxu0 %v5354
    %6226 = vmatpush.bf16.msra.mxu0 %v5347
    %6227 = vmatpush.bf16.msra.mxu0 %v5340
    %6228 = vmatpush.bf16.msra.mxu0 %v5333
    %6229 = vmatpush.bf16.msra.mxu0 %v5326
    %6230 = vmatmul.bf16.gmra.mxu0 %v3895
    %v6231 = vpop.f32.mrf.mxu0
    %v6232 = vadd.f32 %v3904, %v6231
    %v6233 = vpop.f32.mrf.mxu0
    %6234 = vdwg.mxu0
    %6235 = vmatpush.bf16.msra.mxu0 %v5431
    %6236 = vmatpush.bf16.msra.mxu0 %v5424
    %6237 = vmatpush.bf16.msra.mxu0 %v5417
    %6238 = vmatpush.bf16.msra.mxu0 %v5410
    %6239 = vmatpush.bf16.msra.mxu0 %v5403
    %6240 = vmatpush.bf16.msra.mxu0 %v5396
    %6241 = vmatpush.bf16.msra.mxu0 %v5389
    %6242 = vmatpush.bf16.msra.mxu0 %v5382
    %6243 = vmatmul.bf16.gmra.mxu0 %v3896
    %v6244 = vpop.f32.mrf.mxu0
    %v6245 = vadd.f32 %v6232, %v6244
    %v6246 = vpop.f32.mrf.mxu0
    %6247 = vdwg.mxu0
    %6248 = vmatpush.bf16.msra.mxu0 %v5487
    %6249 = vmatpush.bf16.msra.mxu0 %v5480
    %6250 = vmatpush.bf16.msra.mxu0 %v5473
    %6251 = vmatpush.bf16.msra.mxu0 %v5466
    %6252 = vmatpush.bf16.msra.mxu0 %v5459
    %6253 = vmatpush.bf16.msra.mxu0 %v5452
    %6254 = vmatpush.bf16.msra.mxu0 %v5445
    %6255 = vmatpush.bf16.msra.mxu0 %v5438
    %6256 = vmatmul.bf16.gmra.mxu0 %v3897
    %v6257 = vpop.f32.mrf.mxu0
    %v6258 = vadd.f32 %v6245, %v6257
    %v6259 = vpop.f32.mrf.mxu0
    %6260 = vdwg.mxu0
    %6261 = vmatpush.bf16.msra.mxu0 %v5543
    %6262 = vmatpush.bf16.msra.mxu0 %v5536
    %6263 = vmatpush.bf16.msra.mxu0 %v5529
    %6264 = vmatpush.bf16.msra.mxu0 %v5522
    %6265 = vmatpush.bf16.msra.mxu0 %v5515
    %6266 = vmatpush.bf16.msra.mxu0 %v5508
    %6267 = vmatpush.bf16.msra.mxu0 %v5501
    %6268 = vmatpush.bf16.msra.mxu0 %v5494
    %6269 = vmatmul.bf16.gmra.mxu0 %v3898
    %v6270 = vpop.f32.mrf.mxu0
    %v6271 = vadd.f32 %v6258, %v6270
    %v6272 = vpop.f32.mrf.mxu0
    %6273 = vdwg.mxu0
    %6274 = vmatpush.bf16.msra.mxu0 %v5599
    %6275 = vmatpush.bf16.msra.mxu0 %v5592
    %6276 = vmatpush.bf16.msra.mxu0 %v5585
    %6277 = vmatpush.bf16.msra.mxu0 %v5578
    %6278 = vmatpush.bf16.msra.mxu0 %v5571
    %6279 = vmatpush.bf16.msra.mxu0 %v5564
    %6280 = vmatpush.bf16.msra.mxu0 %v5557
    %6281 = vmatpush.bf16.msra.mxu0 %v5550
    %6282 = vmatmul.bf16.gmra.mxu0 %v3899
    %v6283 = vpop.f32.mrf.mxu0
    %v6284 = vadd.f32 %v6271, %v6283
    %v6285 = vpop.f32.mrf.mxu0
    %6286 = vdwg.mxu0
    %6287 = vmatpush.bf16.msra.mxu0 %v5655
    %6288 = vmatpush.bf16.msra.mxu0 %v5648
    %6289 = vmatpush.bf16.msra.mxu0 %v5641
    %6290 = vmatpush.bf16.msra.mxu0 %v5634
    %6291 = vmatpush.bf16.msra.mxu0 %v5627
    %6292 = vmatpush.bf16.msra.mxu0 %v5620
    %6293 = vmatpush.bf16.msra.mxu0 %v5613
    %6294 = vmatpush.bf16.msra.mxu0 %v5606
    %6295 = vmatmul.bf16.gmra.mxu0 %v3900
    %v6296 = vpop.f32.mrf.mxu0
    %v6297 = vadd.f32 %v6284, %v6296
    %v6298 = vpop.f32.mrf.mxu0
    %6299 = vdwg.mxu0
    %6300 = vmatpush.bf16.msra.mxu0 %v5711
    %6301 = vmatpush.bf16.msra.mxu0 %v5704
    %6302 = vmatpush.bf16.msra.mxu0 %v5697
    %6303 = vmatpush.bf16.msra.mxu0 %v5690
    %6304 = vmatpush.bf16.msra.mxu0 %v5683
    %6305 = vmatpush.bf16.msra.mxu0 %v5676
    %6306 = vmatpush.bf16.msra.mxu0 %v5669
    %6307 = vmatpush.bf16.msra.mxu0 %v5662
    %6308 = vmatmul.bf16.gmra.mxu0 %v3901
    %v6309 = vpop.f32.mrf.mxu0
    %v6310 = vadd.f32 %v6297, %v6309
    %v6311 = vpop.f32.mrf.mxu0
    %6312 = vdwg.mxu0
    %6313 = vmatpush.bf16.msra.mxu0 %v5767
    %6314 = vmatpush.bf16.msra.mxu0 %v5760
    %6315 = vmatpush.bf16.msra.mxu0 %v5753
    %6316 = vmatpush.bf16.msra.mxu0 %v5746
    %6317 = vmatpush.bf16.msra.mxu0 %v5739
    %6318 = vmatpush.bf16.msra.mxu0 %v5732
    %6319 = vmatpush.bf16.msra.mxu0 %v5725
    %6320 = vmatpush.bf16.msra.mxu0 %v5718
    %6321 = vmatmul.bf16.gmra.mxu0 %v3902
    %v6322 = vpop.f32.mrf.mxu0
    %v6323 = vadd.f32 %v6310, %v6322
    %v6324 = vpop.f32.mrf.mxu0
    %6325 = vdwg.mxu0
    %6326 = vmatpush.bf16.msra.mxu0 %v5376
    %6327 = vmatpush.bf16.msra.mxu0 %v5369
    %6328 = vmatpush.bf16.msra.mxu0 %v5362
    %6329 = vmatpush.bf16.msra.mxu0 %v5355
    %6330 = vmatpush.bf16.msra.mxu0 %v5348
    %6331 = vmatpush.bf16.msra.mxu0 %v5341
    %6332 = vmatpush.bf16.msra.mxu0 %v5334
    %6333 = vmatpush.bf16.msra.mxu0 %v5327
    %6334 = vmatmul.bf16.gmra.mxu0 %v3895
    %v6335 = vpop.f32.mrf.mxu0
    %v6336 = vadd.f32 %v3905, %v6335
    %v6337 = vpop.f32.mrf.mxu0
    %6338 = vdwg.mxu0
    %6339 = vmatpush.bf16.msra.mxu0 %v5432
    %6340 = vmatpush.bf16.msra.mxu0 %v5425
    %6341 = vmatpush.bf16.msra.mxu0 %v5418
    %6342 = vmatpush.bf16.msra.mxu0 %v5411
    %6343 = vmatpush.bf16.msra.mxu0 %v5404
    %6344 = vmatpush.bf16.msra.mxu0 %v5397
    %6345 = vmatpush.bf16.msra.mxu0 %v5390
    %6346 = vmatpush.bf16.msra.mxu0 %v5383
    %6347 = vmatmul.bf16.gmra.mxu0 %v3896
    %v6348 = vpop.f32.mrf.mxu0
    %v6349 = vadd.f32 %v6336, %v6348
    %v6350 = vpop.f32.mrf.mxu0
    %6351 = vdwg.mxu0
    %6352 = vmatpush.bf16.msra.mxu0 %v5488
    %6353 = vmatpush.bf16.msra.mxu0 %v5481
    %6354 = vmatpush.bf16.msra.mxu0 %v5474
    %6355 = vmatpush.bf16.msra.mxu0 %v5467
    %6356 = vmatpush.bf16.msra.mxu0 %v5460
    %6357 = vmatpush.bf16.msra.mxu0 %v5453
    %6358 = vmatpush.bf16.msra.mxu0 %v5446
    %6359 = vmatpush.bf16.msra.mxu0 %v5439
    %6360 = vmatmul.bf16.gmra.mxu0 %v3897
    %v6361 = vpop.f32.mrf.mxu0
    %v6362 = vadd.f32 %v6349, %v6361
    %v6363 = vpop.f32.mrf.mxu0
    %6364 = vdwg.mxu0
    %6365 = vmatpush.bf16.msra.mxu0 %v5544
    %6366 = vmatpush.bf16.msra.mxu0 %v5537
    %6367 = vmatpush.bf16.msra.mxu0 %v5530
    %6368 = vmatpush.bf16.msra.mxu0 %v5523
    %6369 = vmatpush.bf16.msra.mxu0 %v5516
    %6370 = vmatpush.bf16.msra.mxu0 %v5509
    %6371 = vmatpush.bf16.msra.mxu0 %v5502
    %6372 = vmatpush.bf16.msra.mxu0 %v5495
    %6373 = vmatmul.bf16.gmra.mxu0 %v3898
    %v6374 = vpop.f32.mrf.mxu0
    %v6375 = vadd.f32 %v6362, %v6374
    %v6376 = vpop.f32.mrf.mxu0
    %6377 = vdwg.mxu0
    %6378 = vmatpush.bf16.msra.mxu0 %v5600
    %6379 = vmatpush.bf16.msra.mxu0 %v5593
    %6380 = vmatpush.bf16.msra.mxu0 %v5586
    %6381 = vmatpush.bf16.msra.mxu0 %v5579
    %6382 = vmatpush.bf16.msra.mxu0 %v5572
    %6383 = vmatpush.bf16.msra.mxu0 %v5565
    %6384 = vmatpush.bf16.msra.mxu0 %v5558
    %6385 = vmatpush.bf16.msra.mxu0 %v5551
    %6386 = vmatmul.bf16.gmra.mxu0 %v3899
    %v6387 = vpop.f32.mrf.mxu0
    %v6388 = vadd.f32 %v6375, %v6387
    %v6389 = vpop.f32.mrf.mxu0
    %6390 = vdwg.mxu0
    %6391 = vmatpush.bf16.msra.mxu0 %v5656
    %6392 = vmatpush.bf16.msra.mxu0 %v5649
    %6393 = vmatpush.bf16.msra.mxu0 %v5642
    %6394 = vmatpush.bf16.msra.mxu0 %v5635
    %6395 = vmatpush.bf16.msra.mxu0 %v5628
    %6396 = vmatpush.bf16.msra.mxu0 %v5621
    %6397 = vmatpush.bf16.msra.mxu0 %v5614
    %6398 = vmatpush.bf16.msra.mxu0 %v5607
    %6399 = vmatmul.bf16.gmra.mxu0 %v3900
    %v6400 = vpop.f32.mrf.mxu0
    %v6401 = vadd.f32 %v6388, %v6400
    %v6402 = vpop.f32.mrf.mxu0
    %6403 = vdwg.mxu0
    %6404 = vmatpush.bf16.msra.mxu0 %v5712
    %6405 = vmatpush.bf16.msra.mxu0 %v5705
    %6406 = vmatpush.bf16.msra.mxu0 %v5698
    %6407 = vmatpush.bf16.msra.mxu0 %v5691
    %6408 = vmatpush.bf16.msra.mxu0 %v5684
    %6409 = vmatpush.bf16.msra.mxu0 %v5677
    %6410 = vmatpush.bf16.msra.mxu0 %v5670
    %6411 = vmatpush.bf16.msra.mxu0 %v5663
    %6412 = vmatmul.bf16.gmra.mxu0 %v3901
    %v6413 = vpop.f32.mrf.mxu0
    %v6414 = vadd.f32 %v6401, %v6413
    %v6415 = vpop.f32.mrf.mxu0
    %6416 = vdwg.mxu0
    %6417 = vmatpush.bf16.msra.mxu0 %v5768
    %6418 = vmatpush.bf16.msra.mxu0 %v5761
    %6419 = vmatpush.bf16.msra.mxu0 %v5754
    %6420 = vmatpush.bf16.msra.mxu0 %v5747
    %6421 = vmatpush.bf16.msra.mxu0 %v5740
    %6422 = vmatpush.bf16.msra.mxu0 %v5733
    %6423 = vmatpush.bf16.msra.mxu0 %v5726
    %6424 = vmatpush.bf16.msra.mxu0 %v5719
    %6425 = vmatmul.bf16.gmra.mxu0 %v3902
    %v6426 = vpop.f32.mrf.mxu0
    %v6427 = vadd.f32 %v6414, %v6426
    %v6428 = vpop.f32.mrf.mxu0
    %6429 = vdwg.mxu0
    %6430 = vmatpush.bf16.msra.mxu0 %v5377
    %6431 = vmatpush.bf16.msra.mxu0 %v5370
    %6432 = vmatpush.bf16.msra.mxu0 %v5363
    %6433 = vmatpush.bf16.msra.mxu0 %v5356
    %6434 = vmatpush.bf16.msra.mxu0 %v5349
    %6435 = vmatpush.bf16.msra.mxu0 %v5342
    %6436 = vmatpush.bf16.msra.mxu0 %v5335
    %6437 = vmatpush.bf16.msra.mxu0 %v5328
    %6438 = vmatmul.bf16.gmra.mxu0 %v3895
    %v6439 = vpop.f32.mrf.mxu0
    %v6440 = vadd.f32 %v3906, %v6439
    %v6441 = vpop.f32.mrf.mxu0
    %6442 = vdwg.mxu0
    %6443 = vmatpush.bf16.msra.mxu0 %v5433
    %6444 = vmatpush.bf16.msra.mxu0 %v5426
    %6445 = vmatpush.bf16.msra.mxu0 %v5419
    %6446 = vmatpush.bf16.msra.mxu0 %v5412
    %6447 = vmatpush.bf16.msra.mxu0 %v5405
    %6448 = vmatpush.bf16.msra.mxu0 %v5398
    %6449 = vmatpush.bf16.msra.mxu0 %v5391
    %6450 = vmatpush.bf16.msra.mxu0 %v5384
    %6451 = vmatmul.bf16.gmra.mxu0 %v3896
    %v6452 = vpop.f32.mrf.mxu0
    %v6453 = vadd.f32 %v6440, %v6452
    %v6454 = vpop.f32.mrf.mxu0
    %6455 = vdwg.mxu0
    %6456 = vmatpush.bf16.msra.mxu0 %v5489
    %6457 = vmatpush.bf16.msra.mxu0 %v5482
    %6458 = vmatpush.bf16.msra.mxu0 %v5475
    %6459 = vmatpush.bf16.msra.mxu0 %v5468
    %6460 = vmatpush.bf16.msra.mxu0 %v5461
    %6461 = vmatpush.bf16.msra.mxu0 %v5454
    %6462 = vmatpush.bf16.msra.mxu0 %v5447
    %6463 = vmatpush.bf16.msra.mxu0 %v5440
    %6464 = vmatmul.bf16.gmra.mxu0 %v3897
    %v6465 = vpop.f32.mrf.mxu0
    %v6466 = vadd.f32 %v6453, %v6465
    %v6467 = vpop.f32.mrf.mxu0
    %6468 = vdwg.mxu0
    %6469 = vmatpush.bf16.msra.mxu0 %v5545
    %6470 = vmatpush.bf16.msra.mxu0 %v5538
    %6471 = vmatpush.bf16.msra.mxu0 %v5531
    %6472 = vmatpush.bf16.msra.mxu0 %v5524
    %6473 = vmatpush.bf16.msra.mxu0 %v5517
    %6474 = vmatpush.bf16.msra.mxu0 %v5510
    %6475 = vmatpush.bf16.msra.mxu0 %v5503
    %6476 = vmatpush.bf16.msra.mxu0 %v5496
    %6477 = vmatmul.bf16.gmra.mxu0 %v3898
    %v6478 = vpop.f32.mrf.mxu0
    %v6479 = vadd.f32 %v6466, %v6478
    %v6480 = vpop.f32.mrf.mxu0
    %6481 = vdwg.mxu0
    %6482 = vmatpush.bf16.msra.mxu0 %v5601
    %6483 = vmatpush.bf16.msra.mxu0 %v5594
    %6484 = vmatpush.bf16.msra.mxu0 %v5587
    %6485 = vmatpush.bf16.msra.mxu0 %v5580
    %6486 = vmatpush.bf16.msra.mxu0 %v5573
    %6487 = vmatpush.bf16.msra.mxu0 %v5566
    %6488 = vmatpush.bf16.msra.mxu0 %v5559
    %6489 = vmatpush.bf16.msra.mxu0 %v5552
    %6490 = vmatmul.bf16.gmra.mxu0 %v3899
    %v6491 = vpop.f32.mrf.mxu0
    %v6492 = vadd.f32 %v6479, %v6491
    %v6493 = vpop.f32.mrf.mxu0
    %6494 = vdwg.mxu0
    %6495 = vmatpush.bf16.msra.mxu0 %v5657
    %6496 = vmatpush.bf16.msra.mxu0 %v5650
    %6497 = vmatpush.bf16.msra.mxu0 %v5643
    %6498 = vmatpush.bf16.msra.mxu0 %v5636
    %6499 = vmatpush.bf16.msra.mxu0 %v5629
    %6500 = vmatpush.bf16.msra.mxu0 %v5622
    %6501 = vmatpush.bf16.msra.mxu0 %v5615
    %6502 = vmatpush.bf16.msra.mxu0 %v5608
    %6503 = vmatmul.bf16.gmra.mxu0 %v3900
    %v6504 = vpop.f32.mrf.mxu0
    %v6505 = vadd.f32 %v6492, %v6504
    %v6506 = vpop.f32.mrf.mxu0
    %6507 = vdwg.mxu0
    %6508 = vmatpush.bf16.msra.mxu0 %v5713
    %6509 = vmatpush.bf16.msra.mxu0 %v5706
    %6510 = vmatpush.bf16.msra.mxu0 %v5699
    %6511 = vmatpush.bf16.msra.mxu0 %v5692
    %6512 = vmatpush.bf16.msra.mxu0 %v5685
    %6513 = vmatpush.bf16.msra.mxu0 %v5678
    %6514 = vmatpush.bf16.msra.mxu0 %v5671
    %6515 = vmatpush.bf16.msra.mxu0 %v5664
    %6516 = vmatmul.bf16.gmra.mxu0 %v3901
    %v6517 = vpop.f32.mrf.mxu0
    %v6518 = vadd.f32 %v6505, %v6517
    %v6519 = vpop.f32.mrf.mxu0
    %6520 = vdwg.mxu0
    %6521 = vmatpush.bf16.msra.mxu0 %v5769
    %6522 = vmatpush.bf16.msra.mxu0 %v5762
    %6523 = vmatpush.bf16.msra.mxu0 %v5755
    %6524 = vmatpush.bf16.msra.mxu0 %v5748
    %6525 = vmatpush.bf16.msra.mxu0 %v5741
    %6526 = vmatpush.bf16.msra.mxu0 %v5734
    %6527 = vmatpush.bf16.msra.mxu0 %v5727
    %6528 = vmatpush.bf16.msra.mxu0 %v5720
    %6529 = vmatmul.bf16.gmra.mxu0 %v3902
    %v6530 = vpop.f32.mrf.mxu0
    %v6531 = vadd.f32 %v6518, %v6530
    %v6532 = vpop.f32.mrf.mxu0
    %6533 = vdwg.mxu0
    %6534 = vmatpush.bf16.msra.mxu0 %v5378
    %6535 = vmatpush.bf16.msra.mxu0 %v5371
    %6536 = vmatpush.bf16.msra.mxu0 %v5364
    %6537 = vmatpush.bf16.msra.mxu0 %v5357
    %6538 = vmatpush.bf16.msra.mxu0 %v5350
    %6539 = vmatpush.bf16.msra.mxu0 %v5343
    %6540 = vmatpush.bf16.msra.mxu0 %v5336
    %6541 = vmatpush.bf16.msra.mxu0 %v5329
    %6542 = vmatmul.bf16.gmra.mxu0 %v3895
    %v6543 = vpop.f32.mrf.mxu0
    %v6544 = vadd.f32 %v3907, %v6543
    %v6545 = vpop.f32.mrf.mxu0
    %6546 = vdwg.mxu0
    %6547 = vmatpush.bf16.msra.mxu0 %v5434
    %6548 = vmatpush.bf16.msra.mxu0 %v5427
    %6549 = vmatpush.bf16.msra.mxu0 %v5420
    %6550 = vmatpush.bf16.msra.mxu0 %v5413
    %6551 = vmatpush.bf16.msra.mxu0 %v5406
    %6552 = vmatpush.bf16.msra.mxu0 %v5399
    %6553 = vmatpush.bf16.msra.mxu0 %v5392
    %6554 = vmatpush.bf16.msra.mxu0 %v5385
    %6555 = vmatmul.bf16.gmra.mxu0 %v3896
    %v6556 = vpop.f32.mrf.mxu0
    %v6557 = vadd.f32 %v6544, %v6556
    %v6558 = vpop.f32.mrf.mxu0
    %6559 = vdwg.mxu0
    %6560 = vmatpush.bf16.msra.mxu0 %v5490
    %6561 = vmatpush.bf16.msra.mxu0 %v5483
    %6562 = vmatpush.bf16.msra.mxu0 %v5476
    %6563 = vmatpush.bf16.msra.mxu0 %v5469
    %6564 = vmatpush.bf16.msra.mxu0 %v5462
    %6565 = vmatpush.bf16.msra.mxu0 %v5455
    %6566 = vmatpush.bf16.msra.mxu0 %v5448
    %6567 = vmatpush.bf16.msra.mxu0 %v5441
    %6568 = vmatmul.bf16.gmra.mxu0 %v3897
    %v6569 = vpop.f32.mrf.mxu0
    %v6570 = vadd.f32 %v6557, %v6569
    %v6571 = vpop.f32.mrf.mxu0
    %6572 = vdwg.mxu0
    %6573 = vmatpush.bf16.msra.mxu0 %v5546
    %6574 = vmatpush.bf16.msra.mxu0 %v5539
    %6575 = vmatpush.bf16.msra.mxu0 %v5532
    %6576 = vmatpush.bf16.msra.mxu0 %v5525
    %6577 = vmatpush.bf16.msra.mxu0 %v5518
    %6578 = vmatpush.bf16.msra.mxu0 %v5511
    %6579 = vmatpush.bf16.msra.mxu0 %v5504
    %6580 = vmatpush.bf16.msra.mxu0 %v5497
    %6581 = vmatmul.bf16.gmra.mxu0 %v3898
    %v6582 = vpop.f32.mrf.mxu0
    %v6583 = vadd.f32 %v6570, %v6582
    %v6584 = vpop.f32.mrf.mxu0
    %6585 = vdwg.mxu0
    %6586 = vmatpush.bf16.msra.mxu0 %v5602
    %6587 = vmatpush.bf16.msra.mxu0 %v5595
    %6588 = vmatpush.bf16.msra.mxu0 %v5588
    %6589 = vmatpush.bf16.msra.mxu0 %v5581
    %6590 = vmatpush.bf16.msra.mxu0 %v5574
    %6591 = vmatpush.bf16.msra.mxu0 %v5567
    %6592 = vmatpush.bf16.msra.mxu0 %v5560
    %6593 = vmatpush.bf16.msra.mxu0 %v5553
    %6594 = vmatmul.bf16.gmra.mxu0 %v3899
    %v6595 = vpop.f32.mrf.mxu0
    %v6596 = vadd.f32 %v6583, %v6595
    %v6597 = vpop.f32.mrf.mxu0
    %6598 = vdwg.mxu0
    %6599 = vmatpush.bf16.msra.mxu0 %v5658
    %6600 = vmatpush.bf16.msra.mxu0 %v5651
    %6601 = vmatpush.bf16.msra.mxu0 %v5644
    %6602 = vmatpush.bf16.msra.mxu0 %v5637
    %6603 = vmatpush.bf16.msra.mxu0 %v5630
    %6604 = vmatpush.bf16.msra.mxu0 %v5623
    %6605 = vmatpush.bf16.msra.mxu0 %v5616
    %6606 = vmatpush.bf16.msra.mxu0 %v5609
    %6607 = vmatmul.bf16.gmra.mxu0 %v3900
    %v6608 = vpop.f32.mrf.mxu0
    %v6609 = vadd.f32 %v6596, %v6608
    %v6610 = vpop.f32.mrf.mxu0
    %6611 = vdwg.mxu0
    %6612 = vmatpush.bf16.msra.mxu0 %v5714
    %6613 = vmatpush.bf16.msra.mxu0 %v5707
    %6614 = vmatpush.bf16.msra.mxu0 %v5700
    %6615 = vmatpush.bf16.msra.mxu0 %v5693
    %6616 = vmatpush.bf16.msra.mxu0 %v5686
    %6617 = vmatpush.bf16.msra.mxu0 %v5679
    %6618 = vmatpush.bf16.msra.mxu0 %v5672
    %6619 = vmatpush.bf16.msra.mxu0 %v5665
    %6620 = vmatmul.bf16.gmra.mxu0 %v3901
    %v6621 = vpop.f32.mrf.mxu0
    %v6622 = vadd.f32 %v6609, %v6621
    %v6623 = vpop.f32.mrf.mxu0
    %6624 = vdwg.mxu0
    %6625 = vmatpush.bf16.msra.mxu0 %v5770
    %6626 = vmatpush.bf16.msra.mxu0 %v5763
    %6627 = vmatpush.bf16.msra.mxu0 %v5756
    %6628 = vmatpush.bf16.msra.mxu0 %v5749
    %6629 = vmatpush.bf16.msra.mxu0 %v5742
    %6630 = vmatpush.bf16.msra.mxu0 %v5735
    %6631 = vmatpush.bf16.msra.mxu0 %v5728
    %6632 = vmatpush.bf16.msra.mxu0 %v5721
    %6633 = vmatmul.bf16.gmra.mxu0 %v3902
    %v6634 = vpop.f32.mrf.mxu0
    %v6635 = vadd.f32 %v6622, %v6634
    %v6636 = vpop.f32.mrf.mxu0
    %6637 = vdwg.mxu0
    %6638 = vmatpush.bf16.msra.mxu0 %v5379
    %6639 = vmatpush.bf16.msra.mxu0 %v5372
    %6640 = vmatpush.bf16.msra.mxu0 %v5365
    %6641 = vmatpush.bf16.msra.mxu0 %v5358
    %6642 = vmatpush.bf16.msra.mxu0 %v5351
    %6643 = vmatpush.bf16.msra.mxu0 %v5344
    %6644 = vmatpush.bf16.msra.mxu0 %v5337
    %6645 = vmatpush.bf16.msra.mxu0 %v5330
    %6646 = vmatmul.bf16.gmra.mxu0 %v3895
    %v6647 = vpop.f32.mrf.mxu0
    %v6648 = vadd.f32 %v3908, %v6647
    %v6649 = vpop.f32.mrf.mxu0
    %6650 = vdwg.mxu0
    %6651 = vmatpush.bf16.msra.mxu0 %v5435
    %6652 = vmatpush.bf16.msra.mxu0 %v5428
    %6653 = vmatpush.bf16.msra.mxu0 %v5421
    %6654 = vmatpush.bf16.msra.mxu0 %v5414
    %6655 = vmatpush.bf16.msra.mxu0 %v5407
    %6656 = vmatpush.bf16.msra.mxu0 %v5400
    %6657 = vmatpush.bf16.msra.mxu0 %v5393
    %6658 = vmatpush.bf16.msra.mxu0 %v5386
    %6659 = vmatmul.bf16.gmra.mxu0 %v3896
    %v6660 = vpop.f32.mrf.mxu0
    %v6661 = vadd.f32 %v6648, %v6660
    %v6662 = vpop.f32.mrf.mxu0
    %6663 = vdwg.mxu0
    %6664 = vmatpush.bf16.msra.mxu0 %v5491
    %6665 = vmatpush.bf16.msra.mxu0 %v5484
    %6666 = vmatpush.bf16.msra.mxu0 %v5477
    %6667 = vmatpush.bf16.msra.mxu0 %v5470
    %6668 = vmatpush.bf16.msra.mxu0 %v5463
    %6669 = vmatpush.bf16.msra.mxu0 %v5456
    %6670 = vmatpush.bf16.msra.mxu0 %v5449
    %6671 = vmatpush.bf16.msra.mxu0 %v5442
    %6672 = vmatmul.bf16.gmra.mxu0 %v3897
    %v6673 = vpop.f32.mrf.mxu0
    %v6674 = vadd.f32 %v6661, %v6673
    %v6675 = vpop.f32.mrf.mxu0
    %6676 = vdwg.mxu0
    %6677 = vmatpush.bf16.msra.mxu0 %v5547
    %6678 = vmatpush.bf16.msra.mxu0 %v5540
    %6679 = vmatpush.bf16.msra.mxu0 %v5533
    %6680 = vmatpush.bf16.msra.mxu0 %v5526
    %6681 = vmatpush.bf16.msra.mxu0 %v5519
    %6682 = vmatpush.bf16.msra.mxu0 %v5512
    %6683 = vmatpush.bf16.msra.mxu0 %v5505
    %6684 = vmatpush.bf16.msra.mxu0 %v5498
    %6685 = vmatmul.bf16.gmra.mxu0 %v3898
    %v6686 = vpop.f32.mrf.mxu0
    %v6687 = vadd.f32 %v6674, %v6686
    %v6688 = vpop.f32.mrf.mxu0
    %6689 = vdwg.mxu0
    %6690 = vmatpush.bf16.msra.mxu0 %v5603
    %6691 = vmatpush.bf16.msra.mxu0 %v5596
    %6692 = vmatpush.bf16.msra.mxu0 %v5589
    %6693 = vmatpush.bf16.msra.mxu0 %v5582
    %6694 = vmatpush.bf16.msra.mxu0 %v5575
    %6695 = vmatpush.bf16.msra.mxu0 %v5568
    %6696 = vmatpush.bf16.msra.mxu0 %v5561
    %6697 = vmatpush.bf16.msra.mxu0 %v5554
    %6698 = vmatmul.bf16.gmra.mxu0 %v3899
    %v6699 = vpop.f32.mrf.mxu0
    %v6700 = vadd.f32 %v6687, %v6699
    %v6701 = vpop.f32.mrf.mxu0
    %6702 = vdwg.mxu0
    %6703 = vmatpush.bf16.msra.mxu0 %v5659
    %6704 = vmatpush.bf16.msra.mxu0 %v5652
    %6705 = vmatpush.bf16.msra.mxu0 %v5645
    %6706 = vmatpush.bf16.msra.mxu0 %v5638
    %6707 = vmatpush.bf16.msra.mxu0 %v5631
    %6708 = vmatpush.bf16.msra.mxu0 %v5624
    %6709 = vmatpush.bf16.msra.mxu0 %v5617
    %6710 = vmatpush.bf16.msra.mxu0 %v5610
    %6711 = vmatmul.bf16.gmra.mxu0 %v3900
    %v6712 = vpop.f32.mrf.mxu0
    %v6713 = vadd.f32 %v6700, %v6712
    %v6714 = vpop.f32.mrf.mxu0
    %6715 = vdwg.mxu0
    %6716 = vmatpush.bf16.msra.mxu0 %v5715
    %6717 = vmatpush.bf16.msra.mxu0 %v5708
    %6718 = vmatpush.bf16.msra.mxu0 %v5701
    %6719 = vmatpush.bf16.msra.mxu0 %v5694
    %6720 = vmatpush.bf16.msra.mxu0 %v5687
    %6721 = vmatpush.bf16.msra.mxu0 %v5680
    %6722 = vmatpush.bf16.msra.mxu0 %v5673
    %6723 = vmatpush.bf16.msra.mxu0 %v5666
    %6724 = vmatmul.bf16.gmra.mxu0 %v3901
    %v6725 = vpop.f32.mrf.mxu0
    %v6726 = vadd.f32 %v6713, %v6725
    %v6727 = vpop.f32.mrf.mxu0
    %6728 = vdwg.mxu0
    %6729 = vmatpush.bf16.msra.mxu0 %v5771
    %6730 = vmatpush.bf16.msra.mxu0 %v5764
    %6731 = vmatpush.bf16.msra.mxu0 %v5757
    %6732 = vmatpush.bf16.msra.mxu0 %v5750
    %6733 = vmatpush.bf16.msra.mxu0 %v5743
    %6734 = vmatpush.bf16.msra.mxu0 %v5736
    %6735 = vmatpush.bf16.msra.mxu0 %v5729
    %6736 = vmatpush.bf16.msra.mxu0 %v5722
    %6737 = vmatmul.bf16.gmra.mxu0 %v3902
    %v6738 = vpop.f32.mrf.mxu0
    %v6739 = vadd.f32 %v6726, %v6738
    %v6740 = vpop.f32.mrf.mxu0
    %6741 = vdwg.mxu0
    %6742 = vmatpush.bf16.msra.mxu0 %v5380
    %6743 = vmatpush.bf16.msra.mxu0 %v5373
    %6744 = vmatpush.bf16.msra.mxu0 %v5366
    %6745 = vmatpush.bf16.msra.mxu0 %v5359
    %6746 = vmatpush.bf16.msra.mxu0 %v5352
    %6747 = vmatpush.bf16.msra.mxu0 %v5345
    %6748 = vmatpush.bf16.msra.mxu0 %v5338
    %6749 = vmatpush.bf16.msra.mxu0 %v5331
    %6750 = vmatmul.bf16.gmra.mxu0 %v3895
    %v6751 = vpop.f32.mrf.mxu0
    %v6752 = vadd.f32 %v3909, %v6751
    %v6753 = vpop.f32.mrf.mxu0
    %6754 = vdwg.mxu0
    %6755 = vmatpush.bf16.msra.mxu0 %v5436
    %6756 = vmatpush.bf16.msra.mxu0 %v5429
    %6757 = vmatpush.bf16.msra.mxu0 %v5422
    %6758 = vmatpush.bf16.msra.mxu0 %v5415
    %6759 = vmatpush.bf16.msra.mxu0 %v5408
    %6760 = vmatpush.bf16.msra.mxu0 %v5401
    %6761 = vmatpush.bf16.msra.mxu0 %v5394
    %6762 = vmatpush.bf16.msra.mxu0 %v5387
    %6763 = vmatmul.bf16.gmra.mxu0 %v3896
    %v6764 = vpop.f32.mrf.mxu0
    %v6765 = vadd.f32 %v6752, %v6764
    %v6766 = vpop.f32.mrf.mxu0
    %6767 = vdwg.mxu0
    %6768 = vmatpush.bf16.msra.mxu0 %v5492
    %6769 = vmatpush.bf16.msra.mxu0 %v5485
    %6770 = vmatpush.bf16.msra.mxu0 %v5478
    %6771 = vmatpush.bf16.msra.mxu0 %v5471
    %6772 = vmatpush.bf16.msra.mxu0 %v5464
    %6773 = vmatpush.bf16.msra.mxu0 %v5457
    %6774 = vmatpush.bf16.msra.mxu0 %v5450
    %6775 = vmatpush.bf16.msra.mxu0 %v5443
    %6776 = vmatmul.bf16.gmra.mxu0 %v3897
    %v6777 = vpop.f32.mrf.mxu0
    %v6778 = vadd.f32 %v6765, %v6777
    %v6779 = vpop.f32.mrf.mxu0
    %6780 = vdwg.mxu0
    %6781 = vmatpush.bf16.msra.mxu0 %v5548
    %6782 = vmatpush.bf16.msra.mxu0 %v5541
    %6783 = vmatpush.bf16.msra.mxu0 %v5534
    %6784 = vmatpush.bf16.msra.mxu0 %v5527
    %6785 = vmatpush.bf16.msra.mxu0 %v5520
    %6786 = vmatpush.bf16.msra.mxu0 %v5513
    %6787 = vmatpush.bf16.msra.mxu0 %v5506
    %6788 = vmatpush.bf16.msra.mxu0 %v5499
    %6789 = vmatmul.bf16.gmra.mxu0 %v3898
    %v6790 = vpop.f32.mrf.mxu0
    %v6791 = vadd.f32 %v6778, %v6790
    %v6792 = vpop.f32.mrf.mxu0
    %6793 = vdwg.mxu0
    %6794 = vmatpush.bf16.msra.mxu0 %v5604
    %6795 = vmatpush.bf16.msra.mxu0 %v5597
    %6796 = vmatpush.bf16.msra.mxu0 %v5590
    %6797 = vmatpush.bf16.msra.mxu0 %v5583
    %6798 = vmatpush.bf16.msra.mxu0 %v5576
    %6799 = vmatpush.bf16.msra.mxu0 %v5569
    %6800 = vmatpush.bf16.msra.mxu0 %v5562
    %6801 = vmatpush.bf16.msra.mxu0 %v5555
    %6802 = vmatmul.bf16.gmra.mxu0 %v3899
    %v6803 = vpop.f32.mrf.mxu0
    %v6804 = vadd.f32 %v6791, %v6803
    %v6805 = vpop.f32.mrf.mxu0
    %6806 = vdwg.mxu0
    %6807 = vmatpush.bf16.msra.mxu0 %v5660
    %6808 = vmatpush.bf16.msra.mxu0 %v5653
    %6809 = vmatpush.bf16.msra.mxu0 %v5646
    %6810 = vmatpush.bf16.msra.mxu0 %v5639
    %6811 = vmatpush.bf16.msra.mxu0 %v5632
    %6812 = vmatpush.bf16.msra.mxu0 %v5625
    %6813 = vmatpush.bf16.msra.mxu0 %v5618
    %6814 = vmatpush.bf16.msra.mxu0 %v5611
    %6815 = vmatmul.bf16.gmra.mxu0 %v3900
    %v6816 = vpop.f32.mrf.mxu0
    %v6817 = vadd.f32 %v6804, %v6816
    %v6818 = vpop.f32.mrf.mxu0
    %6819 = vdwg.mxu0
    %6820 = vmatpush.bf16.msra.mxu0 %v5716
    %6821 = vmatpush.bf16.msra.mxu0 %v5709
    %6822 = vmatpush.bf16.msra.mxu0 %v5702
    %6823 = vmatpush.bf16.msra.mxu0 %v5695
    %6824 = vmatpush.bf16.msra.mxu0 %v5688
    %6825 = vmatpush.bf16.msra.mxu0 %v5681
    %6826 = vmatpush.bf16.msra.mxu0 %v5674
    %6827 = vmatpush.bf16.msra.mxu0 %v5667
    %6828 = vmatmul.bf16.gmra.mxu0 %v3901
    %v6829 = vpop.f32.mrf.mxu0
    %v6830 = vadd.f32 %v6817, %v6829
    %v6831 = vpop.f32.mrf.mxu0
    %6832 = vdwg.mxu0
    %6833 = vmatpush.bf16.msra.mxu0 %v5772
    %6834 = vmatpush.bf16.msra.mxu0 %v5765
    %6835 = vmatpush.bf16.msra.mxu0 %v5758
    %6836 = vmatpush.bf16.msra.mxu0 %v5751
    %6837 = vmatpush.bf16.msra.mxu0 %v5744
    %6838 = vmatpush.bf16.msra.mxu0 %v5737
    %6839 = vmatpush.bf16.msra.mxu0 %v5730
    %6840 = vmatpush.bf16.msra.mxu0 %v5723
    %6841 = vmatmul.bf16.gmra.mxu0 %v3902
    %v6842 = vpop.f32.mrf.mxu0
    %v6843 = vadd.f32 %v6830, %v6842
    %v6844 = vpop.f32.mrf.mxu0
    %6845 = vdwg.mxu0
    %6846 = vmatpush.bf16.msra.mxu0 %v5381
    %6847 = vmatpush.bf16.msra.mxu0 %v5374
    %6848 = vmatpush.bf16.msra.mxu0 %v5367
    %6849 = vmatpush.bf16.msra.mxu0 %v5360
    %6850 = vmatpush.bf16.msra.mxu0 %v5353
    %6851 = vmatpush.bf16.msra.mxu0 %v5346
    %6852 = vmatpush.bf16.msra.mxu0 %v5339
    %6853 = vmatpush.bf16.msra.mxu0 %v5332
    %6854 = vmatmul.bf16.gmra.mxu0 %v3895
    %v6855 = vpop.f32.mrf.mxu0
    %v6856 = vadd.f32 %v3910, %v6855
    %v6857 = vpop.f32.mrf.mxu0
    %6858 = vdwg.mxu0
    %6859 = vmatpush.bf16.msra.mxu0 %v5437
    %6860 = vmatpush.bf16.msra.mxu0 %v5430
    %6861 = vmatpush.bf16.msra.mxu0 %v5423
    %6862 = vmatpush.bf16.msra.mxu0 %v5416
    %6863 = vmatpush.bf16.msra.mxu0 %v5409
    %6864 = vmatpush.bf16.msra.mxu0 %v5402
    %6865 = vmatpush.bf16.msra.mxu0 %v5395
    %6866 = vmatpush.bf16.msra.mxu0 %v5388
    %6867 = vmatmul.bf16.gmra.mxu0 %v3896
    %v6868 = vpop.f32.mrf.mxu0
    %v6869 = vadd.f32 %v6856, %v6868
    %v6870 = vpop.f32.mrf.mxu0
    %6871 = vdwg.mxu0
    %6872 = vmatpush.bf16.msra.mxu0 %v5493
    %6873 = vmatpush.bf16.msra.mxu0 %v5486
    %6874 = vmatpush.bf16.msra.mxu0 %v5479
    %6875 = vmatpush.bf16.msra.mxu0 %v5472
    %6876 = vmatpush.bf16.msra.mxu0 %v5465
    %6877 = vmatpush.bf16.msra.mxu0 %v5458
    %6878 = vmatpush.bf16.msra.mxu0 %v5451
    %6879 = vmatpush.bf16.msra.mxu0 %v5444
    %6880 = vmatmul.bf16.gmra.mxu0 %v3897
    %v6881 = vpop.f32.mrf.mxu0
    %v6882 = vadd.f32 %v6869, %v6881
    %v6883 = vpop.f32.mrf.mxu0
    %6884 = vdwg.mxu0
    %6885 = vmatpush.bf16.msra.mxu0 %v5549
    %6886 = vmatpush.bf16.msra.mxu0 %v5542
    %6887 = vmatpush.bf16.msra.mxu0 %v5535
    %6888 = vmatpush.bf16.msra.mxu0 %v5528
    %6889 = vmatpush.bf16.msra.mxu0 %v5521
    %6890 = vmatpush.bf16.msra.mxu0 %v5514
    %6891 = vmatpush.bf16.msra.mxu0 %v5507
    %6892 = vmatpush.bf16.msra.mxu0 %v5500
    %6893 = vmatmul.bf16.gmra.mxu0 %v3898
    %v6894 = vpop.f32.mrf.mxu0
    %v6895 = vadd.f32 %v6882, %v6894
    %v6896 = vpop.f32.mrf.mxu0
    %6897 = vdwg.mxu0
    %6898 = vmatpush.bf16.msra.mxu0 %v5605
    %6899 = vmatpush.bf16.msra.mxu0 %v5598
    %6900 = vmatpush.bf16.msra.mxu0 %v5591
    %6901 = vmatpush.bf16.msra.mxu0 %v5584
    %6902 = vmatpush.bf16.msra.mxu0 %v5577
    %6903 = vmatpush.bf16.msra.mxu0 %v5570
    %6904 = vmatpush.bf16.msra.mxu0 %v5563
    %6905 = vmatpush.bf16.msra.mxu0 %v5556
    %6906 = vmatmul.bf16.gmra.mxu0 %v3899
    %v6907 = vpop.f32.mrf.mxu0
    %v6908 = vadd.f32 %v6895, %v6907
    %v6909 = vpop.f32.mrf.mxu0
    %6910 = vdwg.mxu0
    %6911 = vmatpush.bf16.msra.mxu0 %v5661
    %6912 = vmatpush.bf16.msra.mxu0 %v5654
    %6913 = vmatpush.bf16.msra.mxu0 %v5647
    %6914 = vmatpush.bf16.msra.mxu0 %v5640
    %6915 = vmatpush.bf16.msra.mxu0 %v5633
    %6916 = vmatpush.bf16.msra.mxu0 %v5626
    %6917 = vmatpush.bf16.msra.mxu0 %v5619
    %6918 = vmatpush.bf16.msra.mxu0 %v5612
    %6919 = vmatmul.bf16.gmra.mxu0 %v3900
    %v6920 = vpop.f32.mrf.mxu0
    %v6921 = vadd.f32 %v6908, %v6920
    %v6922 = vpop.f32.mrf.mxu0
    %6923 = vdwg.mxu0
    %6924 = vmatpush.bf16.msra.mxu0 %v5717
    %6925 = vmatpush.bf16.msra.mxu0 %v5710
    %6926 = vmatpush.bf16.msra.mxu0 %v5703
    %6927 = vmatpush.bf16.msra.mxu0 %v5696
    %6928 = vmatpush.bf16.msra.mxu0 %v5689
    %6929 = vmatpush.bf16.msra.mxu0 %v5682
    %6930 = vmatpush.bf16.msra.mxu0 %v5675
    %6931 = vmatpush.bf16.msra.mxu0 %v5668
    %6932 = vmatmul.bf16.gmra.mxu0 %v3901
    %v6933 = vpop.f32.mrf.mxu0
    %v6934 = vadd.f32 %v6921, %v6933
    %v6935 = vpop.f32.mrf.mxu0
    %6936 = vdwg.mxu0
    %6937 = vmatpush.bf16.msra.mxu0 %v5773
    %6938 = vmatpush.bf16.msra.mxu0 %v5766
    %6939 = vmatpush.bf16.msra.mxu0 %v5759
    %6940 = vmatpush.bf16.msra.mxu0 %v5752
    %6941 = vmatpush.bf16.msra.mxu0 %v5745
    %6942 = vmatpush.bf16.msra.mxu0 %v5738
    %6943 = vmatpush.bf16.msra.mxu0 %v5731
    %6944 = vmatpush.bf16.msra.mxu0 %v5724
    %6945 = vmatmul.bf16.gmra.mxu0 %v3902
    %v6946 = vpop.f32.mrf.mxu0
    %v6947 = vadd.f32 %v6934, %v6946
    %v6948 = vpop.f32.mrf.mxu0
    %6949 = vdwg.mxu0
    %v6950 = vtanh.pop %v6323
    %v6951 = vtanh.pop %v6427
    %v6952 = vtanh.pop %v6531
    %v6953 = vtanh.pop %v6635
    %v6954 = vtanh.pop %v6739
    %v6955 = vtanh.pop %v6843
    %v6956 = vtanh.pop %v6947
    %6957 = vst [vmem:[#allocation14] sm:$0xff] %v6950
    %6958 = vst [vmem:[#allocation14 + $0x8] sm:$0xff] %v6951
    %6959 = vst [vmem:[#allocation14 + $0x10] sm:$0xff] %v6952
    %6960 = vst [vmem:[#allocation14 + $0x18] sm:$0xff] %v6953
    %6961 = vst [vmem:[#allocation14 + $0x20] sm:$0xff] %v6954
    %6962 = vst [vmem:[#allocation14 + $0x28] sm:$0xff] %v6955
    %6963 = vst [vmem:[#allocation14 + $0x30] sm:$0xff] %v6956
    // Predicated region
    $region50: #{generator_forward.1} parent=1 // pred_check
      _
    $region51: #{generator_forward.1} parent=1 // pred_check_branch
      %6965 = sbr.rel (0) target = $region53
    $region52: #{generator_forward.1} parent=1 // pred_region
      %6967 = vsyncadd [#allocation7], 0
      %s6969 = sshll.u32 [#allocation14], 4
      %s6970 = int_to_ptr.vmem [resolvable:$true] %s6969
      %s6971 = sshll.u32 %s7, 4
      %s6972 = int_to_ptr.hbm [resolvable:$true] %s6971
      %6974 = dma.vmem_to_hbm [thread:$0]  %s6970, 896, %s6972, [#allocation7]
    $region53: #{generator_forward.1} parent=1 // pred_fallthru
      _
    // Predicated region
    $region54: #{generator_forward.1} parent=1 // pred_check
      _
    $region55: #{generator_forward.1} parent=1 // pred_check_branch
      %6976 = sbr.rel (0) target = $region57
    $region56: #{generator_forward.1} parent=1 // pred_region
      %6978 = dma.done [#allocation7], 896
    $region57: #{generator_forward.1} parent=1 // pred_fallthru
      _
    %6979 = vsyncpa [#allocation6], 1
    %6980 = vsyncpa [#allocation9], 1
    %6981 = vsyncpa [#allocation12], 1
    %6982 = vsyncpa [#allocation7], 1
  %6983 = vsyncmov [#allocation4]
  %s6984 = vpop.sfrf %6983
  %p6985 = scmp.eq.s32.totalorder %s6984, 0
  %p6986 = pneg %p6985
  %6988 = shalt.err (%p6986)
  %s6989 = scalar_lea.sflag [#allocation4], 1
  %6990 = vsyncmov %s6989
  %s6991 = vpop.sfrf %6990
  %p6992 = scmp.eq.s32.totalorder %s6991, 0
  %p6993 = pneg %p6992
  %6995 = shalt.err (%p6993)

</llo_original>
